<compile_context>
chip_gen: v5e
topology: v5e:2x2
jax: 0.10.0
libtpu: 0.0.40
codegen_flags: <defaults>
</compile_context>

<pallas_src>
import jax
import jax.numpy as jnp
from jax import lax
from jax.experimental import pallas as pl
from jax.experimental.pallas import tpu as pltpu
import numpy as np

# ---------------- model hyper-parameters (from molecule_graph_model __init__) -------------
B = 32           # molecules in the batch
A = 16           # max atoms per molecule (dense padding)
F_ATOM = 12      # num_atom_feats  (= num atom features - num crystal generation features)
F_MOL = 8        # num_mol_feats   (= num mol features  - num crystal generation features)
EMB = 32         # atom_embedding_size == graph_filters
N_CONV = 2       # graph_convolutional_layers
FC_DEPTH = 32    # fc_depth
N_FC = 2         # num_fc_layers
OUT_DIM = 1      # output_dimension
CUTOFF = 3.0     # graph_convolution_cutoff

B_BLK = 16       # molecules per grid step (MXU M = B_BLK*A = 256; scale up for real
                 # workloads, keeping double-buffered blocks under ~24 MiB on v7x)

assert B % B_BLK == 0
assert A % 8 == 0
assert EMB == FC_DEPTH          # allows packing fc0/fc1/out weights into one [3,FC,FC]
assert FC_DEPTH >= OUT_DIM

_W_BIAS = max(EMB, FC_DEPTH, OUT_DIM)


def _act(x):
    # conditioner_activation (tanh-approx GELU maps onto the single EUP slot)
    return jax.nn.gelu(x, approximate=True)


def _mol_regressor_kernel(x_ref, pos_ref, post_ref, maskt_ref, mol_ref,
                          wea_ref, wem_ref, convw_ref, wf0m_ref,
                          headw_ref, bias_ref, o_ref):
    Bb = B_BLK

    x = x_ref[...]            # [Bb, A, F_ATOM]
    pos = pos_ref[...]        # [Bb, A, 3]
    pos_t = post_ref[...]     # [Bb, 3, A]
    mask_t = maskt_ref[...]   # [Bb, 1, A]
    mol = mol_ref[...]        # [Bb, 1, F_MOL]
    mol2 = mol.reshape(Bb, F_MOL)

    # ---- 1 + 2. atom embedding (concat replaced by split matmuls) ----
    h_atom = jnp.dot(x.reshape(Bb * A, F_ATOM), wea_ref[...],
                     preferred_element_type=jnp.float32)                   # [Bb*A, EMB]
    h_mol = jnp.dot(mol2, wem_ref[...],
                    preferred_element_type=jnp.float32)                    # [Bb, EMB]
    be = bias_ref[0, :EMB]
    h = _act(h_atom.reshape(Bb, A, EMB) + h_mol[:, None, :] + be[None, None, :])

    # ---- 3. cutoff adjacency via VPU broadcast differences ----
    d2 = jnp.zeros((Bb, A, A), jnp.float32)
    for c in range(3):
        dc = pos[:, :, c:c + 1] - pos_t[:, c:c + 1, :]                     # [Bb, A, A]
        d2 = d2 + dc * dc
    ri = lax.broadcasted_iota(jnp.int32, (A, A), 0)
    ci = lax.broadcasted_iota(jnp.int32, (A, A), 1)
    not_self = (ri != ci)[None, :, :]                                      # [1, A, A]
    neighbor_ok = mask_t > 0.5                                             # [Bb, 1, A]
    adj = jnp.where((d2 < CUTOFF * CUTOFF) & not_self & neighbor_ok,
                    1.0, 0.0).astype(jnp.float32)
    deg = jnp.maximum(jnp.sum(adj, axis=-1, keepdims=True), 1.0)
    adj = adj / deg

    # ---- graph convolutions (packed [2*EMB, EMB] weights, flattened matmuls) ----
    h2 = h.reshape(Bb * A, EMB)
    for l in range(N_CONV):
        wm_l = convw_ref[l, :EMB, :]                                       # message weight
        ws_l = convw_ref[l, EMB:, :]                                       # self weight
        cb_l = bias_ref[1 + l, :EMB]
        msg = jnp.einsum('bij,bje->bie', adj, h2.reshape(Bb, A, EMB),
                         preferred_element_type=jnp.float32)               # [Bb, A, EMB]
        h2 = _act(jnp.dot(msg.reshape(Bb * A, EMB), wm_l,
                          preferred_element_type=jnp.float32)
                  + jnp.dot(h2, ws_l, preferred_element_type=jnp.float32)
                  + cb_l[None, :])

    # ---- 4. masked mean pooling as an MXU matmul ----
    n_atoms = jnp.maximum(jnp.sum(mask_t, axis=-1, keepdims=True), 1.0)    # [Bb, 1, 1]
    pooled = jnp.einsum('bxa,bae->bxe', mask_t, h2.reshape(Bb, A, EMB),
                        preferred_element_type=jnp.float32)                # [Bb, 1, EMB]
    g = (pooled / n_atoms).reshape(Bb, EMB)

    # ---- 5. FC head (concat replaced by split matmuls) ----
    bf0 = bias_ref[1 + N_CONV, :FC_DEPTH]
    bf1 = bias_ref[2 + N_CONV, :FC_DEPTH]
    bo = bias_ref[3 + N_CONV, :OUT_DIM]
    g = _act(jnp.dot(g, headw_ref[0], preferred_element_type=jnp.float32)
             + jnp.dot(mol2, wf0m_ref[...], preferred_element_type=jnp.float32)
             + bf0[None, :])
    g = _act(jnp.dot(g, headw_ref[1], preferred_element_type=jnp.float32)
             + bf1[None, :])

    # ---- 6. output head: one dense [B_BLK, OUT_DIM] store per grid step ----
    out = jnp.dot(g, headw_ref[2],
                  preferred_element_type=jnp.float32)[:, :OUT_DIM] + bo[None, :]
    o_ref[0] = out


def _full_spec(shape):
    n = len(shape)
    return pl.BlockSpec(shape, lambda b, _n=n: (0,) * _n)


def molecule_regressor_forward(x, pos, mask, mol, params):
    """x:[B,A,F_ATOM] pos:[B,A,3] mask:[B,A,1] mol:[B,1,F_MOL] -> [B, OUT_DIM]"""
    (we, be, wm, ws, bc, wf0, bf0, wf1, bf1, wo, bo) = params

    # --- pre-split / pack parameters (fewer operands, no in-kernel lane concats) ---
    we_atom = we[:F_ATOM]                                   # [F_ATOM, EMB]
    we_mol = we[F_ATOM:]                                    # [F_MOL, EMB]
    conv_w = jnp.concatenate([wm, ws], axis=1)              # [N_CONV, 2*EMB, EMB]
    wf0_pool = wf0[:EMB]                                    # [EMB, FC_DEPTH]
    wf0_mol = wf0[EMB:]                                     # [F_MOL, FC_DEPTH]
    head_w = jnp.stack([wf0_pool, wf1,
                        jnp.pad(wo, ((0, 0), (0, FC_DEPTH - OUT_DIM)))])   # [3, FC, FC]

    def _row(v):
        v = v.reshape(-1)
        return jnp.pad(v, (0, _W_BIAS - v.shape[0]))
    bias_pack = jnp.stack([_row(be)]
                          + [_row(bc[l]) for l in range(N_CONV)]
                          + [_row(bf0), _row(bf1), _row(bo)])              # [4+N_CONV, W]

    # transposed views produced once here so the kernel needs no in-kernel transposes
    pos_t = jnp.swapaxes(pos, 1, 2)                         # [B, 3, A]
    mask_t = jnp.swapaxes(mask, 1, 2)                       # [B, 1, A]

    nb = B // B_BLK
    out = pl.pallas_call(
        _mol_regressor_kernel,
        out_shape=jax.ShapeDtypeStruct((nb, B_BLK, OUT_DIM), jnp.float32),
        grid_spec=pltpu.PrefetchScalarGridSpec(
            num_scalar_prefetch=0,
            grid=(nb,),
            in_specs=[
                pl.BlockSpec((B_BLK, A, F_ATOM), lambda b: (b, 0, 0)),
                pl.BlockSpec((B_BLK, A, 3), lambda b: (b, 0, 0)),
                pl.BlockSpec((B_BLK, 3, A), lambda b: (b, 0, 0)),
                pl.BlockSpec((B_BLK, 1, A), lambda b: (b, 0, 0)),
                pl.BlockSpec((B_BLK, 1, F_MOL), lambda b: (b, 0, 0)),
                _full_spec(we_atom.shape), _full_spec(we_mol.shape),
                _full_spec(conv_w.shape), _full_spec(wf0_mol.shape),
                _full_spec(head_w.shape), _full_spec(bias_pack.shape),
            ],
            out_specs=pl.BlockSpec((1, B_BLK, OUT_DIM), lambda b: (b, 0, 0)),
        ),
        compiler_params=pltpu.CompilerParams(
            dimension_semantics=("parallel",)),   # lets v7x spread blocks over both TCs
    )(x, pos, pos_t, mask_t, mol,
      we_atom, we_mol, conv_w, wf0_mol, head_w, bias_pack)
    return out.reshape(B, OUT_DIM)


# ------------------------ pure-JAX reference (for verification) ------------------------
def reference_forward(x, pos, mask, mol, params):
    (we, be, wm, ws, bc, wf0, bf0, wf1, bf1, wo, bo) = params
    outs = []
    for b in range(B):
        xb, pb, mb, gb = x[b], pos[b], mask[b], mol[b]
        xin = jnp.concatenate([xb, jnp.broadcast_to(gb, (A, F_MOL))], axis=-1)
        h = _act(xin @ we + be)
        d2 = jnp.sum((pb[:, None, :] - pb[None, :, :]) ** 2, axis=-1)
        eye = jnp.eye(A, dtype=bool)
        neighbor_ok = (mb.T > 0.5)                           # [1, A]
        adj = jnp.where((d2 < CUTOFF * CUTOFF) & (~eye) & neighbor_ok, 1.0, 0.0)
        adj = adj / jnp.maximum(jnp.sum(adj, axis=-1, keepdims=True), 1.0)
        for l in range(N_CONV):
            h = _act(adj @ h @ wm[l] + h @ ws[l] + bc[l][None, :])
        pooled = jnp.sum(h * mb, axis=0, keepdims=True) / jnp.maximum(jnp.sum(mb), 1.0)
        g = jnp.concatenate([pooled, gb], axis=-1)
        g = _act(g @ wf0 + bf0)
        g = _act(g @ wf1 + bf1)
        outs.append(g @ wo + bo)
    return jnp.concatenate(outs, axis=0)


def init_params(key):
    ks = jax.random.split(key, 16)

    def lin(k, fan_in, fan_out):
        return jax.random.normal(k, (fan_in, fan_out), jnp.float32) / np.sqrt(fan_in)

    we = lin(ks[0], F_ATOM + F_MOL, EMB)
    be = jnp.zeros((1, EMB), jnp.float32)
    wm = jnp.stack([lin(ks[1 + l], EMB, EMB) for l in range(N_CONV)])
    ws = jnp.stack([lin(ks[4 + l], EMB, EMB) for l in range(N_CONV)])
    bc = jnp.zeros((N_CONV, EMB), jnp.float32)
    wf0 = lin(ks[8], EMB + F_MOL, FC_DEPTH)
    bf0 = jnp.zeros((1, FC_DEPTH), jnp.float32)
    wf1 = lin(ks[9], FC_DEPTH, FC_DEPTH)
    bf1 = jnp.zeros((1, FC_DEPTH), jnp.float32)
    wo = lin(ks[10], FC_DEPTH, OUT_DIM)
    bo = jnp.zeros((1, OUT_DIM), jnp.float32)
    return (we, be, wm, ws, bc, wf0, bf0, wf1, bf1, wo, bo)


if __name__ == "__main__":
    key = jax.random.PRNGKey(0)
    k_x, k_pos, k_mol, k_n, k_par = jax.random.split(key, 5)

    x = jax.random.normal(k_x, (B, A, F_ATOM), jnp.float32)
    pos = 2.0 * jax.random.normal(k_pos, (B, A, 3), jnp.float32)
    mol = jax.random.normal(k_mol, (B, 1, F_MOL), jnp.float32)
    n_atoms = jax.random.randint(k_n, (B,), 4, A + 1)
    mask = (jnp.arange(A)[None, :] < n_atoms[:, None]).astype(jnp.float32)[..., None]

    params = init_params(k_par)

    out = molecule_regressor_forward(x, pos, mask, mol, params)
    out = jax.block_until_ready(out)

    ref = reference_forward(x, pos, mask, mol, params)
    np.testing.assert_allclose(np.asarray(out), np.asarray(ref), rtol=1e-4, atol=1e-4)

    print("KERNEL_OK")
</pallas_src>

<mosaic_0001>
module attributes {stable_mosaic.version = 11 : i64} {
  func.func @_mol_regressor_kernel(%arg0: i32, %arg1: memref<16x16x12xf32, #tpu.memory_space<vmem>>, %arg2: memref<16x16x3xf32, #tpu.memory_space<vmem>>, %arg3: memref<16x3x16xf32, #tpu.memory_space<vmem>>, %arg4: memref<16x1x16xf32, #tpu.memory_space<vmem>>, %arg5: memref<16x1x8xf32, #tpu.memory_space<vmem>>, %arg6: memref<12x32xf32, #tpu.memory_space<vmem>>, %arg7: memref<8x32xf32, #tpu.memory_space<vmem>>, %arg8: memref<2x64x32xf32, #tpu.memory_space<vmem>>, %arg9: memref<8x32xf32, #tpu.memory_space<vmem>>, %arg10: memref<3x32x32xf32, #tpu.memory_space<vmem>>, %arg11: memref<6x32xf32, #tpu.memory_space<vmem>>, %arg12: memref<1x16x1xf32, #tpu.memory_space<vmem>>) attributes {dimension_semantics = [#tpu.dimension_semantics<parallel>], iteration_bounds = array<i64: 2>, scalar_prefetch = 0 : i64, scratch_operands = 0 : i64, tpu.core_type = #tpu.core_type<tc>, window_params = [{transform_indices = @transform_0, window_bounds = array<i64: 16, 16, 12>}, {transform_indices = @transform_1, window_bounds = array<i64: 16, 16, 3>}, {transform_indices = @transform_2, window_bounds = array<i64: 16, 3, 16>}, {transform_indices = @transform_3, window_bounds = array<i64: 16, 1, 16>}, {transform_indices = @transform_4, window_bounds = array<i64: 16, 1, 8>}, {pipeline_mode = #tpu.pipeline_mode<synchronous>, transform_indices = @transform_5, window_bounds = array<i64: 12, 32>}, {pipeline_mode = #tpu.pipeline_mode<synchronous>, transform_indices = @transform_6, window_bounds = array<i64: 8, 32>}, {pipeline_mode = #tpu.pipeline_mode<synchronous>, transform_indices = @transform_7, window_bounds = array<i64: 2, 64, 32>}, {pipeline_mode = #tpu.pipeline_mode<synchronous>, transform_indices = @transform_8, window_bounds = array<i64: 8, 32>}, {pipeline_mode = #tpu.pipeline_mode<synchronous>, transform_indices = @transform_9, window_bounds = array<i64: 3, 32, 32>}, {pipeline_mode = #tpu.pipeline_mode<synchronous>, transform_indices = @transform_10, window_bounds = array<i64: 6, 32>}, {transform_indices = @transform_11, window_bounds = array<i64: 1, 16, 1>}]} {
    %c0 = arith.constant 0 : index
    %c0_0 = arith.constant 0 : index
    %c0_1 = arith.constant 0 : index
    %0 = vector.load %arg1[%c0, %c0_0, %c0_1] : memref<16x16x12xf32, #tpu.memory_space<vmem>>, vector<16x16x12xf32>
    %c0_2 = arith.constant 0 : index
    %c0_3 = arith.constant 0 : index
    %c0_4 = arith.constant 0 : index
    %1 = vector.load %arg2[%c0_2, %c0_3, %c0_4] : memref<16x16x3xf32, #tpu.memory_space<vmem>>, vector<16x16x3xf32>
    %c0_5 = arith.constant 0 : index
    %c0_6 = arith.constant 0 : index
    %c0_7 = arith.constant 0 : index
    %2 = vector.load %arg3[%c0_5, %c0_6, %c0_7] : memref<16x3x16xf32, #tpu.memory_space<vmem>>, vector<16x3x16xf32>
    %c0_8 = arith.constant 0 : index
    %c0_9 = arith.constant 0 : index
    %c0_10 = arith.constant 0 : index
    %3 = vector.load %arg4[%c0_8, %c0_9, %c0_10] : memref<16x1x16xf32, #tpu.memory_space<vmem>>, vector<16x1x16xf32>
    %c0_11 = arith.constant 0 : index
    %c0_12 = arith.constant 0 : index
    %c0_13 = arith.constant 0 : index
    %4 = vector.load %arg5[%c0_11, %c0_12, %c0_13] : memref<16x1x8xf32, #tpu.memory_space<vmem>>, vector<16x1x8xf32>
    %5 = vector.shape_cast %4 : vector<16x1x8xf32> to vector<16x8xf32>
    %6 = vector.shape_cast %0 : vector<16x16x12xf32> to vector<256x12xf32>
    %c0_14 = arith.constant 0 : index
    %c0_15 = arith.constant 0 : index
    %7 = vector.load %arg6[%c0_14, %c0_15] : memref<12x32xf32, #tpu.memory_space<vmem>>, vector<12x32xf32>
    %cst = arith.constant dense<0.000000e+00> : vector<256x32xf32>
    %8 = tpu.matmul %6, %7, %cst {dimension_numbers = #tpu.dot_dimension_numbers<[1], [0], [0], [1], [0, 0, 1, 1], [], []>} : vector<256x12xf32>, vector<12x32xf32>, vector<256x32xf32> -> vector<256x32xf32>
    %c0_16 = arith.constant 0 : index
    %c0_17 = arith.constant 0 : index
    %9 = vector.load %arg7[%c0_16, %c0_17] : memref<8x32xf32, #tpu.memory_space<vmem>>, vector<8x32xf32>
    %cst_18 = arith.constant dense<0.000000e+00> : vector<16x32xf32>
    %10 = tpu.matmul %5, %9, %cst_18 {dimension_numbers = #tpu.dot_dimension_numbers<[1], [0], [0], [1], [0, 0, 1, 1], [], []>} : vector<16x8xf32>, vector<8x32xf32>, vector<16x32xf32> -> vector<16x32xf32>
    %c0_19 = arith.constant 0 : index
    %c0_20 = arith.constant 0 : index
    %11 = vector.load %arg11[%c0_19, %c0_20] : memref<6x32xf32, #tpu.memory_space<vmem>>, vector<1x32xf32>
    %12 = vector.shape_cast %11 : vector<1x32xf32> to vector<32xf32>
    %13 = vector.shape_cast %8 : vector<256x32xf32> to vector<16x16x32xf32>
    %14 = vector.shape_cast %10 : vector<16x32xf32> to vector<16x1x32xf32>
    %15 = vector.broadcast %14 : vector<16x1x32xf32> to vector<16x16x32xf32>
    %16 = arith.addf %13, %15 : vector<16x16x32xf32>
    %17 = vector.shape_cast %12 : vector<32xf32> to vector<1x1x32xf32>
    %18 = vector.broadcast %17 : vector<1x1x32xf32> to vector<16x16x32xf32>
    %19 = arith.addf %16, %18 : vector<16x16x32xf32>
    %20 = arith.mulf %19, %19 : vector<16x16x32xf32>
    %21 = arith.mulf %19, %20 : vector<16x16x32xf32>
    %cst_21 = arith.constant 4.471500e-02 : f32
    %22 = vector.broadcast %cst_21 : f32 to vector<16x16x32xf32>
    %23 = arith.mulf %22, %21 : vector<16x16x32xf32>
    %24 = arith.addf %19, %23 : vector<16x16x32xf32>
    %cst_22 = arith.constant 0.797884583 : f32
    %25 = vector.broadcast %cst_22 : f32 to vector<16x16x32xf32>
    %26 = arith.mulf %25, %24 : vector<16x16x32xf32>
    %27 = math.tanh %26 : vector<16x16x32xf32>
    %cst_23 = arith.constant 1.000000e+00 : f32
    %28 = vector.broadcast %cst_23 : f32 to vector<16x16x32xf32>
    %29 = arith.addf %28, %27 : vector<16x16x32xf32>
    %cst_24 = arith.constant 5.000000e-01 : f32
    %30 = vector.broadcast %cst_24 : f32 to vector<16x16x32xf32>
    %31 = arith.mulf %30, %29 : vector<16x16x32xf32>
    %32 = arith.mulf %19, %31 : vector<16x16x32xf32>
    %cst_25 = arith.constant 0.000000e+00 : f32
    %33 = vector.broadcast %cst_25 : f32 to vector<16x16x16xf32>
    %34 = vector.extract_strided_slice %1 {offsets = [0, 0, 0], sizes = [16, 16, 1], strides = [1, 1, 1]} : vector<16x16x3xf32> to vector<16x16x1xf32>
    %35 = vector.extract_strided_slice %2 {offsets = [0, 0, 0], sizes = [16, 1, 16], strides = [1, 1, 1]} : vector<16x3x16xf32> to vector<16x1x16xf32>
    %36 = vector.broadcast %34 : vector<16x16x1xf32> to vector<16x16x16xf32>
    %37 = vector.broadcast %35 : vector<16x1x16xf32> to vector<16x16x16xf32>
    %38 = arith.subf %36, %37 : vector<16x16x16xf32>
    %39 = arith.mulf %38, %38 : vector<16x16x16xf32>
    %40 = arith.addf %33, %39 : vector<16x16x16xf32>
    %41 = vector.extract_strided_slice %1 {offsets = [0, 0, 1], sizes = [16, 16, 1], strides = [1, 1, 1]} : vector<16x16x3xf32> to vector<16x16x1xf32>
    %42 = vector.extract_strided_slice %2 {offsets = [0, 1, 0], sizes = [16, 1, 16], strides = [1, 1, 1]} : vector<16x3x16xf32> to vector<16x1x16xf32>
    %43 = vector.broadcast %41 : vector<16x16x1xf32> to vector<16x16x16xf32>
    %44 = vector.broadcast %42 : vector<16x1x16xf32> to vector<16x16x16xf32>
    %45 = arith.subf %43, %44 : vector<16x16x16xf32>
    %46 = arith.mulf %45, %45 : vector<16x16x16xf32>
    %47 = arith.addf %40, %46 : vector<16x16x16xf32>
    %48 = vector.extract_strided_slice %1 {offsets = [0, 0, 2], sizes = [16, 16, 1], strides = [1, 1, 1]} : vector<16x16x3xf32> to vector<16x16x1xf32>
    %49 = vector.extract_strided_slice %2 {offsets = [0, 2, 0], sizes = [16, 1, 16], strides = [1, 1, 1]} : vector<16x3x16xf32> to vector<16x1x16xf32>
    %50 = vector.broadcast %48 : vector<16x16x1xf32> to vector<16x16x16xf32>
    %51 = vector.broadcast %49 : vector<16x1x16xf32> to vector<16x16x16xf32>
    %52 = arith.subf %50, %51 : vector<16x16x16xf32>
    %53 = arith.mulf %52, %52 : vector<16x16x16xf32>
    %54 = arith.addf %47, %53 : vector<16x16x16xf32>
    %55 = tpu.iota {dimensions = array<i32: 0>} : vector<16x16xi32>
    %56 = tpu.iota {dimensions = array<i32: 1>} : vector<16x16xi32>
    %57 = arith.cmpi ne, %55, %56 : vector<16x16xi32>
    %58 = vector.shape_cast %57 : vector<16x16xi1> to vector<1x16x16xi1>
    %cst_26 = arith.constant 5.000000e-01 : f32
    %59 = vector.broadcast %cst_26 : f32 to vector<16x1x16xf32>
    %60 = arith.cmpf ogt, %3, %59 : vector<16x1x16xf32>
    %cst_27 = arith.constant 9.000000e+00 : f32
    %61 = vector.broadcast %cst_27 : f32 to vector<16x16x16xf32>
    %62 = arith.cmpf olt, %54, %61 : vector<16x16x16xf32>
    %63 = vector.broadcast %58 : vector<1x16x16xi1> to vector<16x16x16xi1>
    %64 = arith.andi %62, %63 : vector<16x16x16xi1>
    %65 = vector.broadcast %60 : vector<16x1x16xi1> to vector<16x16x16xi1>
    %66 = arith.andi %64, %65 : vector<16x16x16xi1>
    %cst_28 = arith.constant 1.000000e+00 : f32
    %cst_29 = arith.constant 0.000000e+00 : f32
    %67 = vector.broadcast %cst_28 : f32 to vector<16x16x16xf32>
    %68 = vector.broadcast %cst_29 : f32 to vector<16x16x16xf32>
    %69 = arith.select %66, %67, %68 : vector<16x16x16xi1>, vector<16x16x16xf32>
    %cst_30 = arith.constant dense<0.000000e+00> : vector<16x16xf32>
    %70 = vector.multi_reduction <add>, %69, %cst_30 [2] : vector<16x16x16xf32> to vector<16x16xf32>
    %71 = vector.shape_cast %70 : vector<16x16xf32> to vector<16x16x1xf32>
    %cst_31 = arith.constant 1.000000e+00 : f32
    %72 = vector.broadcast %cst_31 : f32 to vector<16x16x1xf32>
    %73 = arith.maximumf %71, %72 : vector<16x16x1xf32>
    %74 = vector.broadcast %73 : vector<16x16x1xf32> to vector<16x16x16xf32>
    %75 = arith.divf %69, %74 : vector<16x16x16xf32>
    %76 = vector.shape_cast %32 : vector<16x16x32xf32> to vector<256x32xf32>
    %c0_32 = arith.constant 0 : index
    %c0_33 = arith.constant 0 : index
    %c0_34 = arith.constant 0 : index
    %77 = vector.load %arg8[%c0_32, %c0_33, %c0_34] : memref<2x64x32xf32, #tpu.memory_space<vmem>>, vector<1x32x32xf32>
    %78 = vector.shape_cast %77 : vector<1x32x32xf32> to vector<32x32xf32>
    %c0_35 = arith.constant 0 : index
    %c32 = arith.constant 32 : index
    %c0_36 = arith.constant 0 : index
    %79 = vector.load %arg8[%c0_35, %c32, %c0_36] : memref<2x64x32xf32, #tpu.memory_space<vmem>>, vector<1x32x32xf32>
    %80 = vector.shape_cast %79 : vector<1x32x32xf32> to vector<32x32xf32>
    %c1 = arith.constant 1 : index
    %c0_37 = arith.constant 0 : index
    %81 = vector.load %arg11[%c1, %c0_37] : memref<6x32xf32, #tpu.memory_space<vmem>>, vector<1x32xf32>
    %82 = vector.shape_cast %81 : vector<1x32xf32> to vector<32xf32>
    %83 = vector.shape_cast %76 : vector<256x32xf32> to vector<16x16x32xf32>
    "tpu.trace_start"() <{level = 10 : i32, message = "bij,bje->bie"}> : () -> ()
    %cst_38 = arith.constant dense<0.000000e+00> : vector<16x16x32xf32>
    %84 = tpu.matmul %75, %83, %cst_38 {dimension_numbers = #tpu.dot_dimension_numbers<[2], [1], [1], [2], [0, 0, 0, 1, 1, 2], [0], [0]>} : vector<16x16x16xf32>, vector<16x16x32xf32>, vector<16x16x32xf32> -> vector<16x16x32xf32>
    "tpu.trace_stop"() : () -> ()
    %85 = vector.shape_cast %84 : vector<16x16x32xf32> to vector<256x32xf32>
    %cst_39 = arith.constant dense<0.000000e+00> : vector<256x32xf32>
    %86 = tpu.matmul %85, %78, %cst_39 {dimension_numbers = #tpu.dot_dimension_numbers<[1], [0], [0], [1], [0, 0, 1, 1], [], []>} : vector<256x32xf32>, vector<32x32xf32>, vector<256x32xf32> -> vector<256x32xf32>
    %cst_40 = arith.constant dense<0.000000e+00> : vector<256x32xf32>
    %87 = tpu.matmul %76, %80, %cst_40 {dimension_numbers = #tpu.dot_dimension_numbers<[1], [0], [0], [1], [0, 0, 1, 1], [], []>} : vector<256x32xf32>, vector<32x32xf32>, vector<256x32xf32> -> vector<256x32xf32>
    %88 = arith.addf %86, %87 : vector<256x32xf32>
    %89 = vector.shape_cast %82 : vector<32xf32> to vector<1x32xf32>
    %90 = vector.broadcast %89 : vector<1x32xf32> to vector<256x32xf32>
    %91 = arith.addf %88, %90 : vector<256x32xf32>
    %92 = arith.mulf %91, %91 : vector<256x32xf32>
    %93 = arith.mulf %91, %92 : vector<256x32xf32>
    %cst_41 = arith.constant 4.471500e-02 : f32
    %94 = vector.broadcast %cst_41 : f32 to vector<256x32xf32>
    %95 = arith.mulf %94, %93 : vector<256x32xf32>
    %96 = arith.addf %91, %95 : vector<256x32xf32>
    %cst_42 = arith.constant 0.797884583 : f32
    %97 = vector.broadcast %cst_42 : f32 to vector<256x32xf32>
    %98 = arith.mulf %97, %96 : vector<256x32xf32>
    %99 = math.tanh %98 : vector<256x32xf32>
    %cst_43 = arith.constant 1.000000e+00 : f32
    %100 = vector.broadcast %cst_43 : f32 to vector<256x32xf32>
    %101 = arith.addf %100, %99 : vector<256x32xf32>
    %cst_44 = arith.constant 5.000000e-01 : f32
    %102 = vector.broadcast %cst_44 : f32 to vector<256x32xf32>
    %103 = arith.mulf %102, %101 : vector<256x32xf32>
    %104 = arith.mulf %91, %103 : vector<256x32xf32>
    %c1_45 = arith.constant 1 : index
    %c0_46 = arith.constant 0 : index
    %c0_47 = arith.constant 0 : index
    %105 = vector.load %arg8[%c1_45, %c0_46, %c0_47] : memref<2x64x32xf32, #tpu.memory_space<vmem>>, vector<1x32x32xf32>
    %106 = vector.shape_cast %105 : vector<1x32x32xf32> to vector<32x32xf32>
    %c1_48 = arith.constant 1 : index
    %c32_49 = arith.constant 32 : index
    %c0_50 = arith.constant 0 : index
    %107 = vector.load %arg8[%c1_48, %c32_49, %c0_50] : memref<2x64x32xf32, #tpu.memory_space<vmem>>, vector<1x32x32xf32>
    %108 = vector.shape_cast %107 : vector<1x32x32xf32> to vector<32x32xf32>
    %c2 = arith.constant 2 : index
    %c0_51 = arith.constant 0 : index
    %109 = vector.load %arg11[%c2, %c0_51] : memref<6x32xf32, #tpu.memory_space<vmem>>, vector<1x32xf32>
    %110 = vector.shape_cast %109 : vector<1x32xf32> to vector<32xf32>
    %111 = vector.shape_cast %104 : vector<256x32xf32> to vector<16x16x32xf32>
    "tpu.trace_start"() <{level = 10 : i32, message = "bij,bje->bie"}> : () -> ()
    %cst_52 = arith.constant dense<0.000000e+00> : vector<16x16x32xf32>
    %112 = tpu.matmul %75, %111, %cst_52 {dimension_numbers = #tpu.dot_dimension_numbers<[2], [1], [1], [2], [0, 0, 0, 1, 1, 2], [0], [0]>} : vector<16x16x16xf32>, vector<16x16x32xf32>, vector<16x16x32xf32> -> vector<16x16x32xf32>
    "tpu.trace_stop"() : () -> ()
    %113 = vector.shape_cast %112 : vector<16x16x32xf32> to vector<256x32xf32>
    %cst_53 = arith.constant dense<0.000000e+00> : vector<256x32xf32>
    %114 = tpu.matmul %113, %106, %cst_53 {dimension_numbers = #tpu.dot_dimension_numbers<[1], [0], [0], [1], [0, 0, 1, 1], [], []>} : vector<256x32xf32>, vector<32x32xf32>, vector<256x32xf32> -> vector<256x32xf32>
    %cst_54 = arith.constant dense<0.000000e+00> : vector<256x32xf32>
    %115 = tpu.matmul %104, %108, %cst_54 {dimension_numbers = #tpu.dot_dimension_numbers<[1], [0], [0], [1], [0, 0, 1, 1], [], []>} : vector<256x32xf32>, vector<32x32xf32>, vector<256x32xf32> -> vector<256x32xf32>
    %116 = arith.addf %114, %115 : vector<256x32xf32>
    %117 = vector.shape_cast %110 : vector<32xf32> to vector<1x32xf32>
    %118 = vector.broadcast %117 : vector<1x32xf32> to vector<256x32xf32>
    %119 = arith.addf %116, %118 : vector<256x32xf32>
    %120 = arith.mulf %119, %119 : vector<256x32xf32>
    %121 = arith.mulf %119, %120 : vector<256x32xf32>
    %cst_55 = arith.constant 4.471500e-02 : f32
    %122 = vector.broadcast %cst_55 : f32 to vector<256x32xf32>
    %123 = arith.mulf %122, %121 : vector<256x32xf32>
    %124 = arith.addf %119, %123 : vector<256x32xf32>
    %cst_56 = arith.constant 0.797884583 : f32
    %125 = vector.broadcast %cst_56 : f32 to vector<256x32xf32>
    %126 = arith.mulf %125, %124 : vector<256x32xf32>
    %127 = math.tanh %126 : vector<256x32xf32>
    %cst_57 = arith.constant 1.000000e+00 : f32
    %128 = vector.broadcast %cst_57 : f32 to vector<256x32xf32>
    %129 = arith.addf %128, %127 : vector<256x32xf32>
    %cst_58 = arith.constant 5.000000e-01 : f32
    %130 = vector.broadcast %cst_58 : f32 to vector<256x32xf32>
    %131 = arith.mulf %130, %129 : vector<256x32xf32>
    %132 = arith.mulf %119, %131 : vector<256x32xf32>
    %cst_59 = arith.constant dense<0.000000e+00> : vector<16x1xf32>
    %133 = vector.multi_reduction <add>, %3, %cst_59 [2] : vector<16x1x16xf32> to vector<16x1xf32>
    %134 = vector.shape_cast %133 : vector<16x1xf32> to vector<16x1x1xf32>
    %cst_60 = arith.constant 1.000000e+00 : f32
    %135 = vector.broadcast %cst_60 : f32 to vector<16x1x1xf32>
    %136 = arith.maximumf %134, %135 : vector<16x1x1xf32>
    %137 = vector.shape_cast %132 : vector<256x32xf32> to vector<16x16x32xf32>
    "tpu.trace_start"() <{level = 10 : i32, message = "bxa,bae->bxe"}> : () -> ()
    %cst_61 = arith.constant dense<0.000000e+00> : vector<16x1x32xf32>
    %138 = tpu.matmul %3, %137, %cst_61 {dimension_numbers = #tpu.dot_dimension_numbers<[2], [1], [1], [2], [0, 0, 0, 1, 1, 2], [0], [0]>} : vector<16x1x16xf32>, vector<16x16x32xf32>, vector<16x1x32xf32> -> vector<16x1x32xf32>
    "tpu.trace_stop"() : () -> ()
    %139 = vector.broadcast %136 : vector<16x1x1xf32> to vector<16x1x32xf32>
    %140 = arith.divf %138, %139 : vector<16x1x32xf32>
    %141 = vector.shape_cast %140 : vector<16x1x32xf32> to vector<16x32xf32>
    %c3 = arith.constant 3 : index
    %c0_62 = arith.constant 0 : index
    %142 = vector.load %arg11[%c3, %c0_62] : memref<6x32xf32, #tpu.memory_space<vmem>>, vector<1x32xf32>
    %143 = vector.shape_cast %142 : vector<1x32xf32> to vector<32xf32>
    %c4 = arith.constant 4 : index
    %c0_63 = arith.constant 0 : index
    %144 = vector.load %arg11[%c4, %c0_63] : memref<6x32xf32, #tpu.memory_space<vmem>>, vector<1x32xf32>
    %145 = vector.shape_cast %144 : vector<1x32xf32> to vector<32xf32>
    %c5 = arith.constant 5 : index
    %c0_64 = arith.constant 0 : index
    %146 = vector.load %arg11[%c5, %c0_64] : memref<6x32xf32, #tpu.memory_space<vmem>>, vector<1x1xf32>
    %147 = vector.shape_cast %146 : vector<1x1xf32> to vector<1xf32>
    %c0_65 = arith.constant 0 : index
    %c0_66 = arith.constant 0 : index
    %c0_67 = arith.constant 0 : index
    %148 = vector.load %arg10[%c0_65, %c0_66, %c0_67] : memref<3x32x32xf32, #tpu.memory_space<vmem>>, vector<1x32x32xf32>
    %149 = vector.shape_cast %148 : vector<1x32x32xf32> to vector<32x32xf32>
    %cst_68 = arith.constant dense<0.000000e+00> : vector<16x32xf32>
    %150 = tpu.matmul %141, %149, %cst_68 {dimension_numbers = #tpu.dot_dimension_numbers<[1], [0], [0], [1], [0, 0, 1, 1], [], []>} : vector<16x32xf32>, vector<32x32xf32>, vector<16x32xf32> -> vector<16x32xf32>
    %c0_69 = arith.constant 0 : index
    %c0_70 = arith.constant 0 : index
    %151 = vector.load %arg9[%c0_69, %c0_70] : memref<8x32xf32, #tpu.memory_space<vmem>>, vector<8x32xf32>
    %cst_71 = arith.constant dense<0.000000e+00> : vector<16x32xf32>
    %152 = tpu.matmul %5, %151, %cst_71 {dimension_numbers = #tpu.dot_dimension_numbers<[1], [0], [0], [1], [0, 0, 1, 1], [], []>} : vector<16x8xf32>, vector<8x32xf32>, vector<16x32xf32> -> vector<16x32xf32>
    %153 = arith.addf %150, %152 : vector<16x32xf32>
    %154 = vector.shape_cast %143 : vector<32xf32> to vector<1x32xf32>
    %155 = vector.broadcast %154 : vector<1x32xf32> to vector<16x32xf32>
    %156 = arith.addf %153, %155 : vector<16x32xf32>
    %157 = arith.mulf %156, %156 : vector<16x32xf32>
    %158 = arith.mulf %156, %157 : vector<16x32xf32>
    %cst_72 = arith.constant 4.471500e-02 : f32
    %159 = vector.broadcast %cst_72 : f32 to vector<16x32xf32>
    %160 = arith.mulf %159, %158 : vector<16x32xf32>
    %161 = arith.addf %156, %160 : vector<16x32xf32>
    %cst_73 = arith.constant 0.797884583 : f32
    %162 = vector.broadcast %cst_73 : f32 to vector<16x32xf32>
    %163 = arith.mulf %162, %161 : vector<16x32xf32>
    %164 = math.tanh %163 : vector<16x32xf32>
    %cst_74 = arith.constant 1.000000e+00 : f32
    %165 = vector.broadcast %cst_74 : f32 to vector<16x32xf32>
    %166 = arith.addf %165, %164 : vector<16x32xf32>
    %cst_75 = arith.constant 5.000000e-01 : f32
    %167 = vector.broadcast %cst_75 : f32 to vector<16x32xf32>
    %168 = arith.mulf %167, %166 : vector<16x32xf32>
    %169 = arith.mulf %156, %168 : vector<16x32xf32>
    %c1_76 = arith.constant 1 : index
    %c0_77 = arith.constant 0 : index
    %c0_78 = arith.constant 0 : index
    %170 = vector.load %arg10[%c1_76, %c0_77, %c0_78] : memref<3x32x32xf32, #tpu.memory_space<vmem>>, vector<1x32x32xf32>
    %171 = vector.shape_cast %170 : vector<1x32x32xf32> to vector<32x32xf32>
    %cst_79 = arith.constant dense<0.000000e+00> : vector<16x32xf32>
    %172 = tpu.matmul %169, %171, %cst_79 {dimension_numbers = #tpu.dot_dimension_numbers<[1], [0], [0], [1], [0, 0, 1, 1], [], []>} : vector<16x32xf32>, vector<32x32xf32>, vector<16x32xf32> -> vector<16x32xf32>
    %173 = vector.shape_cast %145 : vector<32xf32> to vector<1x32xf32>
    %174 = vector.broadcast %173 : vector<1x32xf32> to vector<16x32xf32>
    %175 = arith.addf %172, %174 : vector<16x32xf32>
    %176 = arith.mulf %175, %175 : vector<16x32xf32>
    %177 = arith.mulf %175, %176 : vector<16x32xf32>
    %cst_80 = arith.constant 4.471500e-02 : f32
    %178 = vector.broadcast %cst_80 : f32 to vector<16x32xf32>
    %179 = arith.mulf %178, %177 : vector<16x32xf32>
    %180 = arith.addf %175, %179 : vector<16x32xf32>
    %cst_81 = arith.constant 0.797884583 : f32
    %181 = vector.broadcast %cst_81 : f32 to vector<16x32xf32>
    %182 = arith.mulf %181, %180 : vector<16x32xf32>
    %183 = math.tanh %182 : vector<16x32xf32>
    %cst_82 = arith.constant 1.000000e+00 : f32
    %184 = vector.broadcast %cst_82 : f32 to vector<16x32xf32>
    %185 = arith.addf %184, %183 : vector<16x32xf32>
    %cst_83 = arith.constant 5.000000e-01 : f32
    %186 = vector.broadcast %cst_83 : f32 to vector<16x32xf32>
    %187 = arith.mulf %186, %185 : vector<16x32xf32>
    %188 = arith.mulf %175, %187 : vector<16x32xf32>
    %c2_84 = arith.constant 2 : index
    %c0_85 = arith.constant 0 : index
    %c0_86 = arith.constant 0 : index
    %189 = vector.load %arg10[%c2_84, %c0_85, %c0_86] : memref<3x32x32xf32, #tpu.memory_space<vmem>>, vector<1x32x32xf32>
    %190 = vector.shape_cast %189 : vector<1x32x32xf32> to vector<32x32xf32>
    %cst_87 = arith.constant dense<0.000000e+00> : vector<16x32xf32>
    %191 = tpu.matmul %188, %190, %cst_87 {dimension_numbers = #tpu.dot_dimension_numbers<[1], [0], [0], [1], [0, 0, 1, 1], [], []>} : vector<16x32xf32>, vector<32x32xf32>, vector<16x32xf32> -> vector<16x32xf32>
    %192 = vector.extract_strided_slice %191 {offsets = [0, 0], sizes = [16, 1], strides = [1, 1]} : vector<16x32xf32> to vector<16x1xf32>
    %193 = vector.shape_cast %147 : vector<1xf32> to vector<1x1xf32>
    %194 = vector.broadcast %193 : vector<1x1xf32> to vector<16x1xf32>
    %195 = arith.addf %192, %194 : vector<16x1xf32>
    %c0_88 = arith.constant 0 : index
    %c0_89 = arith.constant 0 : index
    %c0_90 = arith.constant 0 : index
    %196 = vector.load %arg12[%c0_88, %c0_89, %c0_90] : memref<1x16x1xf32, #tpu.memory_space<vmem>>, vector<1x16x1xf32>
    %197 = vector.shape_cast %196 : vector<1x16x1xf32> to vector<16x1xf32>
    %198 = vector.shape_cast %195 : vector<16x1xf32> to vector<1x16x1xf32>
    tpu.vector_store %arg12[%c0_88, %c0_89, %c0_90], %198 {strides = array<i32>} : memref<1x16x1xf32, #tpu.memory_space<vmem>>, vector<1x16x1xf32>,
    return
  }
  func.func @transform_0(%arg0: i32) -> (i32, i32, i32) {
    %c0_i32 = arith.constant 0 : i32
    %c0_i32_0 = arith.constant 0 : i32
    %c0_i32_1 = arith.constant 0 : i32
    return %arg0, %c0_i32, %c0_i32_0 : i32, i32, i32
  }
  func.func @transform_1(%arg0: i32) -> (i32, i32, i32) {
    %c0_i32 = arith.constant 0 : i32
    %c0_i32_0 = arith.constant 0 : i32
    %c0_i32_1 = arith.constant 0 : i32
    return %arg0, %c0_i32, %c0_i32_0 : i32, i32, i32
  }
  func.func @transform_2(%arg0: i32) -> (i32, i32, i32) {
    %c0_i32 = arith.constant 0 : i32
    %c0_i32_0 = arith.constant 0 : i32
    %c0_i32_1 = arith.constant 0 : i32
    return %arg0, %c0_i32, %c0_i32_0 : i32, i32, i32
  }
  func.func @transform_3(%arg0: i32) -> (i32, i32, i32) {
    %c0_i32 = arith.constant 0 : i32
    %c0_i32_0 = arith.constant 0 : i32
    %c0_i32_1 = arith.constant 0 : i32
    return %arg0, %c0_i32, %c0_i32_0 : i32, i32, i32
  }
  func.func @transform_4(%arg0: i32) -> (i32, i32, i32) {
    %c0_i32 = arith.constant 0 : i32
    %c0_i32_0 = arith.constant 0 : i32
    %c0_i32_1 = arith.constant 0 : i32
    return %arg0, %c0_i32, %c0_i32_0 : i32, i32, i32
  }
  func.func @transform_5(%arg0: i32) -> (i32, i32) {
    %c0_i32 = arith.constant 0 : i32
    %c0_i32_0 = arith.constant 0 : i32
    %c0_i32_1 = arith.constant 0 : i32
    return %c0_i32, %c0_i32_0 : i32, i32
  }
  func.func @transform_6(%arg0: i32) -> (i32, i32) {
    %c0_i32 = arith.constant 0 : i32
    %c0_i32_0 = arith.constant 0 : i32
    %c0_i32_1 = arith.constant 0 : i32
    return %c0_i32, %c0_i32_0 : i32, i32
  }
  func.func @transform_7(%arg0: i32) -> (i32, i32, i32) {
    %c0_i32 = arith.constant 0 : i32
    %c0_i32_0 = arith.constant 0 : i32
    %c0_i32_1 = arith.constant 0 : i32
    %c0_i32_2 = arith.constant 0 : i32
    return %c0_i32, %c0_i32_0, %c0_i32_1 : i32, i32, i32
  }
  func.func @transform_8(%arg0: i32) -> (i32, i32) {
    %c0_i32 = arith.constant 0 : i32
    %c0_i32_0 = arith.constant 0 : i32
    %c0_i32_1 = arith.constant 0 : i32
    return %c0_i32, %c0_i32_0 : i32, i32
  }
  func.func @transform_9(%arg0: i32) -> (i32, i32, i32) {
    %c0_i32 = arith.constant 0 : i32
    %c0_i32_0 = arith.constant 0 : i32
    %c0_i32_1 = arith.constant 0 : i32
    %c0_i32_2 = arith.constant 0 : i32
    return %c0_i32, %c0_i32_0, %c0_i32_1 : i32, i32, i32
  }
  func.func @transform_10(%arg0: i32) -> (i32, i32) {
    %c0_i32 = arith.constant 0 : i32
    %c0_i32_0 = arith.constant 0 : i32
    %c0_i32_1 = arith.constant 0 : i32
    return %c0_i32, %c0_i32_0 : i32, i32
  }
  func.func @transform_11(%arg0: i32) -> (i32, i32, i32) {
    %c0_i32 = arith.constant 0 : i32
    %c0_i32_0 = arith.constant 0 : i32
    %c0_i32_1 = arith.constant 0 : i32
    return %arg0, %c0_i32, %c0_i32_0 : i32, i32, i32
  }
}

</mosaic_0001>

<llo_original>
// kernel: tpu_custom_call.1
$region0: #{tpu_custom_call.1}
  #allocation0 [shape = 'u32[]', space=smem, size = 0x4, offset = 0x4, fixed_abs, tag = 'smem constant byte address 0x4 - core index']
  #allocation1 [shape = 'u32[72,128]{1,0:T(1,128)}', space=vmem, size = 0x9000, scoped, tag = 'internal scratch']
  %s0 = inlined_call_operand.vmem [shape: f32[32,16,12], index: 0, kind: input, shape index: {}]
  %s1 = inlined_call_operand.vmem [shape: f32[32,16,3], index: 1, kind: input, shape index: {}]
  %s2 = inlined_call_operand.vmem [shape: f32[32,3,16], index: 2, kind: input, shape index: {}]
  %s3 = inlined_call_operand.vmem [shape: f32[32,1,16], index: 3, kind: input, shape index: {}]
  %s4 = inlined_call_operand.vmem [shape: f32[32,1,8], index: 4, kind: input, shape index: {}]
  %s5 = inlined_call_operand.vmem [shape: f32[12,32], index: 5, kind: input, shape index: {}]
  %s6 = inlined_call_operand.vmem [shape: f32[8,32], index: 6, kind: input, shape index: {}]
  %s7 = inlined_call_operand.vmem [shape: f32[2,64,32], index: 7, kind: input, shape index: {}]
  %s8 = inlined_call_operand.vmem [shape: f32[8,32], index: 8, kind: input, shape index: {}]
  %s9 = inlined_call_operand.vmem [shape: f32[3,32,32], index: 9, kind: input, shape index: {}]
  %s10 = inlined_call_operand.vmem [shape: f32[6,32], index: 10, kind: input, shape index: {}]
  %s11 = inlined_call_operand.vmem [shape: f32[2,16,1], index: 11, kind: output, shape index: {}]
  %s12 = sld [smem:[#allocation0]]
  $region77: #{tpu_custom_call.1} parent=0
    _
  %s14 = ssub.s32 1, %s12
  %s15 = scalar_select 0, %s14, %s12
  loop: start=0, step=1, limit=4
  $region2: #{tpu_custom_call.1} parent=0 // loop_pre_header
    _
  $region3: #{tpu_custom_call.1} parent=0 // loop_header
    %s17 = sphi 0, %s21
    %p18 = scmp.ge.s32.totalorder %s17, 4
    %s27 = sphi 0, %s29
    %s30 = sphi 0, %s27
    %s31 = sphi 0, %s30
    %s47 = sphi 0, %s31
    %s53 = sphi 0, %s55
    %s56 = sphi 0, %s53
    %s57 = sphi 0, %s56
    %s73 = sphi 0, %s57
    %s79 = sphi 0, %s81
    %s82 = sphi 0, %s79
    %s83 = sphi 0, %s82
    %s99 = sphi 0, %s83
    %s105 = sphi 0, %s107
    %s108 = sphi 0, %s105
    %s109 = sphi 0, %s108
    %s125 = sphi 0, %s109
    %s131 = sphi 0, %s133
    %s134 = sphi 0, %s131
    %s135 = sphi 0, %s134
    %s151 = sphi 0, %s135
    %s155 = sphi 0, %s155
    %s157 = sphi 0, %s155
    %s158 = sphi 0, %s157
    %s172 = sphi 0, %s158
    %s176 = sphi 0, %s176
    %s178 = sphi 0, %s176
    %s179 = sphi 0, %s178
    %s193 = sphi 0, %s179
    %s197 = sphi 0, %s197
    %s199 = sphi 0, %s197
    %s200 = sphi 0, %s199
    %s214 = sphi 0, %s200
    %s218 = sphi 0, %s218
    %s220 = sphi 0, %s218
    %s221 = sphi 0, %s220
    %s235 = sphi 0, %s221
    %s239 = sphi 0, %s239
    %s241 = sphi 0, %s239
    %s242 = sphi 0, %s241
    %s256 = sphi 0, %s242
    %s260 = sphi 0, %s260
    %s262 = sphi 0, %s260
    %s263 = sphi 0, %s262
    %s277 = sphi 0, %s263
    %s283 = sphi 0, %s285
    %s286 = sphi 0, %s283
    %s287 = sphi 0, %s286
    %s303 = sphi 0, %s287
  $region4: #{tpu_custom_call.1} parent=0 // loop_header_branch
    %20 = sbr.rel (%p18) target = $region8
  $region5: #{tpu_custom_call.1} parent=0 // loop_body
    %s22 = ssub.s32 %s17, 1
    %s23 = ssub.s32 %s17, 2
    %s24 = sadd.s32 %s17, 1
    %s25 = ssub.s32 %s17, %s24
    %p26 = scmp.eq.s32.totalorder %s25, 0
    %s28 = sadd.s32 %s27, 1
    %s29 = scalar_select %p26, %s27, %s28
    %p32 = pneg %p26
    %p33 = scmp.eq.s32.totalorder %s17, 1
    %p34 = por %p32, %p33
    %p35 = scmp.ne.s32.totalorder %s27, %s30
    %p36 = scmp.eq.s32.totalorder %s17, 0
    %p37 = por %p35, %p36
    %p38 = scmp.ne.s32.totalorder %s27, %s30
    %p39 = scmp.eq.s32.totalorder %s22, 1
    %p40 = por %p38, %p39
    %p41 = scmp.ne.s32.totalorder %s30, %s31
    %p42 = scmp.eq.s32.totalorder %s22, 0
    %p43 = por %p41, %p42
    %p44 = scmp.ne.s32.totalorder %s30, %s31
    %p45 = scmp.eq.s32.totalorder %s23, 1
    %p46 = por %p44, %p45
    %p48 = scmp.ne.s32.totalorder %s31, %s47
    %p49 = scmp.eq.s32.totalorder %s23, 0
    %p50 = por %p48, %p49
    %s51 = ssub.s32 %s17, %s24
    %p52 = scmp.eq.s32.totalorder %s51, 0
    %s54 = sadd.s32 %s53, 1
    %s55 = scalar_select %p52, %s53, %s54
    %p58 = pneg %p52
    %p59 = scmp.eq.s32.totalorder %s17, 1
    %p60 = por %p58, %p59
    %p61 = scmp.ne.s32.totalorder %s53, %s56
    %p62 = scmp.eq.s32.totalorder %s17, 0
    %p63 = por %p61, %p62
    %p64 = scmp.ne.s32.totalorder %s53, %s56
    %p65 = scmp.eq.s32.totalorder %s22, 1
    %p66 = por %p64, %p65
    %p67 = scmp.ne.s32.totalorder %s56, %s57
    %p68 = scmp.eq.s32.totalorder %s22, 0
    %p69 = por %p67, %p68
    %p70 = scmp.ne.s32.totalorder %s56, %s57
    %p71 = scmp.eq.s32.totalorder %s23, 1
    %p72 = por %p70, %p71
    %p74 = scmp.ne.s32.totalorder %s57, %s73
    %p75 = scmp.eq.s32.totalorder %s23, 0
    %p76 = por %p74, %p75
    %s77 = ssub.s32 %s17, %s24
    %p78 = scmp.eq.s32.totalorder %s77, 0
    %s80 = sadd.s32 %s79, 1
    %s81 = scalar_select %p78, %s79, %s80
    %p84 = pneg %p78
    %p85 = scmp.eq.s32.totalorder %s17, 1
    %p86 = por %p84, %p85
    %p87 = scmp.ne.s32.totalorder %s79, %s82
    %p88 = scmp.eq.s32.totalorder %s17, 0
    %p89 = por %p87, %p88
    %p90 = scmp.ne.s32.totalorder %s79, %s82
    %p91 = scmp.eq.s32.totalorder %s22, 1
    %p92 = por %p90, %p91
    %p93 = scmp.ne.s32.totalorder %s82, %s83
    %p94 = scmp.eq.s32.totalorder %s22, 0
    %p95 = por %p93, %p94
    %p96 = scmp.ne.s32.totalorder %s82, %s83
    %p97 = scmp.eq.s32.totalorder %s23, 1
    %p98 = por %p96, %p97
    %p100 = scmp.ne.s32.totalorder %s83, %s99
    %p101 = scmp.eq.s32.totalorder %s23, 0
    %p102 = por %p100, %p101
    %s103 = ssub.s32 %s17, %s24
    %p104 = scmp.eq.s32.totalorder %s103, 0
    %s106 = sadd.s32 %s105, 1
    %s107 = scalar_select %p104, %s105, %s106
    %p110 = pneg %p104
    %p111 = scmp.eq.s32.totalorder %s17, 1
    %p112 = por %p110, %p111
    %p113 = scmp.ne.s32.totalorder %s105, %s108
    %p114 = scmp.eq.s32.totalorder %s17, 0
    %p115 = por %p113, %p114
    %p116 = scmp.ne.s32.totalorder %s105, %s108
    %p117 = scmp.eq.s32.totalorder %s22, 1
    %p118 = por %p116, %p117
    %p119 = scmp.ne.s32.totalorder %s108, %s109
    %p120 = scmp.eq.s32.totalorder %s22, 0
    %p121 = por %p119, %p120
    %p122 = scmp.ne.s32.totalorder %s108, %s109
    %p123 = scmp.eq.s32.totalorder %s23, 1
    %p124 = por %p122, %p123
    %p126 = scmp.ne.s32.totalorder %s109, %s125
    %p127 = scmp.eq.s32.totalorder %s23, 0
    %p128 = por %p126, %p127
    %s129 = ssub.s32 %s17, %s24
    %p130 = scmp.eq.s32.totalorder %s129, 0
    %s132 = sadd.s32 %s131, 1
    %s133 = scalar_select %p130, %s131, %s132
    %p136 = pneg %p130
    %p137 = scmp.eq.s32.totalorder %s17, 1
    %p138 = por %p136, %p137
    %p139 = scmp.ne.s32.totalorder %s131, %s134
    %p140 = scmp.eq.s32.totalorder %s17, 0
    %p141 = por %p139, %p140
    %p142 = scmp.ne.s32.totalorder %s131, %s134
    %p143 = scmp.eq.s32.totalorder %s22, 1
    %p144 = por %p142, %p143
    %p145 = scmp.ne.s32.totalorder %s134, %s135
    %p146 = scmp.eq.s32.totalorder %s22, 0
    %p147 = por %p145, %p146
    %p148 = scmp.ne.s32.totalorder %s134, %s135
    %p149 = scmp.eq.s32.totalorder %s23, 1
    %p150 = por %p148, %p149
    %p152 = scmp.ne.s32.totalorder %s135, %s151
    %p153 = scmp.eq.s32.totalorder %s23, 0
    %p154 = por %p152, %p153
    %s156 = sadd.s32 %s155, 1
    %p159 = scmp.eq.s32.totalorder %s17, 1
    %p160 = scmp.ne.s32.totalorder %s155, %s157
    %p161 = scmp.eq.s32.totalorder %s17, 0
    %p162 = por %p160, %p161
    %p163 = scmp.ne.s32.totalorder %s155, %s157
    %p164 = scmp.eq.s32.totalorder %s22, 1
    %p165 = por %p163, %p164
    %p166 = scmp.ne.s32.totalorder %s157, %s158
    %p167 = scmp.eq.s32.totalorder %s22, 0
    %p168 = por %p166, %p167
    %p169 = scmp.ne.s32.totalorder %s157, %s158
    %p170 = scmp.eq.s32.totalorder %s23, 1
    %p171 = por %p169, %p170
    %p173 = scmp.ne.s32.totalorder %s158, %s172
    %p174 = scmp.eq.s32.totalorder %s23, 0
    %p175 = por %p173, %p174
    %s177 = sadd.s32 %s176, 1
    %p180 = scmp.eq.s32.totalorder %s17, 1
    %p181 = scmp.ne.s32.totalorder %s176, %s178
    %p182 = scmp.eq.s32.totalorder %s17, 0
    %p183 = por %p181, %p182
    %p184 = scmp.ne.s32.totalorder %s176, %s178
    %p185 = scmp.eq.s32.totalorder %s22, 1
    %p186 = por %p184, %p185
    %p187 = scmp.ne.s32.totalorder %s178, %s179
    %p188 = scmp.eq.s32.totalorder %s22, 0
    %p189 = por %p187, %p188
    %p190 = scmp.ne.s32.totalorder %s178, %s179
    %p191 = scmp.eq.s32.totalorder %s23, 1
    %p192 = por %p190, %p191
    %p194 = scmp.ne.s32.totalorder %s179, %s193
    %p195 = scmp.eq.s32.totalorder %s23, 0
    %p196 = por %p194, %p195
    %s198 = sadd.s32 %s197, 1
    %p201 = scmp.eq.s32.totalorder %s17, 1
    %p202 = scmp.ne.s32.totalorder %s197, %s199
    %p203 = scmp.eq.s32.totalorder %s17, 0
    %p204 = por %p202, %p203
    %p205 = scmp.ne.s32.totalorder %s197, %s199
    %p206 = scmp.eq.s32.totalorder %s22, 1
    %p207 = por %p205, %p206
    %p208 = scmp.ne.s32.totalorder %s199, %s200
    %p209 = scmp.eq.s32.totalorder %s22, 0
    %p210 = por %p208, %p209
    %p211 = scmp.ne.s32.totalorder %s199, %s200
    %p212 = scmp.eq.s32.totalorder %s23, 1
    %p213 = por %p211, %p212
    %p215 = scmp.ne.s32.totalorder %s200, %s214
    %p216 = scmp.eq.s32.totalorder %s23, 0
    %p217 = por %p215, %p216
    %s219 = sadd.s32 %s218, 1
    %p222 = scmp.eq.s32.totalorder %s17, 1
    %p223 = scmp.ne.s32.totalorder %s218, %s220
    %p224 = scmp.eq.s32.totalorder %s17, 0
    %p225 = por %p223, %p224
    %p226 = scmp.ne.s32.totalorder %s218, %s220
    %p227 = scmp.eq.s32.totalorder %s22, 1
    %p228 = por %p226, %p227
    %p229 = scmp.ne.s32.totalorder %s220, %s221
    %p230 = scmp.eq.s32.totalorder %s22, 0
    %p231 = por %p229, %p230
    %p232 = scmp.ne.s32.totalorder %s220, %s221
    %p233 = scmp.eq.s32.totalorder %s23, 1
    %p234 = por %p232, %p233
    %p236 = scmp.ne.s32.totalorder %s221, %s235
    %p237 = scmp.eq.s32.totalorder %s23, 0
    %p238 = por %p236, %p237
    %s240 = sadd.s32 %s239, 1
    %p243 = scmp.eq.s32.totalorder %s17, 1
    %p244 = scmp.ne.s32.totalorder %s239, %s241
    %p245 = scmp.eq.s32.totalorder %s17, 0
    %p246 = por %p244, %p245
    %p247 = scmp.ne.s32.totalorder %s239, %s241
    %p248 = scmp.eq.s32.totalorder %s22, 1
    %p249 = por %p247, %p248
    %p250 = scmp.ne.s32.totalorder %s241, %s242
    %p251 = scmp.eq.s32.totalorder %s22, 0
    %p252 = por %p250, %p251
    %p253 = scmp.ne.s32.totalorder %s241, %s242
    %p254 = scmp.eq.s32.totalorder %s23, 1
    %p255 = por %p253, %p254
    %p257 = scmp.ne.s32.totalorder %s242, %s256
    %p258 = scmp.eq.s32.totalorder %s23, 0
    %p259 = por %p257, %p258
    %s261 = sadd.s32 %s260, 1
    %p264 = scmp.eq.s32.totalorder %s17, 1
    %p265 = scmp.ne.s32.totalorder %s260, %s262
    %p266 = scmp.eq.s32.totalorder %s17, 0
    %p267 = por %p265, %p266
    %p268 = scmp.ne.s32.totalorder %s260, %s262
    %p269 = scmp.eq.s32.totalorder %s22, 1
    %p270 = por %p268, %p269
    %p271 = scmp.ne.s32.totalorder %s262, %s263
    %p272 = scmp.eq.s32.totalorder %s22, 0
    %p273 = por %p271, %p272
    %p274 = scmp.ne.s32.totalorder %s262, %s263
    %p275 = scmp.eq.s32.totalorder %s23, 1
    %p276 = por %p274, %p275
    %p278 = scmp.ne.s32.totalorder %s263, %s277
    %p279 = scmp.eq.s32.totalorder %s23, 0
    %p280 = por %p278, %p279
    %s281 = ssub.s32 %s17, %s24
    %p282 = scmp.eq.s32.totalorder %s281, 0
    %s284 = sadd.s32 %s283, 1
    %s285 = scalar_select %p282, %s283, %s284
    %p288 = pneg %p282
    %p289 = scmp.eq.s32.totalorder %s17, 1
    %p290 = por %p288, %p289
    %p291 = scmp.ne.s32.totalorder %s283, %s286
    %p292 = scmp.eq.s32.totalorder %s17, 0
    %p293 = por %p291, %p292
    %p294 = scmp.ne.s32.totalorder %s283, %s286
    %p295 = scmp.eq.s32.totalorder %s22, 1
    %p296 = por %p294, %p295
    %p297 = scmp.ne.s32.totalorder %s286, %s287
    %p298 = scmp.eq.s32.totalorder %s22, 0
    %p299 = por %p297, %p298
    %p300 = scmp.ne.s32.totalorder %s286, %s287
    %p301 = scmp.eq.s32.totalorder %s23, 1
    %p302 = por %p300, %p301
    %p304 = scmp.ne.s32.totalorder %s287, %s303
    %p305 = scmp.eq.s32.totalorder %s23, 0
    %p306 = por %p304, %p305
    %p307 = scmp.le.s32.totalorder 1, %s17
    %p308 = scmp.lt.s32.totalorder %s17, 3
    %p309 = pnand %p307, %p308
    %p310 = pneg %p309
    // Predicated region
    $region9: #{tpu_custom_call.1} parent=5 // pred_check
      _
    $region10: #{tpu_custom_call.1} parent=5 // pred_check_branch
      %312 = sbr.rel (%p309) target = $region12
    $region11: #{tpu_custom_call.1} parent=5 // pred_region
      %s313 = ssub.s32 %s17, 1
      // Predicated region
      $region13: #{tpu_custom_call.1} parent=11 // pred_check
        %p314 = pneg %p168
      $region14: #{tpu_custom_call.1} parent=11 // pred_check_branch
        %316 = sbr.rel (%p314) target = $region16
      $region15: #{tpu_custom_call.1} parent=11 // pred_region
        _
      $region16: #{tpu_custom_call.1} parent=11 // pred_fallthru
        _
      // Predicated region
      $region17: #{tpu_custom_call.1} parent=11 // pred_check
        %p317 = pneg %p189
      $region18: #{tpu_custom_call.1} parent=11 // pred_check_branch
        %319 = sbr.rel (%p317) target = $region20
      $region19: #{tpu_custom_call.1} parent=11 // pred_region
        _
      $region20: #{tpu_custom_call.1} parent=11 // pred_fallthru
        _
      // Predicated region
      $region21: #{tpu_custom_call.1} parent=11 // pred_check
        %p320 = pneg %p210
      $region22: #{tpu_custom_call.1} parent=11 // pred_check_branch
        %322 = sbr.rel (%p320) target = $region24
      $region23: #{tpu_custom_call.1} parent=11 // pred_region
        _
      $region24: #{tpu_custom_call.1} parent=11 // pred_fallthru
        _
      // Predicated region
      $region25: #{tpu_custom_call.1} parent=11 // pred_check
        %p323 = pneg %p231
      $region26: #{tpu_custom_call.1} parent=11 // pred_check_branch
        %325 = sbr.rel (%p323) target = $region28
      $region27: #{tpu_custom_call.1} parent=11 // pred_region
        _
      $region28: #{tpu_custom_call.1} parent=11 // pred_fallthru
        _
      // Predicated region
      $region29: #{tpu_custom_call.1} parent=11 // pred_check
        %p326 = pneg %p252
      $region30: #{tpu_custom_call.1} parent=11 // pred_check_branch
        %328 = sbr.rel (%p326) target = $region32
      $region31: #{tpu_custom_call.1} parent=11 // pred_region
        _
      $region32: #{tpu_custom_call.1} parent=11 // pred_fallthru
        _
      // Predicated region
      $region33: #{tpu_custom_call.1} parent=11 // pred_check
        %p329 = pneg %p273
      $region34: #{tpu_custom_call.1} parent=11 // pred_check_branch
        %331 = sbr.rel (%p329) target = $region36
      $region35: #{tpu_custom_call.1} parent=11 // pred_region
        _
      $region36: #{tpu_custom_call.1} parent=11 // pred_fallthru
        _
    $region12: #{tpu_custom_call.1} parent=5 // pred_fallthru
      _
    %p332 = scmp.lt.s32.totalorder %s17, 2
    // Predicated region
    $region37: #{tpu_custom_call.1} parent=5 // pred_check
      %p333 = pneg %p332
    $region38: #{tpu_custom_call.1} parent=5 // pred_check_branch
      %335 = sbr.rel (%p333) target = $region40
    $region39: #{tpu_custom_call.1} parent=5 // pred_region
      // Predicated region
      $region41: #{tpu_custom_call.1} parent=39 // pred_check
        %p336 = pneg %p37
      $region42: #{tpu_custom_call.1} parent=39 // pred_check_branch
        %338 = sbr.rel (%p336) target = $region44
      $region43: #{tpu_custom_call.1} parent=39 // pred_region
        %s339 = smul.u32 16, %s17
        %p340 = scmp.lt.s32.totalorder %s339, 31
        %s341 = scalar_select %p340, %s339, 31
        %s342 = smul.addr %s341, 2
        %s343 = smul.addr %s342, 8
        %s344 = scalar_lea.vmem %s0, %s343
        %s345 = smul.u32 16, %s17
      $region44: #{tpu_custom_call.1} parent=39 // pred_fallthru
        _
      // Predicated region
      $region45: #{tpu_custom_call.1} parent=39 // pred_check
        %p346 = pneg %p63
      $region46: #{tpu_custom_call.1} parent=39 // pred_check_branch
        %348 = sbr.rel (%p346) target = $region48
      $region47: #{tpu_custom_call.1} parent=39 // pred_region
        %s349 = smul.u32 16, %s17
        %p350 = scmp.lt.s32.totalorder %s349, 31
        %s351 = scalar_select %p350, %s349, 31
        %s352 = smul.addr %s351, 2
        %s353 = smul.addr %s352, 8
        %s354 = scalar_lea.vmem %s1, %s353
        %s355 = smul.u32 16, %s17
      $region48: #{tpu_custom_call.1} parent=39 // pred_fallthru
        _
      // Predicated region
      $region49: #{tpu_custom_call.1} parent=39 // pred_check
        %p356 = pneg %p89
      $region50: #{tpu_custom_call.1} parent=39 // pred_check_branch
        %358 = sbr.rel (%p356) target = $region52
      $region51: #{tpu_custom_call.1} parent=39 // pred_region
        %s359 = smul.u32 16, %s17
        %p360 = scmp.lt.s32.totalorder %s359, 31
        %s361 = scalar_select %p360, %s359, 31
        %s362 = smul.addr %s361, 4
        %s363 = scalar_lea.vmem %s2, %s362
        %s364 = smul.u32 16, %s17
      $region52: #{tpu_custom_call.1} parent=39 // pred_fallthru
        _
      // Predicated region
      $region53: #{tpu_custom_call.1} parent=39 // pred_check
        %p365 = pneg %p115
      $region54: #{tpu_custom_call.1} parent=39 // pred_check_branch
        %367 = sbr.rel (%p365) target = $region56
      $region55: #{tpu_custom_call.1} parent=39 // pred_region
        %s368 = smul.u32 16, %s17
        %p369 = scmp.lt.s32.totalorder %s368, 31
        %s370 = scalar_select %p369, %s368, 31
        %s371 = scalar_lea.vmem %s3, %s370
        %s372 = smul.u32 16, %s17
      $region56: #{tpu_custom_call.1} parent=39 // pred_fallthru
        _
      // Predicated region
      $region57: #{tpu_custom_call.1} parent=39 // pred_check
        %p373 = pneg %p141
      $region58: #{tpu_custom_call.1} parent=39 // pred_check_branch
        %375 = sbr.rel (%p373) target = $region60
      $region59: #{tpu_custom_call.1} parent=39 // pred_region
        %s376 = smul.u32 16, %s17
        %p377 = scmp.lt.s32.totalorder %s376, 31
        %s378 = scalar_select %p377, %s376, 31
        %s379 = scalar_lea.vmem %s4, %s378
        %s380 = smul.u32 16, %s17
      $region60: #{tpu_custom_call.1} parent=39 // pred_fallthru
        _
    $region40: #{tpu_custom_call.1} parent=5 // pred_fallthru
      _
    %p381 = scmp.le.s32.totalorder 1, %s17
    %p382 = scmp.lt.s32.totalorder %s17, 3
    %p383 = pnand %p381, %p382
    %p384 = pneg %p383
    // Predicated region
    $region61: #{tpu_custom_call.1} parent=5 // pred_check
      _
    $region62: #{tpu_custom_call.1} parent=5 // pred_check_branch
      %386 = sbr.rel (%p383) target = $region64
    $region63: #{tpu_custom_call.1} parent=5 // pred_region
      %s387 = ssub.s32 %s17, 1
      %s388 = smul.u32 16, %s22
      %p389 = scmp.lt.s32.totalorder %s388, 31
      %s390 = scalar_select %p389, %s388, 31
      %s391 = smul.addr %s390, 2
      %s392 = smul.addr %s391, 8
      %s393 = scalar_lea.vmem %s0, %s392
      %p394 = pneg %p43
      %p395 = pneg %p40
      %s396 = smul.u32 16, %s22
      %p397 = scmp.lt.s32.totalorder %s396, 31
      %s398 = scalar_select %p397, %s396, 31
      %s399 = smul.addr %s398, 2
      %s400 = smul.addr %s399, 8
      %s401 = scalar_lea.vmem %s1, %s400
      %p402 = pneg %p69
      %p403 = pneg %p66
      %s404 = smul.u32 16, %s22
      %p405 = scmp.lt.s32.totalorder %s404, 31
      %s406 = scalar_select %p405, %s404, 31
      %s407 = smul.addr %s406, 4
      %s408 = scalar_lea.vmem %s2, %s407
      %p409 = pneg %p95
      %p410 = pneg %p92
      %s411 = smul.u32 16, %s22
      %p412 = scmp.lt.s32.totalorder %s411, 31
      %s413 = scalar_select %p412, %s411, 31
      %s414 = scalar_lea.vmem %s3, %s413
      %p415 = pneg %p121
      %p416 = pneg %p118
      %s417 = smul.u32 16, %s22
      %p418 = scmp.lt.s32.totalorder %s417, 31
      %s419 = scalar_select %p418, %s417, 31
      %s420 = scalar_lea.vmem %s4, %s419
      %p421 = pneg %p147
      %p422 = pneg %p144
      %p423 = pneg %p168
      %p424 = pneg %p165
      %p425 = pneg %p189
      %p426 = pneg %p186
      %p427 = pneg %p210
      %p428 = pneg %p207
      %p429 = pneg %p231
      %p430 = pneg %p228
      %p431 = pneg %p252
      %p432 = pneg %p249
      %p433 = pneg %p273
      %p434 = pneg %p270
      %p435 = pneg %p299
      %p436 = pneg %p296
      %p437 = scmp.lt.s32.totalorder %s22, 1
      %s438 = scalar_select %p437, %s22, 1
      %s439 = smul.addr %s438, 2
      %s440 = smul.addr %s439, 8
      %s441 = scalar_lea.vmem %s11, %s440
      %s442 = smul.u32 16, %s22
      %p443 = scmp.lt.s32.totalorder %s442, 31
      %s444 = scalar_select %p443, %s442, 31
      %s445 = smul.addr %s444, 2
      %s446 = smul.addr %s445, 8
      %s447 = scalar_lea.vmem %s0, %s446
      %s448 = smul.u32 16, %s22
      %s449 = smul.u32 16, %s22
      %p450 = scmp.lt.s32.totalorder %s449, 31
      %s451 = scalar_select %p450, %s449, 31
      %s452 = smul.addr %s451, 2
      %s453 = smul.addr %s452, 8
      %s454 = scalar_lea.vmem %s1, %s453
      %s455 = smul.u32 16, %s22
      %s456 = smul.u32 16, %s22
      %p457 = scmp.lt.s32.totalorder %s456, 31
      %s458 = scalar_select %p457, %s456, 31
      %s459 = smul.addr %s458, 4
      %s460 = scalar_lea.vmem %s2, %s459
      %s461 = smul.u32 16, %s22
      %s462 = smul.u32 16, %s22
      %p463 = scmp.lt.s32.totalorder %s462, 31
      %s464 = scalar_select %p463, %s462, 31
      %s465 = scalar_lea.vmem %s3, %s464
      %s466 = smul.u32 16, %s22
      %s467 = smul.u32 16, %s22
      %p468 = scmp.lt.s32.totalorder %s467, 31
      %s469 = scalar_select %p468, %s467, 31
      %s470 = scalar_lea.vmem %s4, %s469
      %s471 = smul.u32 16, %s22
      %p472 = scmp.lt.s32.totalorder %s22, 1
      %s473 = scalar_select %p472, %s22, 1
      %s474 = smul.addr %s473, 2
      %s475 = smul.addr %s474, 8
      %s476 = scalar_lea.vmem %s11, %s475
      %v477 = vld [vmem:[%s447] sm:$0xff]
      %v478 = vld [vmem:[%s447 + $0x8] sm:$0xff]
      %v479 = vld [vmem:[%s447 + $0x10] sm:$0xff]
      %v480 = vld [vmem:[%s447 + $0x18] sm:$0xff]
      %v481 = vld [vmem:[%s447 + $0x20] sm:$0xff]
      %v482 = vld [vmem:[%s447 + $0x28] sm:$0xff]
      %v483 = vld [vmem:[%s447 + $0x30] sm:$0xff]
      %v484 = vld [vmem:[%s447 + $0x38] sm:$0xff]
      %v485 = vld [vmem:[%s447 + $0x40] sm:$0xff]
      %v486 = vld [vmem:[%s447 + $0x48] sm:$0xff]
      %v487 = vld [vmem:[%s447 + $0x50] sm:$0xff]
      %v488 = vld [vmem:[%s447 + $0x58] sm:$0xff]
      %v489 = vld [vmem:[%s447 + $0x60] sm:$0xff]
      %v490 = vld [vmem:[%s447 + $0x68] sm:$0xff]
      %v491 = vld [vmem:[%s447 + $0x70] sm:$0xff]
      %v492 = vld [vmem:[%s447 + $0x78] sm:$0xff]
      %v493 = vld [vmem:[%s447 + $0x80] sm:$0xff]
      %v494 = vld [vmem:[%s447 + $0x88] sm:$0xff]
      %v495 = vld [vmem:[%s447 + $0x90] sm:$0xff]
      %v496 = vld [vmem:[%s447 + $0x98] sm:$0xff]
      %v497 = vld [vmem:[%s447 + $0xa0] sm:$0xff]
      %v498 = vld [vmem:[%s447 + $0xa8] sm:$0xff]
      %v499 = vld [vmem:[%s447 + $0xb0] sm:$0xff]
      %v500 = vld [vmem:[%s447 + $0xb8] sm:$0xff]
      %v501 = vld [vmem:[%s447 + $0xc0] sm:$0xff]
      %v502 = vld [vmem:[%s447 + $0xc8] sm:$0xff]
      %v503 = vld [vmem:[%s447 + $0xd0] sm:$0xff]
      %v504 = vld [vmem:[%s447 + $0xd8] sm:$0xff]
      %v505 = vld [vmem:[%s447 + $0xe0] sm:$0xff]
      %v506 = vld [vmem:[%s447 + $0xe8] sm:$0xff]
      %v507 = vld [vmem:[%s447 + $0xf0] sm:$0xff]
      %v508 = vld [vmem:[%s447 + $0xf8] sm:$0xff]
      %v509 = vld [vmem:[%s454] sm:$0xff]
      %v510 = vld [vmem:[%s454 + $0x8] sm:$0xff]
      %v511 = vld [vmem:[%s454 + $0x10] sm:$0xff]
      %v512 = vld [vmem:[%s454 + $0x18] sm:$0xff]
      %v513 = vld [vmem:[%s454 + $0x20] sm:$0xff]
      %v514 = vld [vmem:[%s454 + $0x28] sm:$0xff]
      %v515 = vld [vmem:[%s454 + $0x30] sm:$0xff]
      %v516 = vld [vmem:[%s454 + $0x38] sm:$0xff]
      %v517 = vld [vmem:[%s454 + $0x40] sm:$0xff]
      %v518 = vld [vmem:[%s454 + $0x48] sm:$0xff]
      %v519 = vld [vmem:[%s454 + $0x50] sm:$0xff]
      %v520 = vld [vmem:[%s454 + $0x58] sm:$0xff]
      %v521 = vld [vmem:[%s454 + $0x60] sm:$0xff]
      %v522 = vld [vmem:[%s454 + $0x68] sm:$0xff]
      %v523 = vld [vmem:[%s454 + $0x70] sm:$0xff]
      %v524 = vld [vmem:[%s454 + $0x78] sm:$0xff]
      %v525 = vld [vmem:[%s454 + $0x80] sm:$0xff]
      %v526 = vld [vmem:[%s454 + $0x88] sm:$0xff]
      %v527 = vld [vmem:[%s454 + $0x90] sm:$0xff]
      %v528 = vld [vmem:[%s454 + $0x98] sm:$0xff]
      %v529 = vld [vmem:[%s454 + $0xa0] sm:$0xff]
      %v530 = vld [vmem:[%s454 + $0xa8] sm:$0xff]
      %v531 = vld [vmem:[%s454 + $0xb0] sm:$0xff]
      %v532 = vld [vmem:[%s454 + $0xb8] sm:$0xff]
      %v533 = vld [vmem:[%s454 + $0xc0] sm:$0xff]
      %v534 = vld [vmem:[%s454 + $0xc8] sm:$0xff]
      %v535 = vld [vmem:[%s454 + $0xd0] sm:$0xff]
      %v536 = vld [vmem:[%s454 + $0xd8] sm:$0xff]
      %v537 = vld [vmem:[%s454 + $0xe0] sm:$0xff]
      %v538 = vld [vmem:[%s454 + $0xe8] sm:$0xff]
      %v539 = vld [vmem:[%s454 + $0xf0] sm:$0xff]
      %v540 = vld [vmem:[%s454 + $0xf8] sm:$0xff]
      %v541 = vld [vmem:[%s460] sm:$0x7]
      %v542 = vld [vmem:[%s460 + $0x4] sm:$0x7]
      %v543 = vld [vmem:[%s460 + $0x8] sm:$0x7]
      %v544 = vld [vmem:[%s460 + $0xc] sm:$0x7]
      %v545 = vld [vmem:[%s460 + $0x10] sm:$0x7]
      %v546 = vld [vmem:[%s460 + $0x14] sm:$0x7]
      %v547 = vld [vmem:[%s460 + $0x18] sm:$0x7]
      %v548 = vld [vmem:[%s460 + $0x1c] sm:$0x7]
      %v549 = vld [vmem:[%s460 + $0x20] sm:$0x7]
      %v550 = vld [vmem:[%s460 + $0x24] sm:$0x7]
      %v551 = vld [vmem:[%s460 + $0x28] sm:$0x7]
      %v552 = vld [vmem:[%s460 + $0x2c] sm:$0x7]
      %v553 = vld [vmem:[%s460 + $0x30] sm:$0x7]
      %v554 = vld [vmem:[%s460 + $0x34] sm:$0x7]
      %v555 = vld [vmem:[%s460 + $0x38] sm:$0x7]
      %v556 = vld [vmem:[%s460 + $0x3c] sm:$0x7]
      %v557 = vld [vmem:[%s465] sm:$0x1]
      %v558 = vld [vmem:[%s465 + $0x1] sm:$0x1]
      %v559 = vld [vmem:[%s465 + $0x2] sm:$0x1]
      %v560 = vld [vmem:[%s465 + $0x3] sm:$0x1]
      %v561 = vld [vmem:[%s465 + $0x4] sm:$0x1]
      %v562 = vld [vmem:[%s465 + $0x5] sm:$0x1]
      %v563 = vld [vmem:[%s465 + $0x6] sm:$0x1]
      %v564 = vld [vmem:[%s465 + $0x7] sm:$0x1]
      %v565 = vld [vmem:[%s465 + $0x8] sm:$0x1]
      %v566 = vld [vmem:[%s465 + $0x9] sm:$0x1]
      %v567 = vld [vmem:[%s465 + $0xa] sm:$0x1]
      %v568 = vld [vmem:[%s465 + $0xb] sm:$0x1]
      %v569 = vld [vmem:[%s465 + $0xc] sm:$0x1]
      %v570 = vld [vmem:[%s465 + $0xd] sm:$0x1]
      %v571 = vld [vmem:[%s465 + $0xe] sm:$0x1]
      %v572 = vld [vmem:[%s465 + $0xf] sm:$0x1]
      %v573 = vld [vmem:[%s470] sm:$0x1]
      %v574 = vld [vmem:[%s470 + $0x1] sm:$0x1]
      %v575 = vld [vmem:[%s470 + $0x2] sm:$0x1]
      %v576 = vld [vmem:[%s470 + $0x3] sm:$0x1]
      %v577 = vld [vmem:[%s470 + $0x4] sm:$0x1]
      %v578 = vld [vmem:[%s470 + $0x5] sm:$0x1]
      %v579 = vld [vmem:[%s470 + $0x6] sm:$0x1]
      %v580 = vld [vmem:[%s470 + $0x7] sm:$0x1]
      %v581 = vld [vmem:[%s470 + $0x8] sm:$0x1]
      %v582 = vld [vmem:[%s470 + $0x9] sm:$0x1]
      %v583 = vld [vmem:[%s470 + $0xa] sm:$0x1]
      %v584 = vld [vmem:[%s470 + $0xb] sm:$0x1]
      %v585 = vld [vmem:[%s470 + $0xc] sm:$0x1]
      %v586 = vld [vmem:[%s470 + $0xd] sm:$0x1]
      %v587 = vld [vmem:[%s470 + $0xe] sm:$0x1]
      %v588 = vld [vmem:[%s470 + $0xf] sm:$0x1]
      %v589 = vld [vmem:[%s5] sm:$0xff]
      %v590 = vld [vmem:[%s5 + $0x8] sm:$0xf]
      %vm591 = vcmask 97280
      %v593 = vsel %vm591, %v477, 0
      %v596 = vsel %vm591, %v478, 0
      %v599 = vsel %vm591, %v479, 0
      %v602 = vsel %vm591, %v480, 0
      %v605 = vsel %vm591, %v481, 0
      %v608 = vsel %vm591, %v482, 0
      %v611 = vsel %vm591, %v483, 0
      %v614 = vsel %vm591, %v484, 0
      %v617 = vsel %vm591, %v485, 0
      %v620 = vsel %vm591, %v486, 0
      %v623 = vsel %vm591, %v487, 0
      %v626 = vsel %vm591, %v488, 0
      %v629 = vsel %vm591, %v489, 0
      %v632 = vsel %vm591, %v490, 0
      %v635 = vsel %vm591, %v491, 0
      %v638 = vsel %vm591, %v492, 0
      %v641 = vsel %vm591, %v493, 0
      %v644 = vsel %vm591, %v494, 0
      %v647 = vsel %vm591, %v495, 0
      %v650 = vsel %vm591, %v496, 0
      %v653 = vsel %vm591, %v497, 0
      %v656 = vsel %vm591, %v498, 0
      %v659 = vsel %vm591, %v499, 0
      %v662 = vsel %vm591, %v500, 0
      %v665 = vsel %vm591, %v501, 0
      %v668 = vsel %vm591, %v502, 0
      %v671 = vsel %vm591, %v503, 0
      %v674 = vsel %vm591, %v504, 0
      %v677 = vsel %vm591, %v505, 0
      %v680 = vsel %vm591, %v506, 0
      %v683 = vsel %vm591, %v507, 0
      %v686 = vsel %vm591, %v508, 0
      %vm688 = vcmask 1043456
      %v690 = vsel %vm688, %v590, 0
      %692 = vmatpush.msra.mxu0 0.0
      %693 = vmatpush.msra.mxu0 0.0
      %694 = vmatpush.msra.mxu0 0.0
      %695 = vmatpush.msra.mxu0 0.0
      %696 = vmatpush.msra.mxu0 0.0
      %697 = vmatpush.msra.mxu0 0.0
      %698 = vmatpush.msra.mxu0 0.0
      %699 = vmatpush.msra.mxu0 0.0
      %700 = vmatpush.msra.mxu0 0.0
      %701 = vmatpush.msra.mxu0 0.0
      %702 = vmatpush.msra.mxu0 0.0
      %703 = vmatpush.msra.mxu0 0.0
      %704 = vmatpush.msra.mxu0 0.0
      %705 = vmatpush.msra.mxu0 0.0
      %706 = vmatpush.msra.mxu0 %v690
      %707 = vmatpush.msra.mxu0 %v589
      %708 = vmatmul.f32.gmra.mxu0 %v593
      %v709 = vpop.f32.mrf.mxu0
      %v710 = vadd.f32 0.0, %v709
      %711 = vmatmul.f32.gmra.mxu0 %v596
      %v712 = vpop.f32.mrf.mxu0
      %v713 = vadd.f32 0.0, %v712
      %714 = vmatmul.f32.gmra.mxu0 %v599
      %v715 = vpop.f32.mrf.mxu0
      %v716 = vadd.f32 0.0, %v715
      %717 = vmatmul.f32.gmra.mxu0 %v602
      %v718 = vpop.f32.mrf.mxu0
      %v719 = vadd.f32 0.0, %v718
      %720 = vmatmul.f32.gmra.mxu0 %v605
      %v721 = vpop.f32.mrf.mxu0
      %v722 = vadd.f32 0.0, %v721
      %723 = vmatmul.f32.gmra.mxu0 %v608
      %v724 = vpop.f32.mrf.mxu0
      %v725 = vadd.f32 0.0, %v724
      %726 = vmatmul.f32.gmra.mxu0 %v611
      %v727 = vpop.f32.mrf.mxu0
      %v728 = vadd.f32 0.0, %v727
      %729 = vmatmul.f32.gmra.mxu0 %v614
      %v730 = vpop.f32.mrf.mxu0
      %v731 = vadd.f32 0.0, %v730
      %732 = vmatmul.f32.gmra.mxu0 %v617
      %v733 = vpop.f32.mrf.mxu0
      %v734 = vadd.f32 0.0, %v733
      %735 = vmatmul.f32.gmra.mxu0 %v620
      %v736 = vpop.f32.mrf.mxu0
      %v737 = vadd.f32 0.0, %v736
      %738 = vmatmul.f32.gmra.mxu0 %v623
      %v739 = vpop.f32.mrf.mxu0
      %v740 = vadd.f32 0.0, %v739
      %741 = vmatmul.f32.gmra.mxu0 %v626
      %v742 = vpop.f32.mrf.mxu0
      %v743 = vadd.f32 0.0, %v742
      %744 = vmatmul.f32.gmra.mxu0 %v629
      %v745 = vpop.f32.mrf.mxu0
      %v746 = vadd.f32 0.0, %v745
      %747 = vmatmul.f32.gmra.mxu0 %v632
      %v748 = vpop.f32.mrf.mxu0
      %v749 = vadd.f32 0.0, %v748
      %750 = vmatmul.f32.gmra.mxu0 %v635
      %v751 = vpop.f32.mrf.mxu0
      %v752 = vadd.f32 0.0, %v751
      %753 = vmatmul.f32.gmra.mxu0 %v638
      %v754 = vpop.f32.mrf.mxu0
      %v755 = vadd.f32 0.0, %v754
      %756 = vmatmul.f32.gmra.mxu0 %v641
      %v757 = vpop.f32.mrf.mxu0
      %v758 = vadd.f32 0.0, %v757
      %759 = vmatmul.f32.gmra.mxu0 %v644
      %v760 = vpop.f32.mrf.mxu0
      %v761 = vadd.f32 0.0, %v760
      %762 = vmatmul.f32.gmra.mxu0 %v647
      %v763 = vpop.f32.mrf.mxu0
      %v764 = vadd.f32 0.0, %v763
      %765 = vmatmul.f32.gmra.mxu0 %v650
      %v766 = vpop.f32.mrf.mxu0
      %v767 = vadd.f32 0.0, %v766
      %768 = vmatmul.f32.gmra.mxu0 %v653
      %v769 = vpop.f32.mrf.mxu0
      %v770 = vadd.f32 0.0, %v769
      %771 = vmatmul.f32.gmra.mxu0 %v656
      %v772 = vpop.f32.mrf.mxu0
      %v773 = vadd.f32 0.0, %v772
      %774 = vmatmul.f32.gmra.mxu0 %v659
      %v775 = vpop.f32.mrf.mxu0
      %v776 = vadd.f32 0.0, %v775
      %777 = vmatmul.f32.gmra.mxu0 %v662
      %v778 = vpop.f32.mrf.mxu0
      %v779 = vadd.f32 0.0, %v778
      %780 = vmatmul.f32.gmra.mxu0 %v665
      %v781 = vpop.f32.mrf.mxu0
      %v782 = vadd.f32 0.0, %v781
      %783 = vmatmul.f32.gmra.mxu0 %v668
      %v784 = vpop.f32.mrf.mxu0
      %v785 = vadd.f32 0.0, %v784
      %786 = vmatmul.f32.gmra.mxu0 %v671
      %v787 = vpop.f32.mrf.mxu0
      %v788 = vadd.f32 0.0, %v787
      %789 = vmatmul.f32.gmra.mxu0 %v674
      %v790 = vpop.f32.mrf.mxu0
      %v791 = vadd.f32 0.0, %v790
      %792 = vmatmul.f32.gmra.mxu0 %v677
      %v793 = vpop.f32.mrf.mxu0
      %v794 = vadd.f32 0.0, %v793
      %795 = vmatmul.f32.gmra.mxu0 %v680
      %v796 = vpop.f32.mrf.mxu0
      %v797 = vadd.f32 0.0, %v796
      %798 = vmatmul.f32.gmra.mxu0 %v683
      %v799 = vpop.f32.mrf.mxu0
      %v800 = vadd.f32 0.0, %v799
      %801 = vmatmul.f32.gmra.mxu0 %v686
      %v802 = vpop.f32.mrf.mxu0
      %v803 = vadd.f32 0.0, %v802
      %804 = vdwg.mxu0
      %v805 = vld [vmem:[%s6] sm:$0xff]
      %822 = vst [vmem:[#allocation1] ss:$9 sm:$0xff] %v573
      %s823 = scalar_lea.vmem [#allocation1], 1
      %824 = vst [vmem:[%s823] ss:$9 sm:$0xff] %v574
      %s825 = scalar_lea.vmem [#allocation1], 2
      %826 = vst [vmem:[%s825] ss:$9 sm:$0xff] %v575
      %s827 = scalar_lea.vmem [#allocation1], 3
      %828 = vst [vmem:[%s827] ss:$9 sm:$0xff] %v576
      %s829 = scalar_lea.vmem [#allocation1], 4
      %830 = vst [vmem:[%s829] ss:$9 sm:$0xff] %v577
      %s831 = scalar_lea.vmem [#allocation1], 5
      %832 = vst [vmem:[%s831] ss:$9 sm:$0xff] %v578
      %s833 = scalar_lea.vmem [#allocation1], 6
      %834 = vst [vmem:[%s833] ss:$9 sm:$0xff] %v579
      %s835 = scalar_lea.vmem [#allocation1], 7
      %836 = vst [vmem:[%s835] ss:$9 sm:$0xff] %v580
      %v837 = vld [vmem:[#allocation1] sm:$0xff]
      %838 = vst [vmem:[#allocation1] ss:$9 sm:$0xff] %v581
      %839 = vst [vmem:[%s823] ss:$9 sm:$0xff] %v582
      %840 = vst [vmem:[%s825] ss:$9 sm:$0xff] %v583
      %841 = vst [vmem:[%s827] ss:$9 sm:$0xff] %v584
      %842 = vst [vmem:[%s829] ss:$9 sm:$0xff] %v585
      %843 = vst [vmem:[%s831] ss:$9 sm:$0xff] %v586
      %844 = vst [vmem:[%s833] ss:$9 sm:$0xff] %v587
      %845 = vst [vmem:[%s835] ss:$9 sm:$0xff] %v588
      %v846 = vld [vmem:[#allocation1] sm:$0xff]
      %vm847 = vcmask 64512
      %v848 = vsel %vm847, %v837, 0
      %v850 = vsel %vm847, %v846, 0
      %852 = vmatpush.msra.mxu0 0.0
      %853 = vmatpush.msra.mxu0 0.0
      %854 = vmatpush.msra.mxu0 0.0
      %855 = vmatpush.msra.mxu0 0.0
      %856 = vmatpush.msra.mxu0 0.0
      %857 = vmatpush.msra.mxu0 0.0
      %858 = vmatpush.msra.mxu0 0.0
      %859 = vmatpush.msra.mxu0 0.0
      %860 = vmatpush.msra.mxu0 0.0
      %861 = vmatpush.msra.mxu0 0.0
      %862 = vmatpush.msra.mxu0 0.0
      %863 = vmatpush.msra.mxu0 0.0
      %864 = vmatpush.msra.mxu0 0.0
      %865 = vmatpush.msra.mxu0 0.0
      %866 = vmatpush.msra.mxu0 0.0
      %867 = vmatpush.msra.mxu0 %v805
      %868 = vmatmul.f32.gmra.mxu0 %v848
      %v869 = vpop.f32.mrf.mxu0
      %v870 = vadd.f32 0.0, %v869
      %871 = vmatmul.f32.gmra.mxu0 %v850
      %v872 = vpop.f32.mrf.mxu0
      %v873 = vadd.f32 0.0, %v872
      %874 = vdwg.mxu0
      %v875 = vld [vmem:[%s10] sm:$0x1]
      %v878 = vrot.slane %v870, 1
      %v879 = vrot.slane %v870, 2
      %v880 = vrot.slane %v870, 3
      %v881 = vrot.slane %v870, 4
      %v882 = vrot.slane %v870, 5
      %v883 = vrot.slane %v870, 6
      %v884 = vrot.slane %v870, 7
      %v885 = vrot.slane %v873, 1
      %v886 = vrot.slane %v873, 2
      %v887 = vrot.slane %v873, 3
      %v888 = vrot.slane %v873, 4
      %v889 = vrot.slane %v873, 5
      %v890 = vrot.slane %v873, 6
      %v891 = vrot.slane %v873, 7
      %v892 = vperm.slane %v870, 0
      %v893 = vperm.slane %v878, 0
      %v894 = vperm.slane %v879, 0
      %v895 = vperm.slane %v880, 0
      %v896 = vperm.slane %v881, 0
      %v897 = vperm.slane %v882, 0
      %v898 = vperm.slane %v883, 0
      %v899 = vperm.slane %v884, 0
      %v900 = vperm.slane %v873, 0
      %v901 = vperm.slane %v885, 0
      %v902 = vperm.slane %v886, 0
      %v903 = vperm.slane %v887, 0
      %v904 = vperm.slane %v888, 0
      %v905 = vperm.slane %v889, 0
      %v906 = vperm.slane %v890, 0
      %v907 = vperm.slane %v891, 0
      %v924 = vadd.f32 %v710, %v892
      %v925 = vadd.f32 %v713, %v892
      %v926 = vadd.f32 %v716, %v893
      %v927 = vadd.f32 %v719, %v893
      %v928 = vadd.f32 %v722, %v894
      %v929 = vadd.f32 %v725, %v894
      %v930 = vadd.f32 %v728, %v895
      %v931 = vadd.f32 %v731, %v895
      %v932 = vadd.f32 %v734, %v896
      %v933 = vadd.f32 %v737, %v896
      %v934 = vadd.f32 %v740, %v897
      %v935 = vadd.f32 %v743, %v897
      %v936 = vadd.f32 %v746, %v898
      %v937 = vadd.f32 %v749, %v898
      %v938 = vadd.f32 %v752, %v899
      %v939 = vadd.f32 %v755, %v899
      %v940 = vadd.f32 %v758, %v900
      %v941 = vadd.f32 %v761, %v900
      %v942 = vadd.f32 %v764, %v901
      %v943 = vadd.f32 %v767, %v901
      %v944 = vadd.f32 %v770, %v902
      %v945 = vadd.f32 %v773, %v902
      %v946 = vadd.f32 %v776, %v903
      %v947 = vadd.f32 %v779, %v903
      %v948 = vadd.f32 %v782, %v904
      %v949 = vadd.f32 %v785, %v904
      %v950 = vadd.f32 %v788, %v905
      %v951 = vadd.f32 %v791, %v905
      %v952 = vadd.f32 %v794, %v906
      %v953 = vadd.f32 %v797, %v906
      %v954 = vadd.f32 %v800, %v907
      %v955 = vadd.f32 %v803, %v907
      %v956 = vperm.slane %v875, 0
      %v957 = vadd.f32 %v924, %v956
      %v958 = vadd.f32 %v925, %v956
      %v959 = vadd.f32 %v926, %v956
      %v960 = vadd.f32 %v927, %v956
      %v961 = vadd.f32 %v928, %v956
      %v962 = vadd.f32 %v929, %v956
      %v963 = vadd.f32 %v930, %v956
      %v964 = vadd.f32 %v931, %v956
      %v965 = vadd.f32 %v932, %v956
      %v966 = vadd.f32 %v933, %v956
      %v967 = vadd.f32 %v934, %v956
      %v968 = vadd.f32 %v935, %v956
      %v969 = vadd.f32 %v936, %v956
      %v970 = vadd.f32 %v937, %v956
      %v971 = vadd.f32 %v938, %v956
      %v972 = vadd.f32 %v939, %v956
      %v973 = vadd.f32 %v940, %v956
      %v974 = vadd.f32 %v941, %v956
      %v975 = vadd.f32 %v942, %v956
      %v976 = vadd.f32 %v943, %v956
      %v977 = vadd.f32 %v944, %v956
      %v978 = vadd.f32 %v945, %v956
      %v979 = vadd.f32 %v946, %v956
      %v980 = vadd.f32 %v947, %v956
      %v981 = vadd.f32 %v948, %v956
      %v982 = vadd.f32 %v949, %v956
      %v983 = vadd.f32 %v950, %v956
      %v984 = vadd.f32 %v951, %v956
      %v985 = vadd.f32 %v952, %v956
      %v986 = vadd.f32 %v953, %v956
      %v987 = vadd.f32 %v954, %v956
      %v988 = vadd.f32 %v955, %v956
      %v989 = vmul.f32 %v957, %v957
      %v990 = vmul.f32 %v958, %v958
      %v991 = vmul.f32 %v959, %v959
      %v992 = vmul.f32 %v960, %v960
      %v993 = vmul.f32 %v961, %v961
      %v994 = vmul.f32 %v962, %v962
      %v995 = vmul.f32 %v963, %v963
      %v996 = vmul.f32 %v964, %v964
      %v997 = vmul.f32 %v965, %v965
      %v998 = vmul.f32 %v966, %v966
      %v999 = vmul.f32 %v967, %v967
      %v1000 = vmul.f32 %v968, %v968
      %v1001 = vmul.f32 %v969, %v969
      %v1002 = vmul.f32 %v970, %v970
      %v1003 = vmul.f32 %v971, %v971
      %v1004 = vmul.f32 %v972, %v972
      %v1005 = vmul.f32 %v973, %v973
      %v1006 = vmul.f32 %v974, %v974
      %v1007 = vmul.f32 %v975, %v975
      %v1008 = vmul.f32 %v976, %v976
      %v1009 = vmul.f32 %v977, %v977
      %v1010 = vmul.f32 %v978, %v978
      %v1011 = vmul.f32 %v979, %v979
      %v1012 = vmul.f32 %v980, %v980
      %v1013 = vmul.f32 %v981, %v981
      %v1014 = vmul.f32 %v982, %v982
      %v1015 = vmul.f32 %v983, %v983
      %v1016 = vmul.f32 %v984, %v984
      %v1017 = vmul.f32 %v985, %v985
      %v1018 = vmul.f32 %v986, %v986
      %v1019 = vmul.f32 %v987, %v987
      %v1020 = vmul.f32 %v988, %v988
      %v1021 = vmul.f32 %v957, %v989
      %v1022 = vmul.f32 %v958, %v990
      %v1023 = vmul.f32 %v959, %v991
      %v1024 = vmul.f32 %v960, %v992
      %v1025 = vmul.f32 %v961, %v993
      %v1026 = vmul.f32 %v962, %v994
      %v1027 = vmul.f32 %v963, %v995
      %v1028 = vmul.f32 %v964, %v996
      %v1029 = vmul.f32 %v965, %v997
      %v1030 = vmul.f32 %v966, %v998
      %v1031 = vmul.f32 %v967, %v999
      %v1032 = vmul.f32 %v968, %v1000
      %v1033 = vmul.f32 %v969, %v1001
      %v1034 = vmul.f32 %v970, %v1002
      %v1035 = vmul.f32 %v971, %v1003
      %v1036 = vmul.f32 %v972, %v1004
      %v1037 = vmul.f32 %v973, %v1005
      %v1038 = vmul.f32 %v974, %v1006
      %v1039 = vmul.f32 %v975, %v1007
      %v1040 = vmul.f32 %v976, %v1008
      %v1041 = vmul.f32 %v977, %v1009
      %v1042 = vmul.f32 %v978, %v1010
      %v1043 = vmul.f32 %v979, %v1011
      %v1044 = vmul.f32 %v980, %v1012
      %v1045 = vmul.f32 %v981, %v1013
      %v1046 = vmul.f32 %v982, %v1014
      %v1047 = vmul.f32 %v983, %v1015
      %v1048 = vmul.f32 %v984, %v1016
      %v1049 = vmul.f32 %v985, %v1017
      %v1050 = vmul.f32 %v986, %v1018
      %v1051 = vmul.f32 %v987, %v1019
      %v1052 = vmul.f32 %v988, %v1020
      %v1053 = vmul.f32 %v1021, 0.044715
      %v1054 = vmul.f32 %v1022, 0.044715
      %v1055 = vmul.f32 %v1023, 0.044715
      %v1056 = vmul.f32 %v1024, 0.044715
      %v1057 = vmul.f32 %v1025, 0.044715
      %v1058 = vmul.f32 %v1026, 0.044715
      %v1059 = vmul.f32 %v1027, 0.044715
      %v1060 = vmul.f32 %v1028, 0.044715
      %v1061 = vmul.f32 %v1029, 0.044715
      %v1062 = vmul.f32 %v1030, 0.044715
      %v1063 = vmul.f32 %v1031, 0.044715
      %v1064 = vmul.f32 %v1032, 0.044715
      %v1065 = vmul.f32 %v1033, 0.044715
      %v1066 = vmul.f32 %v1034, 0.044715
      %v1067 = vmul.f32 %v1035, 0.044715
      %v1068 = vmul.f32 %v1036, 0.044715
      %v1069 = vmul.f32 %v1037, 0.044715
      %v1070 = vmul.f32 %v1038, 0.044715
      %v1071 = vmul.f32 %v1039, 0.044715
      %v1072 = vmul.f32 %v1040, 0.044715
      %v1073 = vmul.f32 %v1041, 0.044715
      %v1074 = vmul.f32 %v1042, 0.044715
      %v1075 = vmul.f32 %v1043, 0.044715
      %v1076 = vmul.f32 %v1044, 0.044715
      %v1077 = vmul.f32 %v1045, 0.044715
      %v1078 = vmul.f32 %v1046, 0.044715
      %v1079 = vmul.f32 %v1047, 0.044715
      %v1080 = vmul.f32 %v1048, 0.044715
      %v1081 = vmul.f32 %v1049, 0.044715
      %v1082 = vmul.f32 %v1050, 0.044715
      %v1083 = vmul.f32 %v1051, 0.044715
      %v1084 = vmul.f32 %v1052, 0.044715
      %v1085 = vadd.f32 %v957, %v1053
      %v1086 = vadd.f32 %v958, %v1054
      %v1087 = vadd.f32 %v959, %v1055
      %v1088 = vadd.f32 %v960, %v1056
      %v1089 = vadd.f32 %v961, %v1057
      %v1090 = vadd.f32 %v962, %v1058
      %v1091 = vadd.f32 %v963, %v1059
      %v1092 = vadd.f32 %v964, %v1060
      %v1093 = vadd.f32 %v965, %v1061
      %v1094 = vadd.f32 %v966, %v1062
      %v1095 = vadd.f32 %v967, %v1063
      %v1096 = vadd.f32 %v968, %v1064
      %v1097 = vadd.f32 %v969, %v1065
      %v1098 = vadd.f32 %v970, %v1066
      %v1099 = vadd.f32 %v971, %v1067
      %v1100 = vadd.f32 %v972, %v1068
      %v1101 = vadd.f32 %v973, %v1069
      %v1102 = vadd.f32 %v974, %v1070
      %v1103 = vadd.f32 %v975, %v1071
      %v1104 = vadd.f32 %v976, %v1072
      %v1105 = vadd.f32 %v977, %v1073
      %v1106 = vadd.f32 %v978, %v1074
      %v1107 = vadd.f32 %v979, %v1075
      %v1108 = vadd.f32 %v980, %v1076
      %v1109 = vadd.f32 %v981, %v1077
      %v1110 = vadd.f32 %v982, %v1078
      %v1111 = vadd.f32 %v983, %v1079
      %v1112 = vadd.f32 %v984, %v1080
      %v1113 = vadd.f32 %v985, %v1081
      %v1114 = vadd.f32 %v986, %v1082
      %v1115 = vadd.f32 %v987, %v1083
      %v1116 = vadd.f32 %v988, %v1084
      %v1117 = vmul.f32 %v1085, 0.7978846
      %v1118 = vmul.f32 %v1086, 0.7978846
      %v1119 = vmul.f32 %v1087, 0.7978846
      %v1120 = vmul.f32 %v1088, 0.7978846
      %v1121 = vmul.f32 %v1089, 0.7978846
      %v1122 = vmul.f32 %v1090, 0.7978846
      %v1123 = vmul.f32 %v1091, 0.7978846
      %v1124 = vmul.f32 %v1092, 0.7978846
      %v1125 = vmul.f32 %v1093, 0.7978846
      %v1126 = vmul.f32 %v1094, 0.7978846
      %v1127 = vmul.f32 %v1095, 0.7978846
      %v1128 = vmul.f32 %v1096, 0.7978846
      %v1129 = vmul.f32 %v1097, 0.7978846
      %v1130 = vmul.f32 %v1098, 0.7978846
      %v1131 = vmul.f32 %v1099, 0.7978846
      %v1132 = vmul.f32 %v1100, 0.7978846
      %v1133 = vmul.f32 %v1101, 0.7978846
      %v1134 = vmul.f32 %v1102, 0.7978846
      %v1135 = vmul.f32 %v1103, 0.7978846
      %v1136 = vmul.f32 %v1104, 0.7978846
      %v1137 = vmul.f32 %v1105, 0.7978846
      %v1138 = vmul.f32 %v1106, 0.7978846
      %v1139 = vmul.f32 %v1107, 0.7978846
      %v1140 = vmul.f32 %v1108, 0.7978846
      %v1141 = vmul.f32 %v1109, 0.7978846
      %v1142 = vmul.f32 %v1110, 0.7978846
      %v1143 = vmul.f32 %v1111, 0.7978846
      %v1144 = vmul.f32 %v1112, 0.7978846
      %v1145 = vmul.f32 %v1113, 0.7978846
      %v1146 = vmul.f32 %v1114, 0.7978846
      %v1147 = vmul.f32 %v1115, 0.7978846
      %v1148 = vmul.f32 %v1116, 0.7978846
      %v1149 = vtanh.pop %v1117
      %v1150 = vtanh.pop %v1118
      %v1151 = vtanh.pop %v1119
      %v1152 = vtanh.pop %v1120
      %v1153 = vtanh.pop %v1121
      %v1154 = vtanh.pop %v1122
      %v1155 = vtanh.pop %v1123
      %v1156 = vtanh.pop %v1124
      %v1157 = vtanh.pop %v1125
      %v1158 = vtanh.pop %v1126
      %v1159 = vtanh.pop %v1127
      %v1160 = vtanh.pop %v1128
      %v1161 = vtanh.pop %v1129
      %v1162 = vtanh.pop %v1130
      %v1163 = vtanh.pop %v1131
      %v1164 = vtanh.pop %v1132
      %v1165 = vtanh.pop %v1133
      %v1166 = vtanh.pop %v1134
      %v1167 = vtanh.pop %v1135
      %v1168 = vtanh.pop %v1136
      %v1169 = vtanh.pop %v1137
      %v1170 = vtanh.pop %v1138
      %v1171 = vtanh.pop %v1139
      %v1172 = vtanh.pop %v1140
      %v1173 = vtanh.pop %v1141
      %v1174 = vtanh.pop %v1142
      %v1175 = vtanh.pop %v1143
      %v1176 = vtanh.pop %v1144
      %v1177 = vtanh.pop %v1145
      %v1178 = vtanh.pop %v1146
      %v1179 = vtanh.pop %v1147
      %v1180 = vtanh.pop %v1148
      %v1181 = vadd.f32 %v1149, 1.0
      %v1182 = vadd.f32 %v1150, 1.0
      %v1183 = vadd.f32 %v1151, 1.0
      %v1184 = vadd.f32 %v1152, 1.0
      %v1185 = vadd.f32 %v1153, 1.0
      %v1186 = vadd.f32 %v1154, 1.0
      %v1187 = vadd.f32 %v1155, 1.0
      %v1188 = vadd.f32 %v1156, 1.0
      %v1189 = vadd.f32 %v1157, 1.0
      %v1190 = vadd.f32 %v1158, 1.0
      %v1191 = vadd.f32 %v1159, 1.0
      %v1192 = vadd.f32 %v1160, 1.0
      %v1193 = vadd.f32 %v1161, 1.0
      %v1194 = vadd.f32 %v1162, 1.0
      %v1195 = vadd.f32 %v1163, 1.0
      %v1196 = vadd.f32 %v1164, 1.0
      %v1197 = vadd.f32 %v1165, 1.0
      %v1198 = vadd.f32 %v1166, 1.0
      %v1199 = vadd.f32 %v1167, 1.0
      %v1200 = vadd.f32 %v1168, 1.0
      %v1201 = vadd.f32 %v1169, 1.0
      %v1202 = vadd.f32 %v1170, 1.0
      %v1203 = vadd.f32 %v1171, 1.0
      %v1204 = vadd.f32 %v1172, 1.0
      %v1205 = vadd.f32 %v1173, 1.0
      %v1206 = vadd.f32 %v1174, 1.0
      %v1207 = vadd.f32 %v1175, 1.0
      %v1208 = vadd.f32 %v1176, 1.0
      %v1209 = vadd.f32 %v1177, 1.0
      %v1210 = vadd.f32 %v1178, 1.0
      %v1211 = vadd.f32 %v1179, 1.0
      %v1212 = vadd.f32 %v1180, 1.0
      %v1213 = vmul.f32 %v1181, 0.5
      %v1214 = vmul.f32 %v1182, 0.5
      %v1215 = vmul.f32 %v1183, 0.5
      %v1216 = vmul.f32 %v1184, 0.5
      %v1217 = vmul.f32 %v1185, 0.5
      %v1218 = vmul.f32 %v1186, 0.5
      %v1219 = vmul.f32 %v1187, 0.5
      %v1220 = vmul.f32 %v1188, 0.5
      %v1221 = vmul.f32 %v1189, 0.5
      %v1222 = vmul.f32 %v1190, 0.5
      %v1223 = vmul.f32 %v1191, 0.5
      %v1224 = vmul.f32 %v1192, 0.5
      %v1225 = vmul.f32 %v1193, 0.5
      %v1226 = vmul.f32 %v1194, 0.5
      %v1227 = vmul.f32 %v1195, 0.5
      %v1228 = vmul.f32 %v1196, 0.5
      %v1229 = vmul.f32 %v1197, 0.5
      %v1230 = vmul.f32 %v1198, 0.5
      %v1231 = vmul.f32 %v1199, 0.5
      %v1232 = vmul.f32 %v1200, 0.5
      %v1233 = vmul.f32 %v1201, 0.5
      %v1234 = vmul.f32 %v1202, 0.5
      %v1235 = vmul.f32 %v1203, 0.5
      %v1236 = vmul.f32 %v1204, 0.5
      %v1237 = vmul.f32 %v1205, 0.5
      %v1238 = vmul.f32 %v1206, 0.5
      %v1239 = vmul.f32 %v1207, 0.5
      %v1240 = vmul.f32 %v1208, 0.5
      %v1241 = vmul.f32 %v1209, 0.5
      %v1242 = vmul.f32 %v1210, 0.5
      %v1243 = vmul.f32 %v1211, 0.5
      %v1244 = vmul.f32 %v1212, 0.5
      %v1245 = vmul.f32 %v957, %v1213
      %v1246 = vmul.f32 %v958, %v1214
      %v1247 = vmul.f32 %v959, %v1215
      %v1248 = vmul.f32 %v960, %v1216
      %v1249 = vmul.f32 %v961, %v1217
      %v1250 = vmul.f32 %v962, %v1218
      %v1251 = vmul.f32 %v963, %v1219
      %v1252 = vmul.f32 %v964, %v1220
      %v1253 = vmul.f32 %v965, %v1221
      %v1254 = vmul.f32 %v966, %v1222
      %v1255 = vmul.f32 %v967, %v1223
      %v1256 = vmul.f32 %v968, %v1224
      %v1257 = vmul.f32 %v969, %v1225
      %v1258 = vmul.f32 %v970, %v1226
      %v1259 = vmul.f32 %v971, %v1227
      %v1260 = vmul.f32 %v972, %v1228
      %v1261 = vmul.f32 %v973, %v1229
      %v1262 = vmul.f32 %v974, %v1230
      %v1263 = vmul.f32 %v975, %v1231
      %v1264 = vmul.f32 %v976, %v1232
      %v1265 = vmul.f32 %v977, %v1233
      %v1266 = vmul.f32 %v978, %v1234
      %v1267 = vmul.f32 %v979, %v1235
      %v1268 = vmul.f32 %v980, %v1236
      %v1269 = vmul.f32 %v981, %v1237
      %v1270 = vmul.f32 %v982, %v1238
      %v1271 = vmul.f32 %v983, %v1239
      %v1272 = vmul.f32 %v984, %v1240
      %v1273 = vmul.f32 %v985, %v1241
      %v1274 = vmul.f32 %v986, %v1242
      %v1275 = vmul.f32 %v987, %v1243
      %v1276 = vmul.f32 %v988, %v1244
      %1278 = vset.pattern.permute.xlu0 0
      %1279 = vperm.xlu0 %1278, %v509
      %v1280 = vpop.permute.xlu0 %1279
      %1283 = vset.pattern.permute.xlu0 0
      %1284 = vperm.xlu0 %1283, %v510
      %v1285 = vpop.permute.xlu0 %1284
      %1288 = vset.pattern.permute.xlu0 0
      %1289 = vperm.xlu0 %1288, %v511
      %v1290 = vpop.permute.xlu0 %1289
      %1293 = vset.pattern.permute.xlu0 0
      %1294 = vperm.xlu0 %1293, %v512
      %v1295 = vpop.permute.xlu0 %1294
      %1298 = vset.pattern.permute.xlu0 0
      %1299 = vperm.xlu0 %1298, %v513
      %v1300 = vpop.permute.xlu0 %1299
      %1303 = vset.pattern.permute.xlu0 0
      %1304 = vperm.xlu0 %1303, %v514
      %v1305 = vpop.permute.xlu0 %1304
      %1308 = vset.pattern.permute.xlu0 0
      %1309 = vperm.xlu0 %1308, %v515
      %v1310 = vpop.permute.xlu0 %1309
      %1313 = vset.pattern.permute.xlu0 0
      %1314 = vperm.xlu0 %1313, %v516
      %v1315 = vpop.permute.xlu0 %1314
      %1318 = vset.pattern.permute.xlu0 0
      %1319 = vperm.xlu0 %1318, %v517
      %v1320 = vpop.permute.xlu0 %1319
      %1323 = vset.pattern.permute.xlu0 0
      %1324 = vperm.xlu0 %1323, %v518
      %v1325 = vpop.permute.xlu0 %1324
      %1328 = vset.pattern.permute.xlu0 0
      %1329 = vperm.xlu0 %1328, %v519
      %v1330 = vpop.permute.xlu0 %1329
      %1333 = vset.pattern.permute.xlu0 0
      %1334 = vperm.xlu0 %1333, %v520
      %v1335 = vpop.permute.xlu0 %1334
      %1338 = vset.pattern.permute.xlu0 0
      %1339 = vperm.xlu0 %1338, %v521
      %v1340 = vpop.permute.xlu0 %1339
      %1343 = vset.pattern.permute.xlu0 0
      %1344 = vperm.xlu0 %1343, %v522
      %v1345 = vpop.permute.xlu0 %1344
      %1348 = vset.pattern.permute.xlu0 0
      %1349 = vperm.xlu0 %1348, %v523
      %v1350 = vpop.permute.xlu0 %1349
      %1353 = vset.pattern.permute.xlu0 0
      %1354 = vperm.xlu0 %1353, %v524
      %v1355 = vpop.permute.xlu0 %1354
      %1358 = vset.pattern.permute.xlu0 0
      %1359 = vperm.xlu0 %1358, %v525
      %v1360 = vpop.permute.xlu0 %1359
      %1363 = vset.pattern.permute.xlu0 0
      %1364 = vperm.xlu0 %1363, %v526
      %v1365 = vpop.permute.xlu0 %1364
      %1368 = vset.pattern.permute.xlu0 0
      %1369 = vperm.xlu0 %1368, %v527
      %v1370 = vpop.permute.xlu0 %1369
      %1373 = vset.pattern.permute.xlu0 0
      %1374 = vperm.xlu0 %1373, %v528
      %v1375 = vpop.permute.xlu0 %1374
      %1378 = vset.pattern.permute.xlu0 0
      %1379 = vperm.xlu0 %1378, %v529
      %v1380 = vpop.permute.xlu0 %1379
      %1383 = vset.pattern.permute.xlu0 0
      %1384 = vperm.xlu0 %1383, %v530
      %v1385 = vpop.permute.xlu0 %1384
      %1388 = vset.pattern.permute.xlu0 0
      %1389 = vperm.xlu0 %1388, %v531
      %v1390 = vpop.permute.xlu0 %1389
      %1393 = vset.pattern.permute.xlu0 0
      %1394 = vperm.xlu0 %1393, %v532
      %v1395 = vpop.permute.xlu0 %1394
      %1398 = vset.pattern.permute.xlu0 0
      %1399 = vperm.xlu0 %1398, %v533
      %v1400 = vpop.permute.xlu0 %1399
      %1403 = vset.pattern.permute.xlu0 0
      %1404 = vperm.xlu0 %1403, %v534
      %v1405 = vpop.permute.xlu0 %1404
      %1408 = vset.pattern.permute.xlu0 0
      %1409 = vperm.xlu0 %1408, %v535
      %v1410 = vpop.permute.xlu0 %1409
      %1413 = vset.pattern.permute.xlu0 0
      %1414 = vperm.xlu0 %1413, %v536
      %v1415 = vpop.permute.xlu0 %1414
      %1418 = vset.pattern.permute.xlu0 0
      %1419 = vperm.xlu0 %1418, %v537
      %v1420 = vpop.permute.xlu0 %1419
      %1423 = vset.pattern.permute.xlu0 0
      %1424 = vperm.xlu0 %1423, %v538
      %v1425 = vpop.permute.xlu0 %1424
      %1428 = vset.pattern.permute.xlu0 0
      %1429 = vperm.xlu0 %1428, %v539
      %v1430 = vpop.permute.xlu0 %1429
      %1433 = vset.pattern.permute.xlu0 0
      %1434 = vperm.xlu0 %1433, %v540
      %v1435 = vpop.permute.xlu0 %1434
      %v1437 = vperm.slane %v541, 0
      %v1438 = vperm.slane %v542, 0
      %v1439 = vperm.slane %v543, 0
      %v1440 = vperm.slane %v544, 0
      %v1441 = vperm.slane %v545, 0
      %v1442 = vperm.slane %v546, 0
      %v1443 = vperm.slane %v547, 0
      %v1444 = vperm.slane %v548, 0
      %v1445 = vperm.slane %v549, 0
      %v1446 = vperm.slane %v550, 0
      %v1447 = vperm.slane %v551, 0
      %v1448 = vperm.slane %v552, 0
      %v1449 = vperm.slane %v553, 0
      %v1450 = vperm.slane %v554, 0
      %v1451 = vperm.slane %v555, 0
      %v1452 = vperm.slane %v556, 0
      %v1453 = vsub.f32 %v1280, %v1437
      %v1454 = vsub.f32 %v1285, %v1437
      %v1455 = vsub.f32 %v1290, %v1438
      %v1456 = vsub.f32 %v1295, %v1438
      %v1457 = vsub.f32 %v1300, %v1439
      %v1458 = vsub.f32 %v1305, %v1439
      %v1459 = vsub.f32 %v1310, %v1440
      %v1460 = vsub.f32 %v1315, %v1440
      %v1461 = vsub.f32 %v1320, %v1441
      %v1462 = vsub.f32 %v1325, %v1441
      %v1463 = vsub.f32 %v1330, %v1442
      %v1464 = vsub.f32 %v1335, %v1442
      %v1465 = vsub.f32 %v1340, %v1443
      %v1466 = vsub.f32 %v1345, %v1443
      %v1467 = vsub.f32 %v1350, %v1444
      %v1468 = vsub.f32 %v1355, %v1444
      %v1469 = vsub.f32 %v1360, %v1445
      %v1470 = vsub.f32 %v1365, %v1445
      %v1471 = vsub.f32 %v1370, %v1446
      %v1472 = vsub.f32 %v1375, %v1446
      %v1473 = vsub.f32 %v1380, %v1447
      %v1474 = vsub.f32 %v1385, %v1447
      %v1475 = vsub.f32 %v1390, %v1448
      %v1476 = vsub.f32 %v1395, %v1448
      %v1477 = vsub.f32 %v1400, %v1449
      %v1478 = vsub.f32 %v1405, %v1449
      %v1479 = vsub.f32 %v1410, %v1450
      %v1480 = vsub.f32 %v1415, %v1450
      %v1481 = vsub.f32 %v1420, %v1451
      %v1482 = vsub.f32 %v1425, %v1451
      %v1483 = vsub.f32 %v1430, %v1452
      %v1484 = vsub.f32 %v1435, %v1452
      %v1485 = vmul.f32 %v1453, %v1453
      %v1486 = vmul.f32 %v1454, %v1454
      %v1487 = vmul.f32 %v1455, %v1455
      %v1488 = vmul.f32 %v1456, %v1456
      %v1489 = vmul.f32 %v1457, %v1457
      %v1490 = vmul.f32 %v1458, %v1458
      %v1491 = vmul.f32 %v1459, %v1459
      %v1492 = vmul.f32 %v1460, %v1460
      %v1493 = vmul.f32 %v1461, %v1461
      %v1494 = vmul.f32 %v1462, %v1462
      %v1495 = vmul.f32 %v1463, %v1463
      %v1496 = vmul.f32 %v1464, %v1464
      %v1497 = vmul.f32 %v1465, %v1465
      %v1498 = vmul.f32 %v1466, %v1466
      %v1499 = vmul.f32 %v1467, %v1467
      %v1500 = vmul.f32 %v1468, %v1468
      %v1501 = vmul.f32 %v1469, %v1469
      %v1502 = vmul.f32 %v1470, %v1470
      %v1503 = vmul.f32 %v1471, %v1471
      %v1504 = vmul.f32 %v1472, %v1472
      %v1505 = vmul.f32 %v1473, %v1473
      %v1506 = vmul.f32 %v1474, %v1474
      %v1507 = vmul.f32 %v1475, %v1475
      %v1508 = vmul.f32 %v1476, %v1476
      %v1509 = vmul.f32 %v1477, %v1477
      %v1510 = vmul.f32 %v1478, %v1478
      %v1511 = vmul.f32 %v1479, %v1479
      %v1512 = vmul.f32 %v1480, %v1480
      %v1513 = vmul.f32 %v1481, %v1481
      %v1514 = vmul.f32 %v1482, %v1482
      %v1515 = vmul.f32 %v1483, %v1483
      %v1516 = vmul.f32 %v1484, %v1484
      %v1517 = vadd.f32 %v1485, 0.0
      %v1518 = vadd.f32 %v1486, 0.0
      %v1519 = vadd.f32 %v1487, 0.0
      %v1520 = vadd.f32 %v1488, 0.0
      %v1521 = vadd.f32 %v1489, 0.0
      %v1522 = vadd.f32 %v1490, 0.0
      %v1523 = vadd.f32 %v1491, 0.0
      %v1524 = vadd.f32 %v1492, 0.0
      %v1525 = vadd.f32 %v1493, 0.0
      %v1526 = vadd.f32 %v1494, 0.0
      %v1527 = vadd.f32 %v1495, 0.0
      %v1528 = vadd.f32 %v1496, 0.0
      %v1529 = vadd.f32 %v1497, 0.0
      %v1530 = vadd.f32 %v1498, 0.0
      %v1531 = vadd.f32 %v1499, 0.0
      %v1532 = vadd.f32 %v1500, 0.0
      %v1533 = vadd.f32 %v1501, 0.0
      %v1534 = vadd.f32 %v1502, 0.0
      %v1535 = vadd.f32 %v1503, 0.0
      %v1536 = vadd.f32 %v1504, 0.0
      %v1537 = vadd.f32 %v1505, 0.0
      %v1538 = vadd.f32 %v1506, 0.0
      %v1539 = vadd.f32 %v1507, 0.0
      %v1540 = vadd.f32 %v1508, 0.0
      %v1541 = vadd.f32 %v1509, 0.0
      %v1542 = vadd.f32 %v1510, 0.0
      %v1543 = vadd.f32 %v1511, 0.0
      %v1544 = vadd.f32 %v1512, 0.0
      %v1545 = vadd.f32 %v1513, 0.0
      %v1546 = vadd.f32 %v1514, 0.0
      %v1547 = vadd.f32 %v1515, 0.0
      %v1548 = vadd.f32 %v1516, 0.0
      %1549 = vset.pattern.permute.xlu0 1
      %1550 = vperm.xlu0 %1549, %v509
      %v1551 = vpop.permute.xlu0 %1550
      %1553 = vset.pattern.permute.xlu0 1
      %1554 = vperm.xlu0 %1553, %v510
      %v1555 = vpop.permute.xlu0 %1554
      %1557 = vset.pattern.permute.xlu0 1
      %1558 = vperm.xlu0 %1557, %v511
      %v1559 = vpop.permute.xlu0 %1558
      %1561 = vset.pattern.permute.xlu0 1
      %1562 = vperm.xlu0 %1561, %v512
      %v1563 = vpop.permute.xlu0 %1562
      %1565 = vset.pattern.permute.xlu0 1
      %1566 = vperm.xlu0 %1565, %v513
      %v1567 = vpop.permute.xlu0 %1566
      %1569 = vset.pattern.permute.xlu0 1
      %1570 = vperm.xlu0 %1569, %v514
      %v1571 = vpop.permute.xlu0 %1570
      %1573 = vset.pattern.permute.xlu0 1
      %1574 = vperm.xlu0 %1573, %v515
      %v1575 = vpop.permute.xlu0 %1574
      %1577 = vset.pattern.permute.xlu0 1
      %1578 = vperm.xlu0 %1577, %v516
      %v1579 = vpop.permute.xlu0 %1578
      %1581 = vset.pattern.permute.xlu0 1
      %1582 = vperm.xlu0 %1581, %v517
      %v1583 = vpop.permute.xlu0 %1582
      %1585 = vset.pattern.permute.xlu0 1
      %1586 = vperm.xlu0 %1585, %v518
      %v1587 = vpop.permute.xlu0 %1586
      %1589 = vset.pattern.permute.xlu0 1
      %1590 = vperm.xlu0 %1589, %v519
      %v1591 = vpop.permute.xlu0 %1590
      %1593 = vset.pattern.permute.xlu0 1
      %1594 = vperm.xlu0 %1593, %v520
      %v1595 = vpop.permute.xlu0 %1594
      %1597 = vset.pattern.permute.xlu0 1
      %1598 = vperm.xlu0 %1597, %v521
      %v1599 = vpop.permute.xlu0 %1598
      %1601 = vset.pattern.permute.xlu0 1
      %1602 = vperm.xlu0 %1601, %v522
      %v1603 = vpop.permute.xlu0 %1602
      %1605 = vset.pattern.permute.xlu0 1
      %1606 = vperm.xlu0 %1605, %v523
      %v1607 = vpop.permute.xlu0 %1606
      %1609 = vset.pattern.permute.xlu0 1
      %1610 = vperm.xlu0 %1609, %v524
      %v1611 = vpop.permute.xlu0 %1610
      %1613 = vset.pattern.permute.xlu0 1
      %1614 = vperm.xlu0 %1613, %v525
      %v1615 = vpop.permute.xlu0 %1614
      %1617 = vset.pattern.permute.xlu0 1
      %1618 = vperm.xlu0 %1617, %v526
      %v1619 = vpop.permute.xlu0 %1618
      %1621 = vset.pattern.permute.xlu0 1
      %1622 = vperm.xlu0 %1621, %v527
      %v1623 = vpop.permute.xlu0 %1622
      %1625 = vset.pattern.permute.xlu0 1
      %1626 = vperm.xlu0 %1625, %v528
      %v1627 = vpop.permute.xlu0 %1626
      %1629 = vset.pattern.permute.xlu0 1
      %1630 = vperm.xlu0 %1629, %v529
      %v1631 = vpop.permute.xlu0 %1630
      %1633 = vset.pattern.permute.xlu0 1
      %1634 = vperm.xlu0 %1633, %v530
      %v1635 = vpop.permute.xlu0 %1634
      %1637 = vset.pattern.permute.xlu0 1
      %1638 = vperm.xlu0 %1637, %v531
      %v1639 = vpop.permute.xlu0 %1638
      %1641 = vset.pattern.permute.xlu0 1
      %1642 = vperm.xlu0 %1641, %v532
      %v1643 = vpop.permute.xlu0 %1642
      %1645 = vset.pattern.permute.xlu0 1
      %1646 = vperm.xlu0 %1645, %v533
      %v1647 = vpop.permute.xlu0 %1646
      %1649 = vset.pattern.permute.xlu0 1
      %1650 = vperm.xlu0 %1649, %v534
      %v1651 = vpop.permute.xlu0 %1650
      %1653 = vset.pattern.permute.xlu0 1
      %1654 = vperm.xlu0 %1653, %v535
      %v1655 = vpop.permute.xlu0 %1654
      %1657 = vset.pattern.permute.xlu0 1
      %1658 = vperm.xlu0 %1657, %v536
      %v1659 = vpop.permute.xlu0 %1658
      %1661 = vset.pattern.permute.xlu0 1
      %1662 = vperm.xlu0 %1661, %v537
      %v1663 = vpop.permute.xlu0 %1662
      %1665 = vset.pattern.permute.xlu0 1
      %1666 = vperm.xlu0 %1665, %v538
      %v1667 = vpop.permute.xlu0 %1666
      %1669 = vset.pattern.permute.xlu0 1
      %1670 = vperm.xlu0 %1669, %v539
      %v1671 = vpop.permute.xlu0 %1670
      %1673 = vset.pattern.permute.xlu0 1
      %1674 = vperm.xlu0 %1673, %v540
      %v1675 = vpop.permute.xlu0 %1674
      %v1677 = vperm.slane %v541, 1
      %v1678 = vperm.slane %v542, 1
      %v1679 = vperm.slane %v543, 1
      %v1680 = vperm.slane %v544, 1
      %v1681 = vperm.slane %v545, 1
      %v1682 = vperm.slane %v546, 1
      %v1683 = vperm.slane %v547, 1
      %v1684 = vperm.slane %v548, 1
      %v1685 = vperm.slane %v549, 1
      %v1686 = vperm.slane %v550, 1
      %v1687 = vperm.slane %v551, 1
      %v1688 = vperm.slane %v552, 1
      %v1689 = vperm.slane %v553, 1
      %v1690 = vperm.slane %v554, 1
      %v1691 = vperm.slane %v555, 1
      %v1692 = vperm.slane %v556, 1
      %v1693 = vsub.f32 %v1551, %v1677
      %v1694 = vsub.f32 %v1555, %v1677
      %v1695 = vsub.f32 %v1559, %v1678
      %v1696 = vsub.f32 %v1563, %v1678
      %v1697 = vsub.f32 %v1567, %v1679
      %v1698 = vsub.f32 %v1571, %v1679
      %v1699 = vsub.f32 %v1575, %v1680
      %v1700 = vsub.f32 %v1579, %v1680
      %v1701 = vsub.f32 %v1583, %v1681
      %v1702 = vsub.f32 %v1587, %v1681
      %v1703 = vsub.f32 %v1591, %v1682
      %v1704 = vsub.f32 %v1595, %v1682
      %v1705 = vsub.f32 %v1599, %v1683
      %v1706 = vsub.f32 %v1603, %v1683
      %v1707 = vsub.f32 %v1607, %v1684
      %v1708 = vsub.f32 %v1611, %v1684
      %v1709 = vsub.f32 %v1615, %v1685
      %v1710 = vsub.f32 %v1619, %v1685
      %v1711 = vsub.f32 %v1623, %v1686
      %v1712 = vsub.f32 %v1627, %v1686
      %v1713 = vsub.f32 %v1631, %v1687
      %v1714 = vsub.f32 %v1635, %v1687
      %v1715 = vsub.f32 %v1639, %v1688
      %v1716 = vsub.f32 %v1643, %v1688
      %v1717 = vsub.f32 %v1647, %v1689
      %v1718 = vsub.f32 %v1651, %v1689
      %v1719 = vsub.f32 %v1655, %v1690
      %v1720 = vsub.f32 %v1659, %v1690
      %v1721 = vsub.f32 %v1663, %v1691
      %v1722 = vsub.f32 %v1667, %v1691
      %v1723 = vsub.f32 %v1671, %v1692
      %v1724 = vsub.f32 %v1675, %v1692
      %v1725 = vmul.f32 %v1693, %v1693
      %v1726 = vmul.f32 %v1694, %v1694
      %v1727 = vmul.f32 %v1695, %v1695
      %v1728 = vmul.f32 %v1696, %v1696
      %v1729 = vmul.f32 %v1697, %v1697
      %v1730 = vmul.f32 %v1698, %v1698
      %v1731 = vmul.f32 %v1699, %v1699
      %v1732 = vmul.f32 %v1700, %v1700
      %v1733 = vmul.f32 %v1701, %v1701
      %v1734 = vmul.f32 %v1702, %v1702
      %v1735 = vmul.f32 %v1703, %v1703
      %v1736 = vmul.f32 %v1704, %v1704
      %v1737 = vmul.f32 %v1705, %v1705
      %v1738 = vmul.f32 %v1706, %v1706
      %v1739 = vmul.f32 %v1707, %v1707
      %v1740 = vmul.f32 %v1708, %v1708
      %v1741 = vmul.f32 %v1709, %v1709
      %v1742 = vmul.f32 %v1710, %v1710
      %v1743 = vmul.f32 %v1711, %v1711
      %v1744 = vmul.f32 %v1712, %v1712
      %v1745 = vmul.f32 %v1713, %v1713
      %v1746 = vmul.f32 %v1714, %v1714
      %v1747 = vmul.f32 %v1715, %v1715
      %v1748 = vmul.f32 %v1716, %v1716
      %v1749 = vmul.f32 %v1717, %v1717
      %v1750 = vmul.f32 %v1718, %v1718
      %v1751 = vmul.f32 %v1719, %v1719
      %v1752 = vmul.f32 %v1720, %v1720
      %v1753 = vmul.f32 %v1721, %v1721
      %v1754 = vmul.f32 %v1722, %v1722
      %v1755 = vmul.f32 %v1723, %v1723
      %v1756 = vmul.f32 %v1724, %v1724
      %v1757 = vadd.f32 %v1517, %v1725
      %v1758 = vadd.f32 %v1518, %v1726
      %v1759 = vadd.f32 %v1519, %v1727
      %v1760 = vadd.f32 %v1520, %v1728
      %v1761 = vadd.f32 %v1521, %v1729
      %v1762 = vadd.f32 %v1522, %v1730
      %v1763 = vadd.f32 %v1523, %v1731
      %v1764 = vadd.f32 %v1524, %v1732
      %v1765 = vadd.f32 %v1525, %v1733
      %v1766 = vadd.f32 %v1526, %v1734
      %v1767 = vadd.f32 %v1527, %v1735
      %v1768 = vadd.f32 %v1528, %v1736
      %v1769 = vadd.f32 %v1529, %v1737
      %v1770 = vadd.f32 %v1530, %v1738
      %v1771 = vadd.f32 %v1531, %v1739
      %v1772 = vadd.f32 %v1532, %v1740
      %v1773 = vadd.f32 %v1533, %v1741
      %v1774 = vadd.f32 %v1534, %v1742
      %v1775 = vadd.f32 %v1535, %v1743
      %v1776 = vadd.f32 %v1536, %v1744
      %v1777 = vadd.f32 %v1537, %v1745
      %v1778 = vadd.f32 %v1538, %v1746
      %v1779 = vadd.f32 %v1539, %v1747
      %v1780 = vadd.f32 %v1540, %v1748
      %v1781 = vadd.f32 %v1541, %v1749
      %v1782 = vadd.f32 %v1542, %v1750
      %v1783 = vadd.f32 %v1543, %v1751
      %v1784 = vadd.f32 %v1544, %v1752
      %v1785 = vadd.f32 %v1545, %v1753
      %v1786 = vadd.f32 %v1546, %v1754
      %v1787 = vadd.f32 %v1547, %v1755
      %v1788 = vadd.f32 %v1548, %v1756
      %1789 = vset.pattern.permute.xlu0 2
      %1790 = vperm.xlu0 %1789, %v509
      %v1791 = vpop.permute.xlu0 %1790
      %1793 = vset.pattern.permute.xlu0 2
      %1794 = vperm.xlu0 %1793, %v510
      %v1795 = vpop.permute.xlu0 %1794
      %1797 = vset.pattern.permute.xlu0 2
      %1798 = vperm.xlu0 %1797, %v511
      %v1799 = vpop.permute.xlu0 %1798
      %1801 = vset.pattern.permute.xlu0 2
      %1802 = vperm.xlu0 %1801, %v512
      %v1803 = vpop.permute.xlu0 %1802
      %1805 = vset.pattern.permute.xlu0 2
      %1806 = vperm.xlu0 %1805, %v513
      %v1807 = vpop.permute.xlu0 %1806
      %1809 = vset.pattern.permute.xlu0 2
      %1810 = vperm.xlu0 %1809, %v514
      %v1811 = vpop.permute.xlu0 %1810
      %1813 = vset.pattern.permute.xlu0 2
      %1814 = vperm.xlu0 %1813, %v515
      %v1815 = vpop.permute.xlu0 %1814
      %1817 = vset.pattern.permute.xlu0 2
      %1818 = vperm.xlu0 %1817, %v516
      %v1819 = vpop.permute.xlu0 %1818
      %1821 = vset.pattern.permute.xlu0 2
      %1822 = vperm.xlu0 %1821, %v517
      %v1823 = vpop.permute.xlu0 %1822
      %1825 = vset.pattern.permute.xlu0 2
      %1826 = vperm.xlu0 %1825, %v518
      %v1827 = vpop.permute.xlu0 %1826
      %1829 = vset.pattern.permute.xlu0 2
      %1830 = vperm.xlu0 %1829, %v519
      %v1831 = vpop.permute.xlu0 %1830
      %1833 = vset.pattern.permute.xlu0 2
      %1834 = vperm.xlu0 %1833, %v520
      %v1835 = vpop.permute.xlu0 %1834
      %1837 = vset.pattern.permute.xlu0 2
      %1838 = vperm.xlu0 %1837, %v521
      %v1839 = vpop.permute.xlu0 %1838
      %1841 = vset.pattern.permute.xlu0 2
      %1842 = vperm.xlu0 %1841, %v522
      %v1843 = vpop.permute.xlu0 %1842
      %1845 = vset.pattern.permute.xlu0 2
      %1846 = vperm.xlu0 %1845, %v523
      %v1847 = vpop.permute.xlu0 %1846
      %1849 = vset.pattern.permute.xlu0 2
      %1850 = vperm.xlu0 %1849, %v524
      %v1851 = vpop.permute.xlu0 %1850
      %1853 = vset.pattern.permute.xlu0 2
      %1854 = vperm.xlu0 %1853, %v525
      %v1855 = vpop.permute.xlu0 %1854
      %1857 = vset.pattern.permute.xlu0 2
      %1858 = vperm.xlu0 %1857, %v526
      %v1859 = vpop.permute.xlu0 %1858
      %1861 = vset.pattern.permute.xlu0 2
      %1862 = vperm.xlu0 %1861, %v527
      %v1863 = vpop.permute.xlu0 %1862
      %1865 = vset.pattern.permute.xlu0 2
      %1866 = vperm.xlu0 %1865, %v528
      %v1867 = vpop.permute.xlu0 %1866
      %1869 = vset.pattern.permute.xlu0 2
      %1870 = vperm.xlu0 %1869, %v529
      %v1871 = vpop.permute.xlu0 %1870
      %1873 = vset.pattern.permute.xlu0 2
      %1874 = vperm.xlu0 %1873, %v530
      %v1875 = vpop.permute.xlu0 %1874
      %1877 = vset.pattern.permute.xlu0 2
      %1878 = vperm.xlu0 %1877, %v531
      %v1879 = vpop.permute.xlu0 %1878
      %1881 = vset.pattern.permute.xlu0 2
      %1882 = vperm.xlu0 %1881, %v532
      %v1883 = vpop.permute.xlu0 %1882
      %1885 = vset.pattern.permute.xlu0 2
      %1886 = vperm.xlu0 %1885, %v533
      %v1887 = vpop.permute.xlu0 %1886
      %1889 = vset.pattern.permute.xlu0 2
      %1890 = vperm.xlu0 %1889, %v534
      %v1891 = vpop.permute.xlu0 %1890
      %1893 = vset.pattern.permute.xlu0 2
      %1894 = vperm.xlu0 %1893, %v535
      %v1895 = vpop.permute.xlu0 %1894
      %1897 = vset.pattern.permute.xlu0 2
      %1898 = vperm.xlu0 %1897, %v536
      %v1899 = vpop.permute.xlu0 %1898
      %1901 = vset.pattern.permute.xlu0 2
      %1902 = vperm.xlu0 %1901, %v537
      %v1903 = vpop.permute.xlu0 %1902
      %1905 = vset.pattern.permute.xlu0 2
      %1906 = vperm.xlu0 %1905, %v538
      %v1907 = vpop.permute.xlu0 %1906
      %1909 = vset.pattern.permute.xlu0 2
      %1910 = vperm.xlu0 %1909, %v539
      %v1911 = vpop.permute.xlu0 %1910
      %1913 = vset.pattern.permute.xlu0 2
      %1914 = vperm.xlu0 %1913, %v540
      %v1915 = vpop.permute.xlu0 %1914
      %v1917 = vperm.slane %v541, 2
      %v1918 = vperm.slane %v542, 2
      %v1919 = vperm.slane %v543, 2
      %v1920 = vperm.slane %v544, 2
      %v1921 = vperm.slane %v545, 2
      %v1922 = vperm.slane %v546, 2
      %v1923 = vperm.slane %v547, 2
      %v1924 = vperm.slane %v548, 2
      %v1925 = vperm.slane %v549, 2
      %v1926 = vperm.slane %v550, 2
      %v1927 = vperm.slane %v551, 2
      %v1928 = vperm.slane %v552, 2
      %v1929 = vperm.slane %v553, 2
      %v1930 = vperm.slane %v554, 2
      %v1931 = vperm.slane %v555, 2
      %v1932 = vperm.slane %v556, 2
      %v1933 = vsub.f32 %v1791, %v1917
      %v1934 = vsub.f32 %v1795, %v1917
      %v1935 = vsub.f32 %v1799, %v1918
      %v1936 = vsub.f32 %v1803, %v1918
      %v1937 = vsub.f32 %v1807, %v1919
      %v1938 = vsub.f32 %v1811, %v1919
      %v1939 = vsub.f32 %v1815, %v1920
      %v1940 = vsub.f32 %v1819, %v1920
      %v1941 = vsub.f32 %v1823, %v1921
      %v1942 = vsub.f32 %v1827, %v1921
      %v1943 = vsub.f32 %v1831, %v1922
      %v1944 = vsub.f32 %v1835, %v1922
      %v1945 = vsub.f32 %v1839, %v1923
      %v1946 = vsub.f32 %v1843, %v1923
      %v1947 = vsub.f32 %v1847, %v1924
      %v1948 = vsub.f32 %v1851, %v1924
      %v1949 = vsub.f32 %v1855, %v1925
      %v1950 = vsub.f32 %v1859, %v1925
      %v1951 = vsub.f32 %v1863, %v1926
      %v1952 = vsub.f32 %v1867, %v1926
      %v1953 = vsub.f32 %v1871, %v1927
      %v1954 = vsub.f32 %v1875, %v1927
      %v1955 = vsub.f32 %v1879, %v1928
      %v1956 = vsub.f32 %v1883, %v1928
      %v1957 = vsub.f32 %v1887, %v1929
      %v1958 = vsub.f32 %v1891, %v1929
      %v1959 = vsub.f32 %v1895, %v1930
      %v1960 = vsub.f32 %v1899, %v1930
      %v1961 = vsub.f32 %v1903, %v1931
      %v1962 = vsub.f32 %v1907, %v1931
      %v1963 = vsub.f32 %v1911, %v1932
      %v1964 = vsub.f32 %v1915, %v1932
      %v1965 = vmul.f32 %v1933, %v1933
      %v1966 = vmul.f32 %v1934, %v1934
      %v1967 = vmul.f32 %v1935, %v1935
      %v1968 = vmul.f32 %v1936, %v1936
      %v1969 = vmul.f32 %v1937, %v1937
      %v1970 = vmul.f32 %v1938, %v1938
      %v1971 = vmul.f32 %v1939, %v1939
      %v1972 = vmul.f32 %v1940, %v1940
      %v1973 = vmul.f32 %v1941, %v1941
      %v1974 = vmul.f32 %v1942, %v1942
      %v1975 = vmul.f32 %v1943, %v1943
      %v1976 = vmul.f32 %v1944, %v1944
      %v1977 = vmul.f32 %v1945, %v1945
      %v1978 = vmul.f32 %v1946, %v1946
      %v1979 = vmul.f32 %v1947, %v1947
      %v1980 = vmul.f32 %v1948, %v1948
      %v1981 = vmul.f32 %v1949, %v1949
      %v1982 = vmul.f32 %v1950, %v1950
      %v1983 = vmul.f32 %v1951, %v1951
      %v1984 = vmul.f32 %v1952, %v1952
      %v1985 = vmul.f32 %v1953, %v1953
      %v1986 = vmul.f32 %v1954, %v1954
      %v1987 = vmul.f32 %v1955, %v1955
      %v1988 = vmul.f32 %v1956, %v1956
      %v1989 = vmul.f32 %v1957, %v1957
      %v1990 = vmul.f32 %v1958, %v1958
      %v1991 = vmul.f32 %v1959, %v1959
      %v1992 = vmul.f32 %v1960, %v1960
      %v1993 = vmul.f32 %v1961, %v1961
      %v1994 = vmul.f32 %v1962, %v1962
      %v1995 = vmul.f32 %v1963, %v1963
      %v1996 = vmul.f32 %v1964, %v1964
      %v1997 = vadd.f32 %v1757, %v1965
      %v1998 = vadd.f32 %v1758, %v1966
      %v1999 = vadd.f32 %v1759, %v1967
      %v2000 = vadd.f32 %v1760, %v1968
      %v2001 = vadd.f32 %v1761, %v1969
      %v2002 = vadd.f32 %v1762, %v1970
      %v2003 = vadd.f32 %v1763, %v1971
      %v2004 = vadd.f32 %v1764, %v1972
      %v2005 = vadd.f32 %v1765, %v1973
      %v2006 = vadd.f32 %v1766, %v1974
      %v2007 = vadd.f32 %v1767, %v1975
      %v2008 = vadd.f32 %v1768, %v1976
      %v2009 = vadd.f32 %v1769, %v1977
      %v2010 = vadd.f32 %v1770, %v1978
      %v2011 = vadd.f32 %v1771, %v1979
      %v2012 = vadd.f32 %v1772, %v1980
      %v2013 = vadd.f32 %v1773, %v1981
      %v2014 = vadd.f32 %v1774, %v1982
      %v2015 = vadd.f32 %v1775, %v1983
      %v2016 = vadd.f32 %v1776, %v1984
      %v2017 = vadd.f32 %v1777, %v1985
      %v2018 = vadd.f32 %v1778, %v1986
      %v2019 = vadd.f32 %v1779, %v1987
      %v2020 = vadd.f32 %v1780, %v1988
      %v2021 = vadd.f32 %v1781, %v1989
      %v2022 = vadd.f32 %v1782, %v1990
      %v2023 = vadd.f32 %v1783, %v1991
      %v2024 = vadd.f32 %v1784, %v1992
      %v2025 = vadd.f32 %v1785, %v1993
      %v2026 = vadd.f32 %v1786, %v1994
      %v2027 = vadd.f32 %v1787, %v1995
      %v2028 = vadd.f32 %v1788, %v1996
      %v2029 = vlaneseq
      %v2030 = vshrl.u32 %v2029, 7
      %v2031 = vadd.s32 %v2030, 8
      %v2032 = vlaneseq
      %v2033 = vand.u32 %v2032, 127
      %vm2034 = vcmp.ne.s32.totalorder %v2030, %v2033
      %vm2035 = vcmp.ne.s32.totalorder %v2031, %v2033
      %vm2036 = vcmp.gt.f32.partialorder %v557, 0.5
      %vm2037 = vcmp.gt.f32.partialorder %v558, 0.5
      %vm2038 = vcmp.gt.f32.partialorder %v559, 0.5
      %vm2039 = vcmp.gt.f32.partialorder %v560, 0.5
      %vm2040 = vcmp.gt.f32.partialorder %v561, 0.5
      %vm2041 = vcmp.gt.f32.partialorder %v562, 0.5
      %vm2042 = vcmp.gt.f32.partialorder %v563, 0.5
      %vm2043 = vcmp.gt.f32.partialorder %v564, 0.5
      %vm2044 = vcmp.gt.f32.partialorder %v565, 0.5
      %vm2045 = vcmp.gt.f32.partialorder %v566, 0.5
      %vm2046 = vcmp.gt.f32.partialorder %v567, 0.5
      %vm2047 = vcmp.gt.f32.partialorder %v568, 0.5
      %vm2048 = vcmp.gt.f32.partialorder %v569, 0.5
      %vm2049 = vcmp.gt.f32.partialorder %v570, 0.5
      %vm2050 = vcmp.gt.f32.partialorder %v571, 0.5
      %vm2051 = vcmp.gt.f32.partialorder %v572, 0.5
      %vm2052 = vcmp.lt.f32.partialorder %v1997, 9.0
      %vm2053 = vcmp.lt.f32.partialorder %v1998, 9.0
      %vm2054 = vcmp.lt.f32.partialorder %v1999, 9.0
      %vm2055 = vcmp.lt.f32.partialorder %v2000, 9.0
      %vm2056 = vcmp.lt.f32.partialorder %v2001, 9.0
      %vm2057 = vcmp.lt.f32.partialorder %v2002, 9.0
      %vm2058 = vcmp.lt.f32.partialorder %v2003, 9.0
      %vm2059 = vcmp.lt.f32.partialorder %v2004, 9.0
      %vm2060 = vcmp.lt.f32.partialorder %v2005, 9.0
      %vm2061 = vcmp.lt.f32.partialorder %v2006, 9.0
      %vm2062 = vcmp.lt.f32.partialorder %v2007, 9.0
      %vm2063 = vcmp.lt.f32.partialorder %v2008, 9.0
      %vm2064 = vcmp.lt.f32.partialorder %v2009, 9.0
      %vm2065 = vcmp.lt.f32.partialorder %v2010, 9.0
      %vm2066 = vcmp.lt.f32.partialorder %v2011, 9.0
      %vm2067 = vcmp.lt.f32.partialorder %v2012, 9.0
      %vm2068 = vcmp.lt.f32.partialorder %v2013, 9.0
      %vm2069 = vcmp.lt.f32.partialorder %v2014, 9.0
      %vm2070 = vcmp.lt.f32.partialorder %v2015, 9.0
      %vm2071 = vcmp.lt.f32.partialorder %v2016, 9.0
      %vm2072 = vcmp.lt.f32.partialorder %v2017, 9.0
      %vm2073 = vcmp.lt.f32.partialorder %v2018, 9.0
      %vm2074 = vcmp.lt.f32.partialorder %v2019, 9.0
      %vm2075 = vcmp.lt.f32.partialorder %v2020, 9.0
      %vm2076 = vcmp.lt.f32.partialorder %v2021, 9.0
      %vm2077 = vcmp.lt.f32.partialorder %v2022, 9.0
      %vm2078 = vcmp.lt.f32.partialorder %v2023, 9.0
      %vm2079 = vcmp.lt.f32.partialorder %v2024, 9.0
      %vm2080 = vcmp.lt.f32.partialorder %v2025, 9.0
      %vm2081 = vcmp.lt.f32.partialorder %v2026, 9.0
      %vm2082 = vcmp.lt.f32.partialorder %v2027, 9.0
      %vm2083 = vcmp.lt.f32.partialorder %v2028, 9.0
      %v2084 = vsel %vm2034, 1, 0
      %v2085 = vsel %vm2035, 1, 0
      %vm2086 = vcmp.eq.s32.totalorder %v2084, 1
      %vm2087 = vcmp.eq.s32.totalorder %v2085, 1
      %vm2088 = vmand %vm2052, %vm2086
      %vm2089 = vmand %vm2053, %vm2087
      %vm2090 = vmand %vm2054, %vm2086
      %vm2091 = vmand %vm2055, %vm2087
      %vm2092 = vmand %vm2056, %vm2086
      %vm2093 = vmand %vm2057, %vm2087
      %vm2094 = vmand %vm2058, %vm2086
      %vm2095 = vmand %vm2059, %vm2087
      %vm2096 = vmand %vm2060, %vm2086
      %vm2097 = vmand %vm2061, %vm2087
      %vm2098 = vmand %vm2062, %vm2086
      %vm2099 = vmand %vm2063, %vm2087
      %vm2100 = vmand %vm2064, %vm2086
      %vm2101 = vmand %vm2065, %vm2087
      %vm2102 = vmand %vm2066, %vm2086
      %vm2103 = vmand %vm2067, %vm2087
      %vm2104 = vmand %vm2068, %vm2086
      %vm2105 = vmand %vm2069, %vm2087
      %vm2106 = vmand %vm2070, %vm2086
      %vm2107 = vmand %vm2071, %vm2087
      %vm2108 = vmand %vm2072, %vm2086
      %vm2109 = vmand %vm2073, %vm2087
      %vm2110 = vmand %vm2074, %vm2086
      %vm2111 = vmand %vm2075, %vm2087
      %vm2112 = vmand %vm2076, %vm2086
      %vm2113 = vmand %vm2077, %vm2087
      %vm2114 = vmand %vm2078, %vm2086
      %vm2115 = vmand %vm2079, %vm2087
      %vm2116 = vmand %vm2080, %vm2086
      %vm2117 = vmand %vm2081, %vm2087
      %vm2118 = vmand %vm2082, %vm2086
      %vm2119 = vmand %vm2083, %vm2087
      %v2120 = vsel %vm2036, 1, 0
      %v2121 = vsel %vm2037, 1, 0
      %v2122 = vsel %vm2038, 1, 0
      %v2123 = vsel %vm2039, 1, 0
      %v2124 = vsel %vm2040, 1, 0
      %v2125 = vsel %vm2041, 1, 0
      %v2126 = vsel %vm2042, 1, 0
      %v2127 = vsel %vm2043, 1, 0
      %v2128 = vsel %vm2044, 1, 0
      %v2129 = vsel %vm2045, 1, 0
      %v2130 = vsel %vm2046, 1, 0
      %v2131 = vsel %vm2047, 1, 0
      %v2132 = vsel %vm2048, 1, 0
      %v2133 = vsel %vm2049, 1, 0
      %v2134 = vsel %vm2050, 1, 0
      %v2135 = vsel %vm2051, 1, 0
      %v2136 = vperm.slane %v2120, 0
      %v2137 = vperm.slane %v2121, 0
      %v2138 = vperm.slane %v2122, 0
      %v2139 = vperm.slane %v2123, 0
      %v2140 = vperm.slane %v2124, 0
      %v2141 = vperm.slane %v2125, 0
      %v2142 = vperm.slane %v2126, 0
      %v2143 = vperm.slane %v2127, 0
      %v2144 = vperm.slane %v2128, 0
      %v2145 = vperm.slane %v2129, 0
      %v2146 = vperm.slane %v2130, 0
      %v2147 = vperm.slane %v2131, 0
      %v2148 = vperm.slane %v2132, 0
      %v2149 = vperm.slane %v2133, 0
      %v2150 = vperm.slane %v2134, 0
      %v2151 = vperm.slane %v2135, 0
      %vm2152 = vcmp.eq.s32.totalorder %v2136, 1
      %vm2153 = vcmp.eq.s32.totalorder %v2137, 1
      %vm2154 = vcmp.eq.s32.totalorder %v2138, 1
      %vm2155 = vcmp.eq.s32.totalorder %v2139, 1
      %vm2156 = vcmp.eq.s32.totalorder %v2140, 1
      %vm2157 = vcmp.eq.s32.totalorder %v2141, 1
      %vm2158 = vcmp.eq.s32.totalorder %v2142, 1
      %vm2159 = vcmp.eq.s32.totalorder %v2143, 1
      %vm2160 = vcmp.eq.s32.totalorder %v2144, 1
      %vm2161 = vcmp.eq.s32.totalorder %v2145, 1
      %vm2162 = vcmp.eq.s32.totalorder %v2146, 1
      %vm2163 = vcmp.eq.s32.totalorder %v2147, 1
      %vm2164 = vcmp.eq.s32.totalorder %v2148, 1
      %vm2165 = vcmp.eq.s32.totalorder %v2149, 1
      %vm2166 = vcmp.eq.s32.totalorder %v2150, 1
      %vm2167 = vcmp.eq.s32.totalorder %v2151, 1
      %vm2168 = vmand %vm2088, %vm2152
      %vm2169 = vmand %vm2089, %vm2152
      %vm2170 = vmand %vm2090, %vm2153
      %vm2171 = vmand %vm2091, %vm2153
      %vm2172 = vmand %vm2092, %vm2154
      %vm2173 = vmand %vm2093, %vm2154
      %vm2174 = vmand %vm2094, %vm2155
      %vm2175 = vmand %vm2095, %vm2155
      %vm2176 = vmand %vm2096, %vm2156
      %vm2177 = vmand %vm2097, %vm2156
      %vm2178 = vmand %vm2098, %vm2157
      %vm2179 = vmand %vm2099, %vm2157
      %vm2180 = vmand %vm2100, %vm2158
      %vm2181 = vmand %vm2101, %vm2158
      %vm2182 = vmand %vm2102, %vm2159
      %vm2183 = vmand %vm2103, %vm2159
      %vm2184 = vmand %vm2104, %vm2160
      %vm2185 = vmand %vm2105, %vm2160
      %vm2186 = vmand %vm2106, %vm2161
      %vm2187 = vmand %vm2107, %vm2161
      %vm2188 = vmand %vm2108, %vm2162
      %vm2189 = vmand %vm2109, %vm2162
      %vm2190 = vmand %vm2110, %vm2163
      %vm2191 = vmand %vm2111, %vm2163
      %vm2192 = vmand %vm2112, %vm2164
      %vm2193 = vmand %vm2113, %vm2164
      %vm2194 = vmand %vm2114, %vm2165
      %vm2195 = vmand %vm2115, %vm2165
      %vm2196 = vmand %vm2116, %vm2166
      %vm2197 = vmand %vm2117, %vm2166
      %vm2198 = vmand %vm2118, %vm2167
      %vm2199 = vmand %vm2119, %vm2167
      %v2200 = vsel %vm2168, 1.0, 0.0
      %v2201 = vsel %vm2169, 1.0, 0.0
      %v2202 = vsel %vm2170, 1.0, 0.0
      %v2203 = vsel %vm2171, 1.0, 0.0
      %v2204 = vsel %vm2172, 1.0, 0.0
      %v2205 = vsel %vm2173, 1.0, 0.0
      %v2206 = vsel %vm2174, 1.0, 0.0
      %v2207 = vsel %vm2175, 1.0, 0.0
      %v2208 = vsel %vm2176, 1.0, 0.0
      %v2209 = vsel %vm2177, 1.0, 0.0
      %v2210 = vsel %vm2178, 1.0, 0.0
      %v2211 = vsel %vm2179, 1.0, 0.0
      %v2212 = vsel %vm2180, 1.0, 0.0
      %v2213 = vsel %vm2181, 1.0, 0.0
      %v2214 = vsel %vm2182, 1.0, 0.0
      %v2215 = vsel %vm2183, 1.0, 0.0
      %v2216 = vsel %vm2184, 1.0, 0.0
      %v2217 = vsel %vm2185, 1.0, 0.0
      %v2218 = vsel %vm2186, 1.0, 0.0
      %v2219 = vsel %vm2187, 1.0, 0.0
      %v2220 = vsel %vm2188, 1.0, 0.0
      %v2221 = vsel %vm2189, 1.0, 0.0
      %v2222 = vsel %vm2190, 1.0, 0.0
      %v2223 = vsel %vm2191, 1.0, 0.0
      %v2224 = vsel %vm2192, 1.0, 0.0
      %v2225 = vsel %vm2193, 1.0, 0.0
      %v2226 = vsel %vm2194, 1.0, 0.0
      %v2227 = vsel %vm2195, 1.0, 0.0
      %v2228 = vsel %vm2196, 1.0, 0.0
      %v2229 = vsel %vm2197, 1.0, 0.0
      %v2230 = vsel %vm2198, 1.0, 0.0
      %v2231 = vsel %vm2199, 1.0, 0.0
      %vm2232 = vcmask 130048
      %v2233 = vsel %vm2232, %v2200, 0.0
      %2234 = vadd.xlane.f32.xlu0 %v2233
      %v2235 = vpop.xlane.xlu0 %2234
      %v2236 = vsel %vm2232, %v2201, 0.0
      %2237 = vadd.xlane.f32.xlu0 %v2236
      %v2238 = vpop.xlane.xlu0 %2237
      %v2239 = vsel %vm2232, %v2202, 0.0
      %2240 = vadd.xlane.f32.xlu0 %v2239
      %v2241 = vpop.xlane.xlu0 %2240
      %v2242 = vsel %vm2232, %v2203, 0.0
      %2243 = vadd.xlane.f32.xlu0 %v2242
      %v2244 = vpop.xlane.xlu0 %2243
      %v2245 = vsel %vm2232, %v2204, 0.0
      %2246 = vadd.xlane.f32.xlu0 %v2245
      %v2247 = vpop.xlane.xlu0 %2246
      %v2248 = vsel %vm2232, %v2205, 0.0
      %2249 = vadd.xlane.f32.xlu0 %v2248
      %v2250 = vpop.xlane.xlu0 %2249
      %v2251 = vsel %vm2232, %v2206, 0.0
      %2252 = vadd.xlane.f32.xlu0 %v2251
      %v2253 = vpop.xlane.xlu0 %2252
      %v2254 = vsel %vm2232, %v2207, 0.0
      %2255 = vadd.xlane.f32.xlu0 %v2254
      %v2256 = vpop.xlane.xlu0 %2255
      %v2257 = vsel %vm2232, %v2208, 0.0
      %2258 = vadd.xlane.f32.xlu0 %v2257
      %v2259 = vpop.xlane.xlu0 %2258
      %v2260 = vsel %vm2232, %v2209, 0.0
      %2261 = vadd.xlane.f32.xlu0 %v2260
      %v2262 = vpop.xlane.xlu0 %2261
      %v2263 = vsel %vm2232, %v2210, 0.0
      %2264 = vadd.xlane.f32.xlu0 %v2263
      %v2265 = vpop.xlane.xlu0 %2264
      %v2266 = vsel %vm2232, %v2211, 0.0
      %2267 = vadd.xlane.f32.xlu0 %v2266
      %v2268 = vpop.xlane.xlu0 %2267
      %v2269 = vsel %vm2232, %v2212, 0.0
      %2270 = vadd.xlane.f32.xlu0 %v2269
      %v2271 = vpop.xlane.xlu0 %2270
      %v2272 = vsel %vm2232, %v2213, 0.0
      %2273 = vadd.xlane.f32.xlu0 %v2272
      %v2274 = vpop.xlane.xlu0 %2273
      %v2275 = vsel %vm2232, %v2214, 0.0
      %2276 = vadd.xlane.f32.xlu0 %v2275
      %v2277 = vpop.xlane.xlu0 %2276
      %v2278 = vsel %vm2232, %v2215, 0.0
      %2279 = vadd.xlane.f32.xlu0 %v2278
      %v2280 = vpop.xlane.xlu0 %2279
      %v2281 = vsel %vm2232, %v2216, 0.0
      %2282 = vadd.xlane.f32.xlu0 %v2281
      %v2283 = vpop.xlane.xlu0 %2282
      %v2284 = vsel %vm2232, %v2217, 0.0
      %2285 = vadd.xlane.f32.xlu0 %v2284
      %v2286 = vpop.xlane.xlu0 %2285
      %v2287 = vsel %vm2232, %v2218, 0.0
      %2288 = vadd.xlane.f32.xlu0 %v2287
      %v2289 = vpop.xlane.xlu0 %2288
      %v2290 = vsel %vm2232, %v2219, 0.0
      %2291 = vadd.xlane.f32.xlu0 %v2290
      %v2292 = vpop.xlane.xlu0 %2291
      %v2293 = vsel %vm2232, %v2220, 0.0
      %2294 = vadd.xlane.f32.xlu0 %v2293
      %v2295 = vpop.xlane.xlu0 %2294
      %v2296 = vsel %vm2232, %v2221, 0.0
      %2297 = vadd.xlane.f32.xlu0 %v2296
      %v2298 = vpop.xlane.xlu0 %2297
      %v2299 = vsel %vm2232, %v2222, 0.0
      %2300 = vadd.xlane.f32.xlu0 %v2299
      %v2301 = vpop.xlane.xlu0 %2300
      %v2302 = vsel %vm2232, %v2223, 0.0
      %2303 = vadd.xlane.f32.xlu0 %v2302
      %v2304 = vpop.xlane.xlu0 %2303
      %v2305 = vsel %vm2232, %v2224, 0.0
      %2306 = vadd.xlane.f32.xlu0 %v2305
      %v2307 = vpop.xlane.xlu0 %2306
      %v2308 = vsel %vm2232, %v2225, 0.0
      %2309 = vadd.xlane.f32.xlu0 %v2308
      %v2310 = vpop.xlane.xlu0 %2309
      %v2311 = vsel %vm2232, %v2226, 0.0
      %2312 = vadd.xlane.f32.xlu0 %v2311
      %v2313 = vpop.xlane.xlu0 %2312
      %v2314 = vsel %vm2232, %v2227, 0.0
      %2315 = vadd.xlane.f32.xlu0 %v2314
      %v2316 = vpop.xlane.xlu0 %2315
      %v2317 = vsel %vm2232, %v2228, 0.0
      %2318 = vadd.xlane.f32.xlu0 %v2317
      %v2319 = vpop.xlane.xlu0 %2318
      %v2320 = vsel %vm2232, %v2229, 0.0
      %2321 = vadd.xlane.f32.xlu0 %v2320
      %v2322 = vpop.xlane.xlu0 %2321
      %v2323 = vsel %vm2232, %v2230, 0.0
      %2324 = vadd.xlane.f32.xlu0 %v2323
      %v2325 = vpop.xlane.xlu0 %2324
      %v2326 = vsel %vm2232, %v2231, 0.0
      %2327 = vadd.xlane.f32.xlu0 %v2326
      %v2328 = vpop.xlane.xlu0 %2327
      %v2329 = vmax.f32 %v2235, 1.0
      %v2330 = vmax.f32 %v2238, 1.0
      %v2331 = vmax.f32 %v2241, 1.0
      %v2332 = vmax.f32 %v2244, 1.0
      %v2333 = vmax.f32 %v2247, 1.0
      %v2334 = vmax.f32 %v2250, 1.0
      %v2335 = vmax.f32 %v2253, 1.0
      %v2336 = vmax.f32 %v2256, 1.0
      %v2337 = vmax.f32 %v2259, 1.0
      %v2338 = vmax.f32 %v2262, 1.0
      %v2339 = vmax.f32 %v2265, 1.0
      %v2340 = vmax.f32 %v2268, 1.0
      %v2341 = vmax.f32 %v2271, 1.0
      %v2342 = vmax.f32 %v2274, 1.0
      %v2343 = vmax.f32 %v2277, 1.0
      %v2344 = vmax.f32 %v2280, 1.0
      %v2345 = vmax.f32 %v2283, 1.0
      %v2346 = vmax.f32 %v2286, 1.0
      %v2347 = vmax.f32 %v2289, 1.0
      %v2348 = vmax.f32 %v2292, 1.0
      %v2349 = vmax.f32 %v2295, 1.0
      %v2350 = vmax.f32 %v2298, 1.0
      %v2351 = vmax.f32 %v2301, 1.0
      %v2352 = vmax.f32 %v2304, 1.0
      %v2353 = vmax.f32 %v2307, 1.0
      %v2354 = vmax.f32 %v2310, 1.0
      %v2355 = vmax.f32 %v2313, 1.0
      %v2356 = vmax.f32 %v2316, 1.0
      %v2357 = vmax.f32 %v2319, 1.0
      %v2358 = vmax.f32 %v2322, 1.0
      %v2359 = vmax.f32 %v2325, 1.0
      %v2360 = vmax.f32 %v2328, 1.0
      %v2361 = vrcp.pop %v2329
      %v2362 = vmul.f32 %v2329, %v2361
      %v2363 = vsub.f32 1.0, %v2362
      %v2364 = vmul.f32 %v2361, %v2363
      %v2365 = vadd.f32 %v2361, %v2364
      %vm2366 = vweird.f32 %v2329
      %vm2367 = vweird.f32 %v2361
      %vm2368 = vmor %vm2366, %vm2367
      %v2369 = vsel %vm2368, %v2361, %v2365
      %v2370 = vand.u32 2147483647, %v2329
      %vm2371 = vcmp.eq.f32.partialorder %v2370, 8.507059e+37
      %v2372 = vand.u32 %v2329, 2147483648
      %v2373 = vor.u32 1.1754944e-38, %v2372
      %v2374 = vsel %vm2371, %v2373, %v2369
      %v2375 = vmul.f32 %v2200, %v2374
      %v2376 = vrcp.pop %v2330
      %v2377 = vmul.f32 %v2330, %v2376
      %v2378 = vsub.f32 1.0, %v2377
      %v2379 = vmul.f32 %v2376, %v2378
      %v2380 = vadd.f32 %v2376, %v2379
      %vm2381 = vweird.f32 %v2330
      %vm2382 = vweird.f32 %v2376
      %vm2383 = vmor %vm2381, %vm2382
      %v2384 = vsel %vm2383, %v2376, %v2380
      %v2385 = vand.u32 2147483647, %v2330
      %vm2386 = vcmp.eq.f32.partialorder %v2385, 8.507059e+37
      %v2387 = vand.u32 %v2330, 2147483648
      %v2388 = vor.u32 1.1754944e-38, %v2387
      %v2389 = vsel %vm2386, %v2388, %v2384
      %v2390 = vmul.f32 %v2201, %v2389
      %v2391 = vrcp.pop %v2331
      %v2392 = vmul.f32 %v2331, %v2391
      %v2393 = vsub.f32 1.0, %v2392
      %v2394 = vmul.f32 %v2391, %v2393
      %v2395 = vadd.f32 %v2391, %v2394
      %vm2396 = vweird.f32 %v2331
      %vm2397 = vweird.f32 %v2391
      %vm2398 = vmor %vm2396, %vm2397
      %v2399 = vsel %vm2398, %v2391, %v2395
      %v2400 = vand.u32 2147483647, %v2331
      %vm2401 = vcmp.eq.f32.partialorder %v2400, 8.507059e+37
      %v2402 = vand.u32 %v2331, 2147483648
      %v2403 = vor.u32 1.1754944e-38, %v2402
      %v2404 = vsel %vm2401, %v2403, %v2399
      %v2405 = vmul.f32 %v2202, %v2404
      %v2406 = vrcp.pop %v2332
      %v2407 = vmul.f32 %v2332, %v2406
      %v2408 = vsub.f32 1.0, %v2407
      %v2409 = vmul.f32 %v2406, %v2408
      %v2410 = vadd.f32 %v2406, %v2409
      %vm2411 = vweird.f32 %v2332
      %vm2412 = vweird.f32 %v2406
      %vm2413 = vmor %vm2411, %vm2412
      %v2414 = vsel %vm2413, %v2406, %v2410
      %v2415 = vand.u32 2147483647, %v2332
      %vm2416 = vcmp.eq.f32.partialorder %v2415, 8.507059e+37
      %v2417 = vand.u32 %v2332, 2147483648
      %v2418 = vor.u32 1.1754944e-38, %v2417
      %v2419 = vsel %vm2416, %v2418, %v2414
      %v2420 = vmul.f32 %v2203, %v2419
      %v2421 = vrcp.pop %v2333
      %v2422 = vmul.f32 %v2333, %v2421
      %v2423 = vsub.f32 1.0, %v2422
      %v2424 = vmul.f32 %v2421, %v2423
      %v2425 = vadd.f32 %v2421, %v2424
      %vm2426 = vweird.f32 %v2333
      %vm2427 = vweird.f32 %v2421
      %vm2428 = vmor %vm2426, %vm2427
      %v2429 = vsel %vm2428, %v2421, %v2425
      %v2430 = vand.u32 2147483647, %v2333
      %vm2431 = vcmp.eq.f32.partialorder %v2430, 8.507059e+37
      %v2432 = vand.u32 %v2333, 2147483648
      %v2433 = vor.u32 1.1754944e-38, %v2432
      %v2434 = vsel %vm2431, %v2433, %v2429
      %v2435 = vmul.f32 %v2204, %v2434
      %v2436 = vrcp.pop %v2334
      %v2437 = vmul.f32 %v2334, %v2436
      %v2438 = vsub.f32 1.0, %v2437
      %v2439 = vmul.f32 %v2436, %v2438
      %v2440 = vadd.f32 %v2436, %v2439
      %vm2441 = vweird.f32 %v2334
      %vm2442 = vweird.f32 %v2436
      %vm2443 = vmor %vm2441, %vm2442
      %v2444 = vsel %vm2443, %v2436, %v2440
      %v2445 = vand.u32 2147483647, %v2334
      %vm2446 = vcmp.eq.f32.partialorder %v2445, 8.507059e+37
      %v2447 = vand.u32 %v2334, 2147483648
      %v2448 = vor.u32 1.1754944e-38, %v2447
      %v2449 = vsel %vm2446, %v2448, %v2444
      %v2450 = vmul.f32 %v2205, %v2449
      %v2451 = vrcp.pop %v2335
      %v2452 = vmul.f32 %v2335, %v2451
      %v2453 = vsub.f32 1.0, %v2452
      %v2454 = vmul.f32 %v2451, %v2453
      %v2455 = vadd.f32 %v2451, %v2454
      %vm2456 = vweird.f32 %v2335
      %vm2457 = vweird.f32 %v2451
      %vm2458 = vmor %vm2456, %vm2457
      %v2459 = vsel %vm2458, %v2451, %v2455
      %v2460 = vand.u32 2147483647, %v2335
      %vm2461 = vcmp.eq.f32.partialorder %v2460, 8.507059e+37
      %v2462 = vand.u32 %v2335, 2147483648
      %v2463 = vor.u32 1.1754944e-38, %v2462
      %v2464 = vsel %vm2461, %v2463, %v2459
      %v2465 = vmul.f32 %v2206, %v2464
      %v2466 = vrcp.pop %v2336
      %v2467 = vmul.f32 %v2336, %v2466
      %v2468 = vsub.f32 1.0, %v2467
      %v2469 = vmul.f32 %v2466, %v2468
      %v2470 = vadd.f32 %v2466, %v2469
      %vm2471 = vweird.f32 %v2336
      %vm2472 = vweird.f32 %v2466
      %vm2473 = vmor %vm2471, %vm2472
      %v2474 = vsel %vm2473, %v2466, %v2470
      %v2475 = vand.u32 2147483647, %v2336
      %vm2476 = vcmp.eq.f32.partialorder %v2475, 8.507059e+37
      %v2477 = vand.u32 %v2336, 2147483648
      %v2478 = vor.u32 1.1754944e-38, %v2477
      %v2479 = vsel %vm2476, %v2478, %v2474
      %v2480 = vmul.f32 %v2207, %v2479
      %v2481 = vrcp.pop %v2337
      %v2482 = vmul.f32 %v2337, %v2481
      %v2483 = vsub.f32 1.0, %v2482
      %v2484 = vmul.f32 %v2481, %v2483
      %v2485 = vadd.f32 %v2481, %v2484
      %vm2486 = vweird.f32 %v2337
      %vm2487 = vweird.f32 %v2481
      %vm2488 = vmor %vm2486, %vm2487
      %v2489 = vsel %vm2488, %v2481, %v2485
      %v2490 = vand.u32 2147483647, %v2337
      %vm2491 = vcmp.eq.f32.partialorder %v2490, 8.507059e+37
      %v2492 = vand.u32 %v2337, 2147483648
      %v2493 = vor.u32 1.1754944e-38, %v2492
      %v2494 = vsel %vm2491, %v2493, %v2489
      %v2495 = vmul.f32 %v2208, %v2494
      %v2496 = vrcp.pop %v2338
      %v2497 = vmul.f32 %v2338, %v2496
      %v2498 = vsub.f32 1.0, %v2497
      %v2499 = vmul.f32 %v2496, %v2498
      %v2500 = vadd.f32 %v2496, %v2499
      %vm2501 = vweird.f32 %v2338
      %vm2502 = vweird.f32 %v2496
      %vm2503 = vmor %vm2501, %vm2502
      %v2504 = vsel %vm2503, %v2496, %v2500
      %v2505 = vand.u32 2147483647, %v2338
      %vm2506 = vcmp.eq.f32.partialorder %v2505, 8.507059e+37
      %v2507 = vand.u32 %v2338, 2147483648
      %v2508 = vor.u32 1.1754944e-38, %v2507
      %v2509 = vsel %vm2506, %v2508, %v2504
      %v2510 = vmul.f32 %v2209, %v2509
      %v2511 = vrcp.pop %v2339
      %v2512 = vmul.f32 %v2339, %v2511
      %v2513 = vsub.f32 1.0, %v2512
      %v2514 = vmul.f32 %v2511, %v2513
      %v2515 = vadd.f32 %v2511, %v2514
      %vm2516 = vweird.f32 %v2339
      %vm2517 = vweird.f32 %v2511
      %vm2518 = vmor %vm2516, %vm2517
      %v2519 = vsel %vm2518, %v2511, %v2515
      %v2520 = vand.u32 2147483647, %v2339
      %vm2521 = vcmp.eq.f32.partialorder %v2520, 8.507059e+37
      %v2522 = vand.u32 %v2339, 2147483648
      %v2523 = vor.u32 1.1754944e-38, %v2522
      %v2524 = vsel %vm2521, %v2523, %v2519
      %v2525 = vmul.f32 %v2210, %v2524
      %v2526 = vrcp.pop %v2340
      %v2527 = vmul.f32 %v2340, %v2526
      %v2528 = vsub.f32 1.0, %v2527
      %v2529 = vmul.f32 %v2526, %v2528
      %v2530 = vadd.f32 %v2526, %v2529
      %vm2531 = vweird.f32 %v2340
      %vm2532 = vweird.f32 %v2526
      %vm2533 = vmor %vm2531, %vm2532
      %v2534 = vsel %vm2533, %v2526, %v2530
      %v2535 = vand.u32 2147483647, %v2340
      %vm2536 = vcmp.eq.f32.partialorder %v2535, 8.507059e+37
      %v2537 = vand.u32 %v2340, 2147483648
      %v2538 = vor.u32 1.1754944e-38, %v2537
      %v2539 = vsel %vm2536, %v2538, %v2534
      %v2540 = vmul.f32 %v2211, %v2539
      %v2541 = vrcp.pop %v2341
      %v2542 = vmul.f32 %v2341, %v2541
      %v2543 = vsub.f32 1.0, %v2542
      %v2544 = vmul.f32 %v2541, %v2543
      %v2545 = vadd.f32 %v2541, %v2544
      %vm2546 = vweird.f32 %v2341
      %vm2547 = vweird.f32 %v2541
      %vm2548 = vmor %vm2546, %vm2547
      %v2549 = vsel %vm2548, %v2541, %v2545
      %v2550 = vand.u32 2147483647, %v2341
      %vm2551 = vcmp.eq.f32.partialorder %v2550, 8.507059e+37
      %v2552 = vand.u32 %v2341, 2147483648
      %v2553 = vor.u32 1.1754944e-38, %v2552
      %v2554 = vsel %vm2551, %v2553, %v2549
      %v2555 = vmul.f32 %v2212, %v2554
      %v2556 = vrcp.pop %v2342
      %v2557 = vmul.f32 %v2342, %v2556
      %v2558 = vsub.f32 1.0, %v2557
      %v2559 = vmul.f32 %v2556, %v2558
      %v2560 = vadd.f32 %v2556, %v2559
      %vm2561 = vweird.f32 %v2342
      %vm2562 = vweird.f32 %v2556
      %vm2563 = vmor %vm2561, %vm2562
      %v2564 = vsel %vm2563, %v2556, %v2560
      %v2565 = vand.u32 2147483647, %v2342
      %vm2566 = vcmp.eq.f32.partialorder %v2565, 8.507059e+37
      %v2567 = vand.u32 %v2342, 2147483648
      %v2568 = vor.u32 1.1754944e-38, %v2567
      %v2569 = vsel %vm2566, %v2568, %v2564
      %v2570 = vmul.f32 %v2213, %v2569
      %v2571 = vrcp.pop %v2343
      %v2572 = vmul.f32 %v2343, %v2571
      %v2573 = vsub.f32 1.0, %v2572
      %v2574 = vmul.f32 %v2571, %v2573
      %v2575 = vadd.f32 %v2571, %v2574
      %vm2576 = vweird.f32 %v2343
      %vm2577 = vweird.f32 %v2571
      %vm2578 = vmor %vm2576, %vm2577
      %v2579 = vsel %vm2578, %v2571, %v2575
      %v2580 = vand.u32 2147483647, %v2343
      %vm2581 = vcmp.eq.f32.partialorder %v2580, 8.507059e+37
      %v2582 = vand.u32 %v2343, 2147483648
      %v2583 = vor.u32 1.1754944e-38, %v2582
      %v2584 = vsel %vm2581, %v2583, %v2579
      %v2585 = vmul.f32 %v2214, %v2584
      %v2586 = vrcp.pop %v2344
      %v2587 = vmul.f32 %v2344, %v2586
      %v2588 = vsub.f32 1.0, %v2587
      %v2589 = vmul.f32 %v2586, %v2588
      %v2590 = vadd.f32 %v2586, %v2589
      %vm2591 = vweird.f32 %v2344
      %vm2592 = vweird.f32 %v2586
      %vm2593 = vmor %vm2591, %vm2592
      %v2594 = vsel %vm2593, %v2586, %v2590
      %v2595 = vand.u32 2147483647, %v2344
      %vm2596 = vcmp.eq.f32.partialorder %v2595, 8.507059e+37
      %v2597 = vand.u32 %v2344, 2147483648
      %v2598 = vor.u32 1.1754944e-38, %v2597
      %v2599 = vsel %vm2596, %v2598, %v2594
      %v2600 = vmul.f32 %v2215, %v2599
      %v2601 = vrcp.pop %v2345
      %v2602 = vmul.f32 %v2345, %v2601
      %v2603 = vsub.f32 1.0, %v2602
      %v2604 = vmul.f32 %v2601, %v2603
      %v2605 = vadd.f32 %v2601, %v2604
      %vm2606 = vweird.f32 %v2345
      %vm2607 = vweird.f32 %v2601
      %vm2608 = vmor %vm2606, %vm2607
      %v2609 = vsel %vm2608, %v2601, %v2605
      %v2610 = vand.u32 2147483647, %v2345
      %vm2611 = vcmp.eq.f32.partialorder %v2610, 8.507059e+37
      %v2612 = vand.u32 %v2345, 2147483648
      %v2613 = vor.u32 1.1754944e-38, %v2612
      %v2614 = vsel %vm2611, %v2613, %v2609
      %v2615 = vmul.f32 %v2216, %v2614
      %v2616 = vrcp.pop %v2346
      %v2617 = vmul.f32 %v2346, %v2616
      %v2618 = vsub.f32 1.0, %v2617
      %v2619 = vmul.f32 %v2616, %v2618
      %v2620 = vadd.f32 %v2616, %v2619
      %vm2621 = vweird.f32 %v2346
      %vm2622 = vweird.f32 %v2616
      %vm2623 = vmor %vm2621, %vm2622
      %v2624 = vsel %vm2623, %v2616, %v2620
      %v2625 = vand.u32 2147483647, %v2346
      %vm2626 = vcmp.eq.f32.partialorder %v2625, 8.507059e+37
      %v2627 = vand.u32 %v2346, 2147483648
      %v2628 = vor.u32 1.1754944e-38, %v2627
      %v2629 = vsel %vm2626, %v2628, %v2624
      %v2630 = vmul.f32 %v2217, %v2629
      %v2631 = vrcp.pop %v2347
      %v2632 = vmul.f32 %v2347, %v2631
      %v2633 = vsub.f32 1.0, %v2632
      %v2634 = vmul.f32 %v2631, %v2633
      %v2635 = vadd.f32 %v2631, %v2634
      %vm2636 = vweird.f32 %v2347
      %vm2637 = vweird.f32 %v2631
      %vm2638 = vmor %vm2636, %vm2637
      %v2639 = vsel %vm2638, %v2631, %v2635
      %v2640 = vand.u32 2147483647, %v2347
      %vm2641 = vcmp.eq.f32.partialorder %v2640, 8.507059e+37
      %v2642 = vand.u32 %v2347, 2147483648
      %v2643 = vor.u32 1.1754944e-38, %v2642
      %v2644 = vsel %vm2641, %v2643, %v2639
      %v2645 = vmul.f32 %v2218, %v2644
      %v2646 = vrcp.pop %v2348
      %v2647 = vmul.f32 %v2348, %v2646
      %v2648 = vsub.f32 1.0, %v2647
      %v2649 = vmul.f32 %v2646, %v2648
      %v2650 = vadd.f32 %v2646, %v2649
      %vm2651 = vweird.f32 %v2348
      %vm2652 = vweird.f32 %v2646
      %vm2653 = vmor %vm2651, %vm2652
      %v2654 = vsel %vm2653, %v2646, %v2650
      %v2655 = vand.u32 2147483647, %v2348
      %vm2656 = vcmp.eq.f32.partialorder %v2655, 8.507059e+37
      %v2657 = vand.u32 %v2348, 2147483648
      %v2658 = vor.u32 1.1754944e-38, %v2657
      %v2659 = vsel %vm2656, %v2658, %v2654
      %v2660 = vmul.f32 %v2219, %v2659
      %v2661 = vrcp.pop %v2349
      %v2662 = vmul.f32 %v2349, %v2661
      %v2663 = vsub.f32 1.0, %v2662
      %v2664 = vmul.f32 %v2661, %v2663
      %v2665 = vadd.f32 %v2661, %v2664
      %vm2666 = vweird.f32 %v2349
      %vm2667 = vweird.f32 %v2661
      %vm2668 = vmor %vm2666, %vm2667
      %v2669 = vsel %vm2668, %v2661, %v2665
      %v2670 = vand.u32 2147483647, %v2349
      %vm2671 = vcmp.eq.f32.partialorder %v2670, 8.507059e+37
      %v2672 = vand.u32 %v2349, 2147483648
      %v2673 = vor.u32 1.1754944e-38, %v2672
      %v2674 = vsel %vm2671, %v2673, %v2669
      %v2675 = vmul.f32 %v2220, %v2674
      %v2676 = vrcp.pop %v2350
      %v2677 = vmul.f32 %v2350, %v2676
      %v2678 = vsub.f32 1.0, %v2677
      %v2679 = vmul.f32 %v2676, %v2678
      %v2680 = vadd.f32 %v2676, %v2679
      %vm2681 = vweird.f32 %v2350
      %vm2682 = vweird.f32 %v2676
      %vm2683 = vmor %vm2681, %vm2682
      %v2684 = vsel %vm2683, %v2676, %v2680
      %v2685 = vand.u32 2147483647, %v2350
      %vm2686 = vcmp.eq.f32.partialorder %v2685, 8.507059e+37
      %v2687 = vand.u32 %v2350, 2147483648
      %v2688 = vor.u32 1.1754944e-38, %v2687
      %v2689 = vsel %vm2686, %v2688, %v2684
      %v2690 = vmul.f32 %v2221, %v2689
      %v2691 = vrcp.pop %v2351
      %v2692 = vmul.f32 %v2351, %v2691
      %v2693 = vsub.f32 1.0, %v2692
      %v2694 = vmul.f32 %v2691, %v2693
      %v2695 = vadd.f32 %v2691, %v2694
      %vm2696 = vweird.f32 %v2351
      %vm2697 = vweird.f32 %v2691
      %vm2698 = vmor %vm2696, %vm2697
      %v2699 = vsel %vm2698, %v2691, %v2695
      %v2700 = vand.u32 2147483647, %v2351
      %vm2701 = vcmp.eq.f32.partialorder %v2700, 8.507059e+37
      %v2702 = vand.u32 %v2351, 2147483648
      %v2703 = vor.u32 1.1754944e-38, %v2702
      %v2704 = vsel %vm2701, %v2703, %v2699
      %v2705 = vmul.f32 %v2222, %v2704
      %v2706 = vrcp.pop %v2352
      %v2707 = vmul.f32 %v2352, %v2706
      %v2708 = vsub.f32 1.0, %v2707
      %v2709 = vmul.f32 %v2706, %v2708
      %v2710 = vadd.f32 %v2706, %v2709
      %vm2711 = vweird.f32 %v2352
      %vm2712 = vweird.f32 %v2706
      %vm2713 = vmor %vm2711, %vm2712
      %v2714 = vsel %vm2713, %v2706, %v2710
      %v2715 = vand.u32 2147483647, %v2352
      %vm2716 = vcmp.eq.f32.partialorder %v2715, 8.507059e+37
      %v2717 = vand.u32 %v2352, 2147483648
      %v2718 = vor.u32 1.1754944e-38, %v2717
      %v2719 = vsel %vm2716, %v2718, %v2714
      %v2720 = vmul.f32 %v2223, %v2719
      %v2721 = vrcp.pop %v2353
      %v2722 = vmul.f32 %v2353, %v2721
      %v2723 = vsub.f32 1.0, %v2722
      %v2724 = vmul.f32 %v2721, %v2723
      %v2725 = vadd.f32 %v2721, %v2724
      %vm2726 = vweird.f32 %v2353
      %vm2727 = vweird.f32 %v2721
      %vm2728 = vmor %vm2726, %vm2727
      %v2729 = vsel %vm2728, %v2721, %v2725
      %v2730 = vand.u32 2147483647, %v2353
      %vm2731 = vcmp.eq.f32.partialorder %v2730, 8.507059e+37
      %v2732 = vand.u32 %v2353, 2147483648
      %v2733 = vor.u32 1.1754944e-38, %v2732
      %v2734 = vsel %vm2731, %v2733, %v2729
      %v2735 = vmul.f32 %v2224, %v2734
      %v2736 = vrcp.pop %v2354
      %v2737 = vmul.f32 %v2354, %v2736
      %v2738 = vsub.f32 1.0, %v2737
      %v2739 = vmul.f32 %v2736, %v2738
      %v2740 = vadd.f32 %v2736, %v2739
      %vm2741 = vweird.f32 %v2354
      %vm2742 = vweird.f32 %v2736
      %vm2743 = vmor %vm2741, %vm2742
      %v2744 = vsel %vm2743, %v2736, %v2740
      %v2745 = vand.u32 2147483647, %v2354
      %vm2746 = vcmp.eq.f32.partialorder %v2745, 8.507059e+37
      %v2747 = vand.u32 %v2354, 2147483648
      %v2748 = vor.u32 1.1754944e-38, %v2747
      %v2749 = vsel %vm2746, %v2748, %v2744
      %v2750 = vmul.f32 %v2225, %v2749
      %v2751 = vrcp.pop %v2355
      %v2752 = vmul.f32 %v2355, %v2751
      %v2753 = vsub.f32 1.0, %v2752
      %v2754 = vmul.f32 %v2751, %v2753
      %v2755 = vadd.f32 %v2751, %v2754
      %vm2756 = vweird.f32 %v2355
      %vm2757 = vweird.f32 %v2751
      %vm2758 = vmor %vm2756, %vm2757
      %v2759 = vsel %vm2758, %v2751, %v2755
      %v2760 = vand.u32 2147483647, %v2355
      %vm2761 = vcmp.eq.f32.partialorder %v2760, 8.507059e+37
      %v2762 = vand.u32 %v2355, 2147483648
      %v2763 = vor.u32 1.1754944e-38, %v2762
      %v2764 = vsel %vm2761, %v2763, %v2759
      %v2765 = vmul.f32 %v2226, %v2764
      %v2766 = vrcp.pop %v2356
      %v2767 = vmul.f32 %v2356, %v2766
      %v2768 = vsub.f32 1.0, %v2767
      %v2769 = vmul.f32 %v2766, %v2768
      %v2770 = vadd.f32 %v2766, %v2769
      %vm2771 = vweird.f32 %v2356
      %vm2772 = vweird.f32 %v2766
      %vm2773 = vmor %vm2771, %vm2772
      %v2774 = vsel %vm2773, %v2766, %v2770
      %v2775 = vand.u32 2147483647, %v2356
      %vm2776 = vcmp.eq.f32.partialorder %v2775, 8.507059e+37
      %v2777 = vand.u32 %v2356, 2147483648
      %v2778 = vor.u32 1.1754944e-38, %v2777
      %v2779 = vsel %vm2776, %v2778, %v2774
      %v2780 = vmul.f32 %v2227, %v2779
      %v2781 = vrcp.pop %v2357
      %v2782 = vmul.f32 %v2357, %v2781
      %v2783 = vsub.f32 1.0, %v2782
      %v2784 = vmul.f32 %v2781, %v2783
      %v2785 = vadd.f32 %v2781, %v2784
      %vm2786 = vweird.f32 %v2357
      %vm2787 = vweird.f32 %v2781
      %vm2788 = vmor %vm2786, %vm2787
      %v2789 = vsel %vm2788, %v2781, %v2785
      %v2790 = vand.u32 2147483647, %v2357
      %vm2791 = vcmp.eq.f32.partialorder %v2790, 8.507059e+37
      %v2792 = vand.u32 %v2357, 2147483648
      %v2793 = vor.u32 1.1754944e-38, %v2792
      %v2794 = vsel %vm2791, %v2793, %v2789
      %v2795 = vmul.f32 %v2228, %v2794
      %v2796 = vrcp.pop %v2358
      %v2797 = vmul.f32 %v2358, %v2796
      %v2798 = vsub.f32 1.0, %v2797
      %v2799 = vmul.f32 %v2796, %v2798
      %v2800 = vadd.f32 %v2796, %v2799
      %vm2801 = vweird.f32 %v2358
      %vm2802 = vweird.f32 %v2796
      %vm2803 = vmor %vm2801, %vm2802
      %v2804 = vsel %vm2803, %v2796, %v2800
      %v2805 = vand.u32 2147483647, %v2358
      %vm2806 = vcmp.eq.f32.partialorder %v2805, 8.507059e+37
      %v2807 = vand.u32 %v2358, 2147483648
      %v2808 = vor.u32 1.1754944e-38, %v2807
      %v2809 = vsel %vm2806, %v2808, %v2804
      %v2810 = vmul.f32 %v2229, %v2809
      %v2811 = vrcp.pop %v2359
      %v2812 = vmul.f32 %v2359, %v2811
      %v2813 = vsub.f32 1.0, %v2812
      %v2814 = vmul.f32 %v2811, %v2813
      %v2815 = vadd.f32 %v2811, %v2814
      %vm2816 = vweird.f32 %v2359
      %vm2817 = vweird.f32 %v2811
      %vm2818 = vmor %vm2816, %vm2817
      %v2819 = vsel %vm2818, %v2811, %v2815
      %v2820 = vand.u32 2147483647, %v2359
      %vm2821 = vcmp.eq.f32.partialorder %v2820, 8.507059e+37
      %v2822 = vand.u32 %v2359, 2147483648
      %v2823 = vor.u32 1.1754944e-38, %v2822
      %v2824 = vsel %vm2821, %v2823, %v2819
      %v2825 = vmul.f32 %v2230, %v2824
      %v2826 = vrcp.pop %v2360
      %v2827 = vmul.f32 %v2360, %v2826
      %v2828 = vsub.f32 1.0, %v2827
      %v2829 = vmul.f32 %v2826, %v2828
      %v2830 = vadd.f32 %v2826, %v2829
      %vm2831 = vweird.f32 %v2360
      %vm2832 = vweird.f32 %v2826
      %vm2833 = vmor %vm2831, %vm2832
      %v2834 = vsel %vm2833, %v2826, %v2830
      %v2835 = vand.u32 2147483647, %v2360
      %vm2836 = vcmp.eq.f32.partialorder %v2835, 8.507059e+37
      %v2837 = vand.u32 %v2360, 2147483648
      %v2838 = vor.u32 1.1754944e-38, %v2837
      %v2839 = vsel %vm2836, %v2838, %v2834
      %v2840 = vmul.f32 %v2231, %v2839
      %v2841 = vld [vmem:[%s7] sm:$0xff]
      %v2842 = vld [vmem:[%s7 + $0x8] sm:$0xff]
      %v2843 = vld [vmem:[%s7 + $0x10] sm:$0xff]
      %v2844 = vld [vmem:[%s7 + $0x18] sm:$0xff]
      %v2845 = vld [vmem:[%s7 + $0x20] sm:$0xff]
      %v2846 = vld [vmem:[%s7 + $0x28] sm:$0xff]
      %v2847 = vld [vmem:[%s7 + $0x30] sm:$0xff]
      %v2848 = vld [vmem:[%s7 + $0x38] sm:$0xff]
      %v2849 = vld [vmem:[%s10 + $0x1] sm:$0x1]
      %v2851 = vsel %vm2232, %v2375, 0
      %v2854 = vsel %vm2232, %v2390, 0
      %2856 = vmatpush.msra.mxu0 0.0
      %2857 = vmatpush.msra.mxu0 0.0
      %2858 = vmatpush.msra.mxu0 0.0
      %2859 = vmatpush.msra.mxu0 0.0
      %2860 = vmatpush.msra.mxu0 0.0
      %2861 = vmatpush.msra.mxu0 0.0
      %2862 = vmatpush.msra.mxu0 0.0
      %2863 = vmatpush.msra.mxu0 0.0
      %2864 = vmatpush.msra.mxu0 0.0
      %2865 = vmatpush.msra.mxu0 0.0
      %2866 = vmatpush.msra.mxu0 0.0
      %2867 = vmatpush.msra.mxu0 0.0
      %2868 = vmatpush.msra.mxu0 0.0
      %2869 = vmatpush.msra.mxu0 0.0
      %2870 = vmatpush.msra.mxu0 %v1246
      %2871 = vmatpush.msra.mxu0 %v1245
      %2872 = vmatmul.f32.gmra.mxu0 %v2851
      %v2873 = vpop.f32.mrf.mxu0
      %v2874 = vadd.f32 0.0, %v2873
      %2875 = vmatmul.f32.gmra.mxu0 %v2854
      %v2876 = vpop.f32.mrf.mxu0
      %v2877 = vadd.f32 0.0, %v2876
      %2878 = vdwg.mxu0
      %v2880 = vsel %vm2232, %v2405, 0
      %v2883 = vsel %vm2232, %v2420, 0
      %2885 = vmatpush.msra.mxu0 0.0
      %2886 = vmatpush.msra.mxu0 0.0
      %2887 = vmatpush.msra.mxu0 0.0
      %2888 = vmatpush.msra.mxu0 0.0
      %2889 = vmatpush.msra.mxu0 0.0
      %2890 = vmatpush.msra.mxu0 0.0
      %2891 = vmatpush.msra.mxu0 0.0
      %2892 = vmatpush.msra.mxu0 0.0
      %2893 = vmatpush.msra.mxu0 0.0
      %2894 = vmatpush.msra.mxu0 0.0
      %2895 = vmatpush.msra.mxu0 0.0
      %2896 = vmatpush.msra.mxu0 0.0
      %2897 = vmatpush.msra.mxu0 0.0
      %2898 = vmatpush.msra.mxu0 0.0
      %2899 = vmatpush.msra.mxu0 %v1248
      %2900 = vmatpush.msra.mxu0 %v1247
      %2901 = vmatmul.f32.gmra.mxu0 %v2880
      %v2902 = vpop.f32.mrf.mxu0
      %v2903 = vadd.f32 0.0, %v2902
      %2904 = vmatmul.f32.gmra.mxu0 %v2883
      %v2905 = vpop.f32.mrf.mxu0
      %v2906 = vadd.f32 0.0, %v2905
      %2907 = vdwg.mxu0
      %v2909 = vsel %vm2232, %v2435, 0
      %v2912 = vsel %vm2232, %v2450, 0
      %2914 = vmatpush.msra.mxu0 0.0
      %2915 = vmatpush.msra.mxu0 0.0
      %2916 = vmatpush.msra.mxu0 0.0
      %2917 = vmatpush.msra.mxu0 0.0
      %2918 = vmatpush.msra.mxu0 0.0
      %2919 = vmatpush.msra.mxu0 0.0
      %2920 = vmatpush.msra.mxu0 0.0
      %2921 = vmatpush.msra.mxu0 0.0
      %2922 = vmatpush.msra.mxu0 0.0
      %2923 = vmatpush.msra.mxu0 0.0
      %2924 = vmatpush.msra.mxu0 0.0
      %2925 = vmatpush.msra.mxu0 0.0
      %2926 = vmatpush.msra.mxu0 0.0
      %2927 = vmatpush.msra.mxu0 0.0
      %2928 = vmatpush.msra.mxu0 %v1250
      %2929 = vmatpush.msra.mxu0 %v1249
      %2930 = vmatmul.f32.gmra.mxu0 %v2909
      %v2931 = vpop.f32.mrf.mxu0
      %v2932 = vadd.f32 0.0, %v2931
      %2933 = vmatmul.f32.gmra.mxu0 %v2912
      %v2934 = vpop.f32.mrf.mxu0
      %v2935 = vadd.f32 0.0, %v2934
      %2936 = vdwg.mxu0
      %v2938 = vsel %vm2232, %v2465, 0
      %v2941 = vsel %vm2232, %v2480, 0
      %2943 = vmatpush.msra.mxu0 0.0
      %2944 = vmatpush.msra.mxu0 0.0
      %2945 = vmatpush.msra.mxu0 0.0
      %2946 = vmatpush.msra.mxu0 0.0
      %2947 = vmatpush.msra.mxu0 0.0
      %2948 = vmatpush.msra.mxu0 0.0
      %2949 = vmatpush.msra.mxu0 0.0
      %2950 = vmatpush.msra.mxu0 0.0
      %2951 = vmatpush.msra.mxu0 0.0
      %2952 = vmatpush.msra.mxu0 0.0
      %2953 = vmatpush.msra.mxu0 0.0
      %2954 = vmatpush.msra.mxu0 0.0
      %2955 = vmatpush.msra.mxu0 0.0
      %2956 = vmatpush.msra.mxu0 0.0
      %2957 = vmatpush.msra.mxu0 %v1252
      %2958 = vmatpush.msra.mxu0 %v1251
      %2959 = vmatmul.f32.gmra.mxu0 %v2938
      %v2960 = vpop.f32.mrf.mxu0
      %v2961 = vadd.f32 0.0, %v2960
      %2962 = vmatmul.f32.gmra.mxu0 %v2941
      %v2963 = vpop.f32.mrf.mxu0
      %v2964 = vadd.f32 0.0, %v2963
      %2965 = vdwg.mxu0
      %v2967 = vsel %vm2232, %v2495, 0
      %v2970 = vsel %vm2232, %v2510, 0
      %2972 = vmatpush.msra.mxu0 0.0
      %2973 = vmatpush.msra.mxu0 0.0
      %2974 = vmatpush.msra.mxu0 0.0
      %2975 = vmatpush.msra.mxu0 0.0
      %2976 = vmatpush.msra.mxu0 0.0
      %2977 = vmatpush.msra.mxu0 0.0
      %2978 = vmatpush.msra.mxu0 0.0
      %2979 = vmatpush.msra.mxu0 0.0
      %2980 = vmatpush.msra.mxu0 0.0
      %2981 = vmatpush.msra.mxu0 0.0
      %2982 = vmatpush.msra.mxu0 0.0
      %2983 = vmatpush.msra.mxu0 0.0
      %2984 = vmatpush.msra.mxu0 0.0
      %2985 = vmatpush.msra.mxu0 0.0
      %2986 = vmatpush.msra.mxu0 %v1254
      %2987 = vmatpush.msra.mxu0 %v1253
      %2988 = vmatmul.f32.gmra.mxu0 %v2967
      %v2989 = vpop.f32.mrf.mxu0
      %v2990 = vadd.f32 0.0, %v2989
      %2991 = vmatmul.f32.gmra.mxu0 %v2970
      %v2992 = vpop.f32.mrf.mxu0
      %v2993 = vadd.f32 0.0, %v2992
      %2994 = vdwg.mxu0
      %v2996 = vsel %vm2232, %v2525, 0
      %v2999 = vsel %vm2232, %v2540, 0
      %3001 = vmatpush.msra.mxu0 0.0
      %3002 = vmatpush.msra.mxu0 0.0
      %3003 = vmatpush.msra.mxu0 0.0
      %3004 = vmatpush.msra.mxu0 0.0
      %3005 = vmatpush.msra.mxu0 0.0
      %3006 = vmatpush.msra.mxu0 0.0
      %3007 = vmatpush.msra.mxu0 0.0
      %3008 = vmatpush.msra.mxu0 0.0
      %3009 = vmatpush.msra.mxu0 0.0
      %3010 = vmatpush.msra.mxu0 0.0
      %3011 = vmatpush.msra.mxu0 0.0
      %3012 = vmatpush.msra.mxu0 0.0
      %3013 = vmatpush.msra.mxu0 0.0
      %3014 = vmatpush.msra.mxu0 0.0
      %3015 = vmatpush.msra.mxu0 %v1256
      %3016 = vmatpush.msra.mxu0 %v1255
      %3017 = vmatmul.f32.gmra.mxu0 %v2996
      %v3018 = vpop.f32.mrf.mxu0
      %v3019 = vadd.f32 0.0, %v3018
      %3020 = vmatmul.f32.gmra.mxu0 %v2999
      %v3021 = vpop.f32.mrf.mxu0
      %v3022 = vadd.f32 0.0, %v3021
      %3023 = vdwg.mxu0
      %v3025 = vsel %vm2232, %v2555, 0
      %v3028 = vsel %vm2232, %v2570, 0
      %3030 = vmatpush.msra.mxu0 0.0
      %3031 = vmatpush.msra.mxu0 0.0
      %3032 = vmatpush.msra.mxu0 0.0
      %3033 = vmatpush.msra.mxu0 0.0
      %3034 = vmatpush.msra.mxu0 0.0
      %3035 = vmatpush.msra.mxu0 0.0
      %3036 = vmatpush.msra.mxu0 0.0
      %3037 = vmatpush.msra.mxu0 0.0
      %3038 = vmatpush.msra.mxu0 0.0
      %3039 = vmatpush.msra.mxu0 0.0
      %3040 = vmatpush.msra.mxu0 0.0
      %3041 = vmatpush.msra.mxu0 0.0
      %3042 = vmatpush.msra.mxu0 0.0
      %3043 = vmatpush.msra.mxu0 0.0
      %3044 = vmatpush.msra.mxu0 %v1258
      %3045 = vmatpush.msra.mxu0 %v1257
      %3046 = vmatmul.f32.gmra.mxu0 %v3025
      %v3047 = vpop.f32.mrf.mxu0
      %v3048 = vadd.f32 0.0, %v3047
      %3049 = vmatmul.f32.gmra.mxu0 %v3028
      %v3050 = vpop.f32.mrf.mxu0
      %v3051 = vadd.f32 0.0, %v3050
      %3052 = vdwg.mxu0
      %v3054 = vsel %vm2232, %v2585, 0
      %v3057 = vsel %vm2232, %v2600, 0
      %3059 = vmatpush.msra.mxu0 0.0
      %3060 = vmatpush.msra.mxu0 0.0
      %3061 = vmatpush.msra.mxu0 0.0
      %3062 = vmatpush.msra.mxu0 0.0
      %3063 = vmatpush.msra.mxu0 0.0
      %3064 = vmatpush.msra.mxu0 0.0
      %3065 = vmatpush.msra.mxu0 0.0
      %3066 = vmatpush.msra.mxu0 0.0
      %3067 = vmatpush.msra.mxu0 0.0
      %3068 = vmatpush.msra.mxu0 0.0
      %3069 = vmatpush.msra.mxu0 0.0
      %3070 = vmatpush.msra.mxu0 0.0
      %3071 = vmatpush.msra.mxu0 0.0
      %3072 = vmatpush.msra.mxu0 0.0
      %3073 = vmatpush.msra.mxu0 %v1260
      %3074 = vmatpush.msra.mxu0 %v1259
      %3075 = vmatmul.f32.gmra.mxu0 %v3054
      %v3076 = vpop.f32.mrf.mxu0
      %v3077 = vadd.f32 0.0, %v3076
      %3078 = vmatmul.f32.gmra.mxu0 %v3057
      %v3079 = vpop.f32.mrf.mxu0
      %v3080 = vadd.f32 0.0, %v3079
      %3081 = vdwg.mxu0
      %v3083 = vsel %vm2232, %v2615, 0
      %v3086 = vsel %vm2232, %v2630, 0
      %3088 = vmatpush.msra.mxu0 0.0
      %3089 = vmatpush.msra.mxu0 0.0
      %3090 = vmatpush.msra.mxu0 0.0
      %3091 = vmatpush.msra.mxu0 0.0
      %3092 = vmatpush.msra.mxu0 0.0
      %3093 = vmatpush.msra.mxu0 0.0
      %3094 = vmatpush.msra.mxu0 0.0
      %3095 = vmatpush.msra.mxu0 0.0
      %3096 = vmatpush.msra.mxu0 0.0
      %3097 = vmatpush.msra.mxu0 0.0
      %3098 = vmatpush.msra.mxu0 0.0
      %3099 = vmatpush.msra.mxu0 0.0
      %3100 = vmatpush.msra.mxu0 0.0
      %3101 = vmatpush.msra.mxu0 0.0
      %3102 = vmatpush.msra.mxu0 %v1262
      %3103 = vmatpush.msra.mxu0 %v1261
      %3104 = vmatmul.f32.gmra.mxu0 %v3083
      %v3105 = vpop.f32.mrf.mxu0
      %v3106 = vadd.f32 0.0, %v3105
      %3107 = vmatmul.f32.gmra.mxu0 %v3086
      %v3108 = vpop.f32.mrf.mxu0
      %v3109 = vadd.f32 0.0, %v3108
      %3110 = vdwg.mxu0
      %v3112 = vsel %vm2232, %v2645, 0
      %v3115 = vsel %vm2232, %v2660, 0
      %3117 = vmatpush.msra.mxu0 0.0
      %3118 = vmatpush.msra.mxu0 0.0
      %3119 = vmatpush.msra.mxu0 0.0
      %3120 = vmatpush.msra.mxu0 0.0
      %3121 = vmatpush.msra.mxu0 0.0
      %3122 = vmatpush.msra.mxu0 0.0
      %3123 = vmatpush.msra.mxu0 0.0
      %3124 = vmatpush.msra.mxu0 0.0
      %3125 = vmatpush.msra.mxu0 0.0
      %3126 = vmatpush.msra.mxu0 0.0
      %3127 = vmatpush.msra.mxu0 0.0
      %3128 = vmatpush.msra.mxu0 0.0
      %3129 = vmatpush.msra.mxu0 0.0
      %3130 = vmatpush.msra.mxu0 0.0
      %3131 = vmatpush.msra.mxu0 %v1264
      %3132 = vmatpush.msra.mxu0 %v1263
      %3133 = vmatmul.f32.gmra.mxu0 %v3112
      %v3134 = vpop.f32.mrf.mxu0
      %v3135 = vadd.f32 0.0, %v3134
      %3136 = vmatmul.f32.gmra.mxu0 %v3115
      %v3137 = vpop.f32.mrf.mxu0
      %v3138 = vadd.f32 0.0, %v3137
      %3139 = vdwg.mxu0
      %v3141 = vsel %vm2232, %v2675, 0
      %v3144 = vsel %vm2232, %v2690, 0
      %3146 = vmatpush.msra.mxu0 0.0
      %3147 = vmatpush.msra.mxu0 0.0
      %3148 = vmatpush.msra.mxu0 0.0
      %3149 = vmatpush.msra.mxu0 0.0
      %3150 = vmatpush.msra.mxu0 0.0
      %3151 = vmatpush.msra.mxu0 0.0
      %3152 = vmatpush.msra.mxu0 0.0
      %3153 = vmatpush.msra.mxu0 0.0
      %3154 = vmatpush.msra.mxu0 0.0
      %3155 = vmatpush.msra.mxu0 0.0
      %3156 = vmatpush.msra.mxu0 0.0
      %3157 = vmatpush.msra.mxu0 0.0
      %3158 = vmatpush.msra.mxu0 0.0
      %3159 = vmatpush.msra.mxu0 0.0
      %3160 = vmatpush.msra.mxu0 %v1266
      %3161 = vmatpush.msra.mxu0 %v1265
      %3162 = vmatmul.f32.gmra.mxu0 %v3141
      %v3163 = vpop.f32.mrf.mxu0
      %v3164 = vadd.f32 0.0, %v3163
      %3165 = vmatmul.f32.gmra.mxu0 %v3144
      %v3166 = vpop.f32.mrf.mxu0
      %v3167 = vadd.f32 0.0, %v3166
      %3168 = vdwg.mxu0
      %v3170 = vsel %vm2232, %v2705, 0
      %v3173 = vsel %vm2232, %v2720, 0
      %3175 = vmatpush.msra.mxu0 0.0
      %3176 = vmatpush.msra.mxu0 0.0
      %3177 = vmatpush.msra.mxu0 0.0
      %3178 = vmatpush.msra.mxu0 0.0
      %3179 = vmatpush.msra.mxu0 0.0
      %3180 = vmatpush.msra.mxu0 0.0
      %3181 = vmatpush.msra.mxu0 0.0
      %3182 = vmatpush.msra.mxu0 0.0
      %3183 = vmatpush.msra.mxu0 0.0
      %3184 = vmatpush.msra.mxu0 0.0
      %3185 = vmatpush.msra.mxu0 0.0
      %3186 = vmatpush.msra.mxu0 0.0
      %3187 = vmatpush.msra.mxu0 0.0
      %3188 = vmatpush.msra.mxu0 0.0
      %3189 = vmatpush.msra.mxu0 %v1268
      %3190 = vmatpush.msra.mxu0 %v1267
      %3191 = vmatmul.f32.gmra.mxu0 %v3170
      %v3192 = vpop.f32.mrf.mxu0
      %v3193 = vadd.f32 0.0, %v3192
      %3194 = vmatmul.f32.gmra.mxu0 %v3173
      %v3195 = vpop.f32.mrf.mxu0
      %v3196 = vadd.f32 0.0, %v3195
      %3197 = vdwg.mxu0
      %v3199 = vsel %vm2232, %v2735, 0
      %v3202 = vsel %vm2232, %v2750, 0
      %3204 = vmatpush.msra.mxu0 0.0
      %3205 = vmatpush.msra.mxu0 0.0
      %3206 = vmatpush.msra.mxu0 0.0
      %3207 = vmatpush.msra.mxu0 0.0
      %3208 = vmatpush.msra.mxu0 0.0
      %3209 = vmatpush.msra.mxu0 0.0
      %3210 = vmatpush.msra.mxu0 0.0
      %3211 = vmatpush.msra.mxu0 0.0
      %3212 = vmatpush.msra.mxu0 0.0
      %3213 = vmatpush.msra.mxu0 0.0
      %3214 = vmatpush.msra.mxu0 0.0
      %3215 = vmatpush.msra.mxu0 0.0
      %3216 = vmatpush.msra.mxu0 0.0
      %3217 = vmatpush.msra.mxu0 0.0
      %3218 = vmatpush.msra.mxu0 %v1270
      %3219 = vmatpush.msra.mxu0 %v1269
      %3220 = vmatmul.f32.gmra.mxu0 %v3199
      %v3221 = vpop.f32.mrf.mxu0
      %v3222 = vadd.f32 0.0, %v3221
      %3223 = vmatmul.f32.gmra.mxu0 %v3202
      %v3224 = vpop.f32.mrf.mxu0
      %v3225 = vadd.f32 0.0, %v3224
      %3226 = vdwg.mxu0
      %v3228 = vsel %vm2232, %v2765, 0
      %v3231 = vsel %vm2232, %v2780, 0
      %3233 = vmatpush.msra.mxu0 0.0
      %3234 = vmatpush.msra.mxu0 0.0
      %3235 = vmatpush.msra.mxu0 0.0
      %3236 = vmatpush.msra.mxu0 0.0
      %3237 = vmatpush.msra.mxu0 0.0
      %3238 = vmatpush.msra.mxu0 0.0
      %3239 = vmatpush.msra.mxu0 0.0
      %3240 = vmatpush.msra.mxu0 0.0
      %3241 = vmatpush.msra.mxu0 0.0
      %3242 = vmatpush.msra.mxu0 0.0
      %3243 = vmatpush.msra.mxu0 0.0
      %3244 = vmatpush.msra.mxu0 0.0
      %3245 = vmatpush.msra.mxu0 0.0
      %3246 = vmatpush.msra.mxu0 0.0
      %3247 = vmatpush.msra.mxu0 %v1272
      %3248 = vmatpush.msra.mxu0 %v1271
      %3249 = vmatmul.f32.gmra.mxu0 %v3228
      %v3250 = vpop.f32.mrf.mxu0
      %v3251 = vadd.f32 0.0, %v3250
      %3252 = vmatmul.f32.gmra.mxu0 %v3231
      %v3253 = vpop.f32.mrf.mxu0
      %v3254 = vadd.f32 0.0, %v3253
      %3255 = vdwg.mxu0
      %v3257 = vsel %vm2232, %v2795, 0
      %v3260 = vsel %vm2232, %v2810, 0
      %3262 = vmatpush.msra.mxu0 0.0
      %3263 = vmatpush.msra.mxu0 0.0
      %3264 = vmatpush.msra.mxu0 0.0
      %3265 = vmatpush.msra.mxu0 0.0
      %3266 = vmatpush.msra.mxu0 0.0
      %3267 = vmatpush.msra.mxu0 0.0
      %3268 = vmatpush.msra.mxu0 0.0
      %3269 = vmatpush.msra.mxu0 0.0
      %3270 = vmatpush.msra.mxu0 0.0
      %3271 = vmatpush.msra.mxu0 0.0
      %3272 = vmatpush.msra.mxu0 0.0
      %3273 = vmatpush.msra.mxu0 0.0
      %3274 = vmatpush.msra.mxu0 0.0
      %3275 = vmatpush.msra.mxu0 0.0
      %3276 = vmatpush.msra.mxu0 %v1274
      %3277 = vmatpush.msra.mxu0 %v1273
      %3278 = vmatmul.f32.gmra.mxu0 %v3257
      %v3279 = vpop.f32.mrf.mxu0
      %v3280 = vadd.f32 0.0, %v3279
      %3281 = vmatmul.f32.gmra.mxu0 %v3260
      %v3282 = vpop.f32.mrf.mxu0
      %v3283 = vadd.f32 0.0, %v3282
      %3284 = vdwg.mxu0
      %v3286 = vsel %vm2232, %v2825, 0
      %v3289 = vsel %vm2232, %v2840, 0
      %3291 = vmatpush.msra.mxu0 0.0
      %3292 = vmatpush.msra.mxu0 0.0
      %3293 = vmatpush.msra.mxu0 0.0
      %3294 = vmatpush.msra.mxu0 0.0
      %3295 = vmatpush.msra.mxu0 0.0
      %3296 = vmatpush.msra.mxu0 0.0
      %3297 = vmatpush.msra.mxu0 0.0
      %3298 = vmatpush.msra.mxu0 0.0
      %3299 = vmatpush.msra.mxu0 0.0
      %3300 = vmatpush.msra.mxu0 0.0
      %3301 = vmatpush.msra.mxu0 0.0
      %3302 = vmatpush.msra.mxu0 0.0
      %3303 = vmatpush.msra.mxu0 0.0
      %3304 = vmatpush.msra.mxu0 0.0
      %3305 = vmatpush.msra.mxu0 %v1276
      %3306 = vmatpush.msra.mxu0 %v1275
      %3307 = vmatmul.f32.gmra.mxu0 %v3286
      %v3308 = vpop.f32.mrf.mxu0
      %v3309 = vadd.f32 0.0, %v3308
      %3310 = vmatmul.f32.gmra.mxu0 %v3289
      %v3311 = vpop.f32.mrf.mxu0
      %v3312 = vadd.f32 0.0, %v3311
      %3313 = vdwg.mxu0
      %vm3314 = vcmask 261120
      %v3316 = vsel %vm3314, %v1245, 0
      %v3319 = vsel %vm3314, %v1246, 0
      %v3322 = vsel %vm3314, %v1247, 0
      %v3325 = vsel %vm3314, %v1248, 0
      %v3328 = vsel %vm3314, %v1249, 0
      %v3331 = vsel %vm3314, %v1250, 0
      %v3334 = vsel %vm3314, %v1251, 0
      %v3337 = vsel %vm3314, %v1252, 0
      %v3340 = vsel %vm3314, %v1253, 0
      %v3343 = vsel %vm3314, %v1254, 0
      %v3346 = vsel %vm3314, %v1255, 0
      %v3349 = vsel %vm3314, %v1256, 0
      %v3352 = vsel %vm3314, %v1257, 0
      %v3355 = vsel %vm3314, %v1258, 0
      %v3358 = vsel %vm3314, %v1259, 0
      %v3361 = vsel %vm3314, %v1260, 0
      %v3364 = vsel %vm3314, %v1261, 0
      %v3367 = vsel %vm3314, %v1262, 0
      %v3370 = vsel %vm3314, %v1263, 0
      %v3373 = vsel %vm3314, %v1264, 0
      %v3376 = vsel %vm3314, %v1265, 0
      %v3379 = vsel %vm3314, %v1266, 0
      %v3382 = vsel %vm3314, %v1267, 0
      %v3385 = vsel %vm3314, %v1268, 0
      %v3388 = vsel %vm3314, %v1269, 0
      %v3391 = vsel %vm3314, %v1270, 0
      %v3394 = vsel %vm3314, %v1271, 0
      %v3397 = vsel %vm3314, %v1272, 0
      %v3400 = vsel %vm3314, %v1273, 0
      %v3403 = vsel %vm3314, %v1274, 0
      %v3406 = vsel %vm3314, %v1275, 0
      %v3409 = vsel %vm3314, %v1276, 0
      %3411 = vmatpush.msra.mxu0 0.0
      %3412 = vmatpush.msra.mxu0 0.0
      %3413 = vmatpush.msra.mxu0 0.0
      %3414 = vmatpush.msra.mxu0 0.0
      %3415 = vmatpush.msra.mxu0 0.0
      %3416 = vmatpush.msra.mxu0 0.0
      %3417 = vmatpush.msra.mxu0 0.0
      %3418 = vmatpush.msra.mxu0 0.0
      %3419 = vmatpush.msra.mxu0 0.0
      %3420 = vmatpush.msra.mxu0 0.0
      %3421 = vmatpush.msra.mxu0 0.0
      %3422 = vmatpush.msra.mxu0 0.0
      %3423 = vmatpush.msra.mxu0 %v2848
      %3424 = vmatpush.msra.mxu0 %v2847
      %3425 = vmatpush.msra.mxu0 %v2846
      %3426 = vmatpush.msra.mxu0 %v2845
      %3427 = vmatmul.f32.gmra.mxu0 %v3316
      %v3428 = vpop.f32.mrf.mxu0
      %v3429 = vadd.f32 0.0, %v3428
      %3430 = vmatmul.f32.gmra.mxu0 %v3319
      %v3431 = vpop.f32.mrf.mxu0
      %v3432 = vadd.f32 0.0, %v3431
      %3433 = vmatmul.f32.gmra.mxu0 %v3322
      %v3434 = vpop.f32.mrf.mxu0
      %v3435 = vadd.f32 0.0, %v3434
      %3436 = vmatmul.f32.gmra.mxu0 %v3325
      %v3437 = vpop.f32.mrf.mxu0
      %v3438 = vadd.f32 0.0, %v3437
      %3439 = vmatmul.f32.gmra.mxu0 %v3328
      %v3440 = vpop.f32.mrf.mxu0
      %v3441 = vadd.f32 0.0, %v3440
      %3442 = vmatmul.f32.gmra.mxu0 %v3331
      %v3443 = vpop.f32.mrf.mxu0
      %v3444 = vadd.f32 0.0, %v3443
      %3445 = vmatmul.f32.gmra.mxu0 %v3334
      %v3446 = vpop.f32.mrf.mxu0
      %v3447 = vadd.f32 0.0, %v3446
      %3448 = vmatmul.f32.gmra.mxu0 %v3337
      %v3449 = vpop.f32.mrf.mxu0
      %v3450 = vadd.f32 0.0, %v3449
      %3451 = vmatmul.f32.gmra.mxu0 %v3340
      %v3452 = vpop.f32.mrf.mxu0
      %v3453 = vadd.f32 0.0, %v3452
      %3454 = vmatmul.f32.gmra.mxu0 %v3343
      %v3455 = vpop.f32.mrf.mxu0
      %v3456 = vadd.f32 0.0, %v3455
      %3457 = vmatmul.f32.gmra.mxu0 %v3346
      %v3458 = vpop.f32.mrf.mxu0
      %v3459 = vadd.f32 0.0, %v3458
      %3460 = vmatmul.f32.gmra.mxu0 %v3349
      %v3461 = vpop.f32.mrf.mxu0
      %v3462 = vadd.f32 0.0, %v3461
      %3463 = vmatmul.f32.gmra.mxu0 %v3352
      %v3464 = vpop.f32.mrf.mxu0
      %v3465 = vadd.f32 0.0, %v3464
      %3466 = vmatmul.f32.gmra.mxu0 %v3355
      %v3467 = vpop.f32.mrf.mxu0
      %v3468 = vadd.f32 0.0, %v3467
      %3469 = vmatmul.f32.gmra.mxu0 %v3358
      %v3470 = vpop.f32.mrf.mxu0
      %v3471 = vadd.f32 0.0, %v3470
      %3472 = vmatmul.f32.gmra.mxu0 %v3361
      %v3473 = vpop.f32.mrf.mxu0
      %v3474 = vadd.f32 0.0, %v3473
      %3475 = vmatmul.f32.gmra.mxu0 %v3364
      %v3476 = vpop.f32.mrf.mxu0
      %v3477 = vadd.f32 0.0, %v3476
      %3478 = vmatmul.f32.gmra.mxu0 %v3367
      %v3479 = vpop.f32.mrf.mxu0
      %v3480 = vadd.f32 0.0, %v3479
      %3481 = vmatmul.f32.gmra.mxu0 %v3370
      %v3482 = vpop.f32.mrf.mxu0
      %v3483 = vadd.f32 0.0, %v3482
      %3484 = vmatmul.f32.gmra.mxu0 %v3373
      %v3485 = vpop.f32.mrf.mxu0
      %v3486 = vadd.f32 0.0, %v3485
      %3487 = vmatmul.f32.gmra.mxu0 %v3376
      %v3488 = vpop.f32.mrf.mxu0
      %v3489 = vadd.f32 0.0, %v3488
      %3490 = vmatmul.f32.gmra.mxu0 %v3379
      %v3491 = vpop.f32.mrf.mxu0
      %v3492 = vadd.f32 0.0, %v3491
      %3493 = vmatmul.f32.gmra.mxu0 %v3382
      %v3494 = vpop.f32.mrf.mxu0
      %v3495 = vadd.f32 0.0, %v3494
      %3496 = vmatmul.f32.gmra.mxu0 %v3385
      %v3497 = vpop.f32.mrf.mxu0
      %v3498 = vadd.f32 0.0, %v3497
      %3499 = vmatmul.f32.gmra.mxu0 %v3388
      %v3500 = vpop.f32.mrf.mxu0
      %v3501 = vadd.f32 0.0, %v3500
      %3502 = vmatmul.f32.gmra.mxu0 %v3391
      %v3503 = vpop.f32.mrf.mxu0
      %v3504 = vadd.f32 0.0, %v3503
      %3505 = vmatmul.f32.gmra.mxu0 %v3394
      %v3506 = vpop.f32.mrf.mxu0
      %v3507 = vadd.f32 0.0, %v3506
      %3508 = vmatmul.f32.gmra.mxu0 %v3397
      %v3509 = vpop.f32.mrf.mxu0
      %v3510 = vadd.f32 0.0, %v3509
      %3511 = vmatmul.f32.gmra.mxu0 %v3400
      %v3512 = vpop.f32.mrf.mxu0
      %v3513 = vadd.f32 0.0, %v3512
      %3514 = vmatmul.f32.gmra.mxu0 %v3403
      %v3515 = vpop.f32.mrf.mxu0
      %v3516 = vadd.f32 0.0, %v3515
      %3517 = vmatmul.f32.gmra.mxu0 %v3406
      %v3518 = vpop.f32.mrf.mxu0
      %v3519 = vadd.f32 0.0, %v3518
      %3520 = vmatmul.f32.gmra.mxu0 %v3409
      %v3521 = vpop.f32.mrf.mxu0
      %v3522 = vadd.f32 0.0, %v3521
      %3523 = vdwg.mxu0
      %v3525 = vsel %vm3314, %v2874, 0
      %v3528 = vsel %vm3314, %v2877, 0
      %v3531 = vsel %vm3314, %v2903, 0
      %v3534 = vsel %vm3314, %v2906, 0
      %v3537 = vsel %vm3314, %v2932, 0
      %v3540 = vsel %vm3314, %v2935, 0
      %v3543 = vsel %vm3314, %v2961, 0
      %v3546 = vsel %vm3314, %v2964, 0
      %v3549 = vsel %vm3314, %v2990, 0
      %v3552 = vsel %vm3314, %v2993, 0
      %v3555 = vsel %vm3314, %v3019, 0
      %v3558 = vsel %vm3314, %v3022, 0
      %v3561 = vsel %vm3314, %v3048, 0
      %v3564 = vsel %vm3314, %v3051, 0
      %v3567 = vsel %vm3314, %v3077, 0
      %v3570 = vsel %vm3314, %v3080, 0
      %v3573 = vsel %vm3314, %v3106, 0
      %v3576 = vsel %vm3314, %v3109, 0
      %v3579 = vsel %vm3314, %v3135, 0
      %v3582 = vsel %vm3314, %v3138, 0
      %v3585 = vsel %vm3314, %v3164, 0
      %v3588 = vsel %vm3314, %v3167, 0
      %v3591 = vsel %vm3314, %v3193, 0
      %v3594 = vsel %vm3314, %v3196, 0
      %v3597 = vsel %vm3314, %v3222, 0
      %v3600 = vsel %vm3314, %v3225, 0
      %v3603 = vsel %vm3314, %v3251, 0
      %v3606 = vsel %vm3314, %v3254, 0
      %v3609 = vsel %vm3314, %v3280, 0
      %v3612 = vsel %vm3314, %v3283, 0
      %v3615 = vsel %vm3314, %v3309, 0
      %v3618 = vsel %vm3314, %v3312, 0
      %3620 = vmatpush.msra.mxu0 0.0
      %3621 = vmatpush.msra.mxu0 0.0
      %3622 = vmatpush.msra.mxu0 0.0
      %3623 = vmatpush.msra.mxu0 0.0
      %3624 = vmatpush.msra.mxu0 0.0
      %3625 = vmatpush.msra.mxu0 0.0
      %3626 = vmatpush.msra.mxu0 0.0
      %3627 = vmatpush.msra.mxu0 0.0
      %3628 = vmatpush.msra.mxu0 0.0
      %3629 = vmatpush.msra.mxu0 0.0
      %3630 = vmatpush.msra.mxu0 0.0
      %3631 = vmatpush.msra.mxu0 0.0
      %3632 = vmatpush.msra.mxu0 %v2844
      %3633 = vmatpush.msra.mxu0 %v2843
      %3634 = vmatpush.msra.mxu0 %v2842
      %3635 = vmatpush.msra.mxu0 %v2841
      %3636 = vmatmul.f32.gmra.mxu0 %v3525
      %v3637 = vpop.f32.mrf.mxu0
      %v3638 = vadd.f32 %v3429, %v3637
      %3639 = vmatmul.f32.gmra.mxu0 %v3528
      %v3640 = vpop.f32.mrf.mxu0
      %v3641 = vadd.f32 %v3432, %v3640
      %3642 = vmatmul.f32.gmra.mxu0 %v3531
      %v3643 = vpop.f32.mrf.mxu0
      %v3644 = vadd.f32 %v3435, %v3643
      %3645 = vmatmul.f32.gmra.mxu0 %v3534
      %v3646 = vpop.f32.mrf.mxu0
      %v3647 = vadd.f32 %v3438, %v3646
      %3648 = vmatmul.f32.gmra.mxu0 %v3537
      %v3649 = vpop.f32.mrf.mxu0
      %v3650 = vadd.f32 %v3441, %v3649
      %3651 = vmatmul.f32.gmra.mxu0 %v3540
      %v3652 = vpop.f32.mrf.mxu0
      %v3653 = vadd.f32 %v3444, %v3652
      %3654 = vmatmul.f32.gmra.mxu0 %v3543
      %v3655 = vpop.f32.mrf.mxu0
      %v3656 = vadd.f32 %v3447, %v3655
      %3657 = vmatmul.f32.gmra.mxu0 %v3546
      %v3658 = vpop.f32.mrf.mxu0
      %v3659 = vadd.f32 %v3450, %v3658
      %3660 = vmatmul.f32.gmra.mxu0 %v3549
      %v3661 = vpop.f32.mrf.mxu0
      %v3662 = vadd.f32 %v3453, %v3661
      %3663 = vmatmul.f32.gmra.mxu0 %v3552
      %v3664 = vpop.f32.mrf.mxu0
      %v3665 = vadd.f32 %v3456, %v3664
      %3666 = vmatmul.f32.gmra.mxu0 %v3555
      %v3667 = vpop.f32.mrf.mxu0
      %v3668 = vadd.f32 %v3459, %v3667
      %3669 = vmatmul.f32.gmra.mxu0 %v3558
      %v3670 = vpop.f32.mrf.mxu0
      %v3671 = vadd.f32 %v3462, %v3670
      %3672 = vmatmul.f32.gmra.mxu0 %v3561
      %v3673 = vpop.f32.mrf.mxu0
      %v3674 = vadd.f32 %v3465, %v3673
      %3675 = vmatmul.f32.gmra.mxu0 %v3564
      %v3676 = vpop.f32.mrf.mxu0
      %v3677 = vadd.f32 %v3468, %v3676
      %3678 = vmatmul.f32.gmra.mxu0 %v3567
      %v3679 = vpop.f32.mrf.mxu0
      %v3680 = vadd.f32 %v3471, %v3679
      %3681 = vmatmul.f32.gmra.mxu0 %v3570
      %v3682 = vpop.f32.mrf.mxu0
      %v3683 = vadd.f32 %v3474, %v3682
      %3684 = vmatmul.f32.gmra.mxu0 %v3573
      %v3685 = vpop.f32.mrf.mxu0
      %v3686 = vadd.f32 %v3477, %v3685
      %3687 = vmatmul.f32.gmra.mxu0 %v3576
      %v3688 = vpop.f32.mrf.mxu0
      %v3689 = vadd.f32 %v3480, %v3688
      %3690 = vmatmul.f32.gmra.mxu0 %v3579
      %v3691 = vpop.f32.mrf.mxu0
      %v3692 = vadd.f32 %v3483, %v3691
      %3693 = vmatmul.f32.gmra.mxu0 %v3582
      %v3694 = vpop.f32.mrf.mxu0
      %v3695 = vadd.f32 %v3486, %v3694
      %3696 = vmatmul.f32.gmra.mxu0 %v3585
      %v3697 = vpop.f32.mrf.mxu0
      %v3698 = vadd.f32 %v3489, %v3697
      %3699 = vmatmul.f32.gmra.mxu0 %v3588
      %v3700 = vpop.f32.mrf.mxu0
      %v3701 = vadd.f32 %v3492, %v3700
      %3702 = vmatmul.f32.gmra.mxu0 %v3591
      %v3703 = vpop.f32.mrf.mxu0
      %v3704 = vadd.f32 %v3495, %v3703
      %3705 = vmatmul.f32.gmra.mxu0 %v3594
      %v3706 = vpop.f32.mrf.mxu0
      %v3707 = vadd.f32 %v3498, %v3706
      %3708 = vmatmul.f32.gmra.mxu0 %v3597
      %v3709 = vpop.f32.mrf.mxu0
      %v3710 = vadd.f32 %v3501, %v3709
      %3711 = vmatmul.f32.gmra.mxu0 %v3600
      %v3712 = vpop.f32.mrf.mxu0
      %v3713 = vadd.f32 %v3504, %v3712
      %3714 = vmatmul.f32.gmra.mxu0 %v3603
      %v3715 = vpop.f32.mrf.mxu0
      %v3716 = vadd.f32 %v3507, %v3715
      %3717 = vmatmul.f32.gmra.mxu0 %v3606
      %v3718 = vpop.f32.mrf.mxu0
      %v3719 = vadd.f32 %v3510, %v3718
      %3720 = vmatmul.f32.gmra.mxu0 %v3609
      %v3721 = vpop.f32.mrf.mxu0
      %v3722 = vadd.f32 %v3513, %v3721
      %3723 = vmatmul.f32.gmra.mxu0 %v3612
      %v3724 = vpop.f32.mrf.mxu0
      %v3725 = vadd.f32 %v3516, %v3724
      %3726 = vmatmul.f32.gmra.mxu0 %v3615
      %v3727 = vpop.f32.mrf.mxu0
      %v3728 = vadd.f32 %v3519, %v3727
      %3729 = vmatmul.f32.gmra.mxu0 %v3618
      %v3730 = vpop.f32.mrf.mxu0
      %v3731 = vadd.f32 %v3522, %v3730
      %3732 = vdwg.mxu0
      %v3733 = vperm.slane %v2849, 0
      %v3734 = vadd.f32 %v3638, %v3733
      %v3735 = vadd.f32 %v3641, %v3733
      %v3736 = vadd.f32 %v3644, %v3733
      %v3737 = vadd.f32 %v3647, %v3733
      %v3738 = vadd.f32 %v3650, %v3733
      %v3739 = vadd.f32 %v3653, %v3733
      %v3740 = vadd.f32 %v3656, %v3733
      %v3741 = vadd.f32 %v3659, %v3733
      %v3742 = vadd.f32 %v3662, %v3733
      %v3743 = vadd.f32 %v3665, %v3733
      %v3744 = vadd.f32 %v3668, %v3733
      %v3745 = vadd.f32 %v3671, %v3733
      %v3746 = vadd.f32 %v3674, %v3733
      %v3747 = vadd.f32 %v3677, %v3733
      %v3748 = vadd.f32 %v3680, %v3733
      %v3749 = vadd.f32 %v3683, %v3733
      %v3750 = vadd.f32 %v3686, %v3733
      %v3751 = vadd.f32 %v3689, %v3733
      %v3752 = vadd.f32 %v3692, %v3733
      %v3753 = vadd.f32 %v3695, %v3733
      %v3754 = vadd.f32 %v3698, %v3733
      %v3755 = vadd.f32 %v3701, %v3733
      %v3756 = vadd.f32 %v3704, %v3733
      %v3757 = vadd.f32 %v3707, %v3733
      %v3758 = vadd.f32 %v3710, %v3733
      %v3759 = vadd.f32 %v3713, %v3733
      %v3760 = vadd.f32 %v3716, %v3733
      %v3761 = vadd.f32 %v3719, %v3733
      %v3762 = vadd.f32 %v3722, %v3733
      %v3763 = vadd.f32 %v3725, %v3733
      %v3764 = vadd.f32 %v3728, %v3733
      %v3765 = vadd.f32 %v3731, %v3733
      %v3766 = vmul.f32 %v3734, %v3734
      %v3767 = vmul.f32 %v3735, %v3735
      %v3768 = vmul.f32 %v3736, %v3736
      %v3769 = vmul.f32 %v3737, %v3737
      %v3770 = vmul.f32 %v3738, %v3738
      %v3771 = vmul.f32 %v3739, %v3739
      %v3772 = vmul.f32 %v3740, %v3740
      %v3773 = vmul.f32 %v3741, %v3741
      %v3774 = vmul.f32 %v3742, %v3742
      %v3775 = vmul.f32 %v3743, %v3743
      %v3776 = vmul.f32 %v3744, %v3744
      %v3777 = vmul.f32 %v3745, %v3745
      %v3778 = vmul.f32 %v3746, %v3746
      %v3779 = vmul.f32 %v3747, %v3747
      %v3780 = vmul.f32 %v3748, %v3748
      %v3781 = vmul.f32 %v3749, %v3749
      %v3782 = vmul.f32 %v3750, %v3750
      %v3783 = vmul.f32 %v3751, %v3751
      %v3784 = vmul.f32 %v3752, %v3752
      %v3785 = vmul.f32 %v3753, %v3753
      %v3786 = vmul.f32 %v3754, %v3754
      %v3787 = vmul.f32 %v3755, %v3755
      %v3788 = vmul.f32 %v3756, %v3756
      %v3789 = vmul.f32 %v3757, %v3757
      %v3790 = vmul.f32 %v3758, %v3758
      %v3791 = vmul.f32 %v3759, %v3759
      %v3792 = vmul.f32 %v3760, %v3760
      %v3793 = vmul.f32 %v3761, %v3761
      %v3794 = vmul.f32 %v3762, %v3762
      %v3795 = vmul.f32 %v3763, %v3763
      %v3796 = vmul.f32 %v3764, %v3764
      %v3797 = vmul.f32 %v3765, %v3765
      %v3798 = vmul.f32 %v3734, %v3766
      %v3799 = vmul.f32 %v3735, %v3767
      %v3800 = vmul.f32 %v3736, %v3768
      %v3801 = vmul.f32 %v3737, %v3769
      %v3802 = vmul.f32 %v3738, %v3770
      %v3803 = vmul.f32 %v3739, %v3771
      %v3804 = vmul.f32 %v3740, %v3772
      %v3805 = vmul.f32 %v3741, %v3773
      %v3806 = vmul.f32 %v3742, %v3774
      %v3807 = vmul.f32 %v3743, %v3775
      %v3808 = vmul.f32 %v3744, %v3776
      %v3809 = vmul.f32 %v3745, %v3777
      %v3810 = vmul.f32 %v3746, %v3778
      %v3811 = vmul.f32 %v3747, %v3779
      %v3812 = vmul.f32 %v3748, %v3780
      %v3813 = vmul.f32 %v3749, %v3781
      %v3814 = vmul.f32 %v3750, %v3782
      %v3815 = vmul.f32 %v3751, %v3783
      %v3816 = vmul.f32 %v3752, %v3784
      %v3817 = vmul.f32 %v3753, %v3785
      %v3818 = vmul.f32 %v3754, %v3786
      %v3819 = vmul.f32 %v3755, %v3787
      %v3820 = vmul.f32 %v3756, %v3788
      %v3821 = vmul.f32 %v3757, %v3789
      %v3822 = vmul.f32 %v3758, %v3790
      %v3823 = vmul.f32 %v3759, %v3791
      %v3824 = vmul.f32 %v3760, %v3792
      %v3825 = vmul.f32 %v3761, %v3793
      %v3826 = vmul.f32 %v3762, %v3794
      %v3827 = vmul.f32 %v3763, %v3795
      %v3828 = vmul.f32 %v3764, %v3796
      %v3829 = vmul.f32 %v3765, %v3797
      %v3830 = vmul.f32 %v3798, 0.044715
      %v3831 = vmul.f32 %v3799, 0.044715
      %v3832 = vmul.f32 %v3800, 0.044715
      %v3833 = vmul.f32 %v3801, 0.044715
      %v3834 = vmul.f32 %v3802, 0.044715
      %v3835 = vmul.f32 %v3803, 0.044715
      %v3836 = vmul.f32 %v3804, 0.044715
      %v3837 = vmul.f32 %v3805, 0.044715
      %v3838 = vmul.f32 %v3806, 0.044715
      %v3839 = vmul.f32 %v3807, 0.044715
      %v3840 = vmul.f32 %v3808, 0.044715
      %v3841 = vmul.f32 %v3809, 0.044715
      %v3842 = vmul.f32 %v3810, 0.044715
      %v3843 = vmul.f32 %v3811, 0.044715
      %v3844 = vmul.f32 %v3812, 0.044715
      %v3845 = vmul.f32 %v3813, 0.044715
      %v3846 = vmul.f32 %v3814, 0.044715
      %v3847 = vmul.f32 %v3815, 0.044715
      %v3848 = vmul.f32 %v3816, 0.044715
      %v3849 = vmul.f32 %v3817, 0.044715
      %v3850 = vmul.f32 %v3818, 0.044715
      %v3851 = vmul.f32 %v3819, 0.044715
      %v3852 = vmul.f32 %v3820, 0.044715
      %v3853 = vmul.f32 %v3821, 0.044715
      %v3854 = vmul.f32 %v3822, 0.044715
      %v3855 = vmul.f32 %v3823, 0.044715
      %v3856 = vmul.f32 %v3824, 0.044715
      %v3857 = vmul.f32 %v3825, 0.044715
      %v3858 = vmul.f32 %v3826, 0.044715
      %v3859 = vmul.f32 %v3827, 0.044715
      %v3860 = vmul.f32 %v3828, 0.044715
      %v3861 = vmul.f32 %v3829, 0.044715
      %v3862 = vadd.f32 %v3734, %v3830
      %v3863 = vadd.f32 %v3735, %v3831
      %v3864 = vadd.f32 %v3736, %v3832
      %v3865 = vadd.f32 %v3737, %v3833
      %v3866 = vadd.f32 %v3738, %v3834
      %v3867 = vadd.f32 %v3739, %v3835
      %v3868 = vadd.f32 %v3740, %v3836
      %v3869 = vadd.f32 %v3741, %v3837
      %v3870 = vadd.f32 %v3742, %v3838
      %v3871 = vadd.f32 %v3743, %v3839
      %v3872 = vadd.f32 %v3744, %v3840
      %v3873 = vadd.f32 %v3745, %v3841
      %v3874 = vadd.f32 %v3746, %v3842
      %v3875 = vadd.f32 %v3747, %v3843
      %v3876 = vadd.f32 %v3748, %v3844
      %v3877 = vadd.f32 %v3749, %v3845
      %v3878 = vadd.f32 %v3750, %v3846
      %v3879 = vadd.f32 %v3751, %v3847
      %v3880 = vadd.f32 %v3752, %v3848
      %v3881 = vadd.f32 %v3753, %v3849
      %v3882 = vadd.f32 %v3754, %v3850
      %v3883 = vadd.f32 %v3755, %v3851
      %v3884 = vadd.f32 %v3756, %v3852
      %v3885 = vadd.f32 %v3757, %v3853
      %v3886 = vadd.f32 %v3758, %v3854
      %v3887 = vadd.f32 %v3759, %v3855
      %v3888 = vadd.f32 %v3760, %v3856
      %v3889 = vadd.f32 %v3761, %v3857
      %v3890 = vadd.f32 %v3762, %v3858
      %v3891 = vadd.f32 %v3763, %v3859
      %v3892 = vadd.f32 %v3764, %v3860
      %v3893 = vadd.f32 %v3765, %v3861
      %v3894 = vmul.f32 %v3862, 0.7978846
      %v3895 = vmul.f32 %v3863, 0.7978846
      %v3896 = vmul.f32 %v3864, 0.7978846
      %v3897 = vmul.f32 %v3865, 0.7978846
      %v3898 = vmul.f32 %v3866, 0.7978846
      %v3899 = vmul.f32 %v3867, 0.7978846
      %v3900 = vmul.f32 %v3868, 0.7978846
      %v3901 = vmul.f32 %v3869, 0.7978846
      %v3902 = vmul.f32 %v3870, 0.7978846
      %v3903 = vmul.f32 %v3871, 0.7978846
      %v3904 = vmul.f32 %v3872, 0.7978846
      %v3905 = vmul.f32 %v3873, 0.7978846
      %v3906 = vmul.f32 %v3874, 0.7978846
      %v3907 = vmul.f32 %v3875, 0.7978846
      %v3908 = vmul.f32 %v3876, 0.7978846
      %v3909 = vmul.f32 %v3877, 0.7978846
      %v3910 = vmul.f32 %v3878, 0.7978846
      %v3911 = vmul.f32 %v3879, 0.7978846
      %v3912 = vmul.f32 %v3880, 0.7978846
      %v3913 = vmul.f32 %v3881, 0.7978846
      %v3914 = vmul.f32 %v3882, 0.7978846
      %v3915 = vmul.f32 %v3883, 0.7978846
      %v3916 = vmul.f32 %v3884, 0.7978846
      %v3917 = vmul.f32 %v3885, 0.7978846
      %v3918 = vmul.f32 %v3886, 0.7978846
      %v3919 = vmul.f32 %v3887, 0.7978846
      %v3920 = vmul.f32 %v3888, 0.7978846
      %v3921 = vmul.f32 %v3889, 0.7978846
      %v3922 = vmul.f32 %v3890, 0.7978846
      %v3923 = vmul.f32 %v3891, 0.7978846
      %v3924 = vmul.f32 %v3892, 0.7978846
      %v3925 = vmul.f32 %v3893, 0.7978846
      %v3926 = vtanh.pop %v3894
      %v3927 = vtanh.pop %v3895
      %v3928 = vtanh.pop %v3896
      %v3929 = vtanh.pop %v3897
      %v3930 = vtanh.pop %v3898
      %v3931 = vtanh.pop %v3899
      %v3932 = vtanh.pop %v3900
      %v3933 = vtanh.pop %v3901
      %v3934 = vtanh.pop %v3902
      %v3935 = vtanh.pop %v3903
      %v3936 = vtanh.pop %v3904
      %v3937 = vtanh.pop %v3905
      %v3938 = vtanh.pop %v3906
      %v3939 = vtanh.pop %v3907
      %v3940 = vtanh.pop %v3908
      %v3941 = vtanh.pop %v3909
      %v3942 = vtanh.pop %v3910
      %v3943 = vtanh.pop %v3911
      %v3944 = vtanh.pop %v3912
      %v3945 = vtanh.pop %v3913
      %v3946 = vtanh.pop %v3914
      %v3947 = vtanh.pop %v3915
      %v3948 = vtanh.pop %v3916
      %v3949 = vtanh.pop %v3917
      %v3950 = vtanh.pop %v3918
      %v3951 = vtanh.pop %v3919
      %v3952 = vtanh.pop %v3920
      %v3953 = vtanh.pop %v3921
      %v3954 = vtanh.pop %v3922
      %v3955 = vtanh.pop %v3923
      %v3956 = vtanh.pop %v3924
      %v3957 = vtanh.pop %v3925
      %v3958 = vadd.f32 %v3926, 1.0
      %v3959 = vadd.f32 %v3927, 1.0
      %v3960 = vadd.f32 %v3928, 1.0
      %v3961 = vadd.f32 %v3929, 1.0
      %v3962 = vadd.f32 %v3930, 1.0
      %v3963 = vadd.f32 %v3931, 1.0
      %v3964 = vadd.f32 %v3932, 1.0
      %v3965 = vadd.f32 %v3933, 1.0
      %v3966 = vadd.f32 %v3934, 1.0
      %v3967 = vadd.f32 %v3935, 1.0
      %v3968 = vadd.f32 %v3936, 1.0
      %v3969 = vadd.f32 %v3937, 1.0
      %v3970 = vadd.f32 %v3938, 1.0
      %v3971 = vadd.f32 %v3939, 1.0
      %v3972 = vadd.f32 %v3940, 1.0
      %v3973 = vadd.f32 %v3941, 1.0
      %v3974 = vadd.f32 %v3942, 1.0
      %v3975 = vadd.f32 %v3943, 1.0
      %v3976 = vadd.f32 %v3944, 1.0
      %v3977 = vadd.f32 %v3945, 1.0
      %v3978 = vadd.f32 %v3946, 1.0
      %v3979 = vadd.f32 %v3947, 1.0
      %v3980 = vadd.f32 %v3948, 1.0
      %v3981 = vadd.f32 %v3949, 1.0
      %v3982 = vadd.f32 %v3950, 1.0
      %v3983 = vadd.f32 %v3951, 1.0
      %v3984 = vadd.f32 %v3952, 1.0
      %v3985 = vadd.f32 %v3953, 1.0
      %v3986 = vadd.f32 %v3954, 1.0
      %v3987 = vadd.f32 %v3955, 1.0
      %v3988 = vadd.f32 %v3956, 1.0
      %v3989 = vadd.f32 %v3957, 1.0
      %v3990 = vmul.f32 %v3958, 0.5
      %v3991 = vmul.f32 %v3959, 0.5
      %v3992 = vmul.f32 %v3960, 0.5
      %v3993 = vmul.f32 %v3961, 0.5
      %v3994 = vmul.f32 %v3962, 0.5
      %v3995 = vmul.f32 %v3963, 0.5
      %v3996 = vmul.f32 %v3964, 0.5
      %v3997 = vmul.f32 %v3965, 0.5
      %v3998 = vmul.f32 %v3966, 0.5
      %v3999 = vmul.f32 %v3967, 0.5
      %v4000 = vmul.f32 %v3968, 0.5
      %v4001 = vmul.f32 %v3969, 0.5
      %v4002 = vmul.f32 %v3970, 0.5
      %v4003 = vmul.f32 %v3971, 0.5
      %v4004 = vmul.f32 %v3972, 0.5
      %v4005 = vmul.f32 %v3973, 0.5
      %v4006 = vmul.f32 %v3974, 0.5
      %v4007 = vmul.f32 %v3975, 0.5
      %v4008 = vmul.f32 %v3976, 0.5
      %v4009 = vmul.f32 %v3977, 0.5
      %v4010 = vmul.f32 %v3978, 0.5
      %v4011 = vmul.f32 %v3979, 0.5
      %v4012 = vmul.f32 %v3980, 0.5
      %v4013 = vmul.f32 %v3981, 0.5
      %v4014 = vmul.f32 %v3982, 0.5
      %v4015 = vmul.f32 %v3983, 0.5
      %v4016 = vmul.f32 %v3984, 0.5
      %v4017 = vmul.f32 %v3985, 0.5
      %v4018 = vmul.f32 %v3986, 0.5
      %v4019 = vmul.f32 %v3987, 0.5
      %v4020 = vmul.f32 %v3988, 0.5
      %v4021 = vmul.f32 %v3989, 0.5
      %v4022 = vmul.f32 %v3734, %v3990
      %v4023 = vmul.f32 %v3735, %v3991
      %v4024 = vmul.f32 %v3736, %v3992
      %v4025 = vmul.f32 %v3737, %v3993
      %v4026 = vmul.f32 %v3738, %v3994
      %v4027 = vmul.f32 %v3739, %v3995
      %v4028 = vmul.f32 %v3740, %v3996
      %v4029 = vmul.f32 %v3741, %v3997
      %v4030 = vmul.f32 %v3742, %v3998
      %v4031 = vmul.f32 %v3743, %v3999
      %v4032 = vmul.f32 %v3744, %v4000
      %v4033 = vmul.f32 %v3745, %v4001
      %v4034 = vmul.f32 %v3746, %v4002
      %v4035 = vmul.f32 %v3747, %v4003
      %v4036 = vmul.f32 %v3748, %v4004
      %v4037 = vmul.f32 %v3749, %v4005
      %v4038 = vmul.f32 %v3750, %v4006
      %v4039 = vmul.f32 %v3751, %v4007
      %v4040 = vmul.f32 %v3752, %v4008
      %v4041 = vmul.f32 %v3753, %v4009
      %v4042 = vmul.f32 %v3754, %v4010
      %v4043 = vmul.f32 %v3755, %v4011
      %v4044 = vmul.f32 %v3756, %v4012
      %v4045 = vmul.f32 %v3757, %v4013
      %v4046 = vmul.f32 %v3758, %v4014
      %v4047 = vmul.f32 %v3759, %v4015
      %v4048 = vmul.f32 %v3760, %v4016
      %v4049 = vmul.f32 %v3761, %v4017
      %v4050 = vmul.f32 %v3762, %v4018
      %v4051 = vmul.f32 %v3763, %v4019
      %v4052 = vmul.f32 %v3764, %v4020
      %v4053 = vmul.f32 %v3765, %v4021
      %s4054 = scalar_lea.vmem %s7, 64
      %v4055 = vld [vmem:[%s4054] sm:$0xff]
      %v4056 = vld [vmem:[%s4054 + $0x8] sm:$0xff]
      %v4057 = vld [vmem:[%s4054 + $0x10] sm:$0xff]
      %v4058 = vld [vmem:[%s4054 + $0x18] sm:$0xff]
      %v4059 = vld [vmem:[%s4054 + $0x20] sm:$0xff]
      %v4060 = vld [vmem:[%s4054 + $0x28] sm:$0xff]
      %v4061 = vld [vmem:[%s4054 + $0x30] sm:$0xff]
      %v4062 = vld [vmem:[%s4054 + $0x38] sm:$0xff]
      %v4063 = vld [vmem:[%s10 + $0x2] sm:$0x1]
      %4064 = vmatpush.msra.mxu0 0.0
      %4065 = vmatpush.msra.mxu0 0.0
      %4066 = vmatpush.msra.mxu0 0.0
      %4067 = vmatpush.msra.mxu0 0.0
      %4068 = vmatpush.msra.mxu0 0.0
      %4069 = vmatpush.msra.mxu0 0.0
      %4070 = vmatpush.msra.mxu0 0.0
      %4071 = vmatpush.msra.mxu0 0.0
      %4072 = vmatpush.msra.mxu0 0.0
      %4073 = vmatpush.msra.mxu0 0.0
      %4074 = vmatpush.msra.mxu0 0.0
      %4075 = vmatpush.msra.mxu0 0.0
      %4076 = vmatpush.msra.mxu0 0.0
      %4077 = vmatpush.msra.mxu0 0.0
      %4078 = vmatpush.msra.mxu0 %v4023
      %4079 = vmatpush.msra.mxu0 %v4022
      %4080 = vmatmul.f32.gmra.mxu0 %v2851
      %v4081 = vpop.f32.mrf.mxu0
      %v4082 = vadd.f32 0.0, %v4081
      %4083 = vmatmul.f32.gmra.mxu0 %v2854
      %v4084 = vpop.f32.mrf.mxu0
      %v4085 = vadd.f32 0.0, %v4084
      %4086 = vdwg.mxu0
      %4087 = vmatpush.msra.mxu0 0.0
      %4088 = vmatpush.msra.mxu0 0.0
      %4089 = vmatpush.msra.mxu0 0.0
      %4090 = vmatpush.msra.mxu0 0.0
      %4091 = vmatpush.msra.mxu0 0.0
      %4092 = vmatpush.msra.mxu0 0.0
      %4093 = vmatpush.msra.mxu0 0.0
      %4094 = vmatpush.msra.mxu0 0.0
      %4095 = vmatpush.msra.mxu0 0.0
      %4096 = vmatpush.msra.mxu0 0.0
      %4097 = vmatpush.msra.mxu0 0.0
      %4098 = vmatpush.msra.mxu0 0.0
      %4099 = vmatpush.msra.mxu0 0.0
      %4100 = vmatpush.msra.mxu0 0.0
      %4101 = vmatpush.msra.mxu0 %v4025
      %4102 = vmatpush.msra.mxu0 %v4024
      %4103 = vmatmul.f32.gmra.mxu0 %v2880
      %v4104 = vpop.f32.mrf.mxu0
      %v4105 = vadd.f32 0.0, %v4104
      %4106 = vmatmul.f32.gmra.mxu0 %v2883
      %v4107 = vpop.f32.mrf.mxu0
      %v4108 = vadd.f32 0.0, %v4107
      %4109 = vdwg.mxu0
      %4110 = vmatpush.msra.mxu0 0.0
      %4111 = vmatpush.msra.mxu0 0.0
      %4112 = vmatpush.msra.mxu0 0.0
      %4113 = vmatpush.msra.mxu0 0.0
      %4114 = vmatpush.msra.mxu0 0.0
      %4115 = vmatpush.msra.mxu0 0.0
      %4116 = vmatpush.msra.mxu0 0.0
      %4117 = vmatpush.msra.mxu0 0.0
      %4118 = vmatpush.msra.mxu0 0.0
      %4119 = vmatpush.msra.mxu0 0.0
      %4120 = vmatpush.msra.mxu0 0.0
      %4121 = vmatpush.msra.mxu0 0.0
      %4122 = vmatpush.msra.mxu0 0.0
      %4123 = vmatpush.msra.mxu0 0.0
      %4124 = vmatpush.msra.mxu0 %v4027
      %4125 = vmatpush.msra.mxu0 %v4026
      %4126 = vmatmul.f32.gmra.mxu0 %v2909
      %v4127 = vpop.f32.mrf.mxu0
      %v4128 = vadd.f32 0.0, %v4127
      %4129 = vmatmul.f32.gmra.mxu0 %v2912
      %v4130 = vpop.f32.mrf.mxu0
      %v4131 = vadd.f32 0.0, %v4130
      %4132 = vdwg.mxu0
      %4133 = vmatpush.msra.mxu0 0.0
      %4134 = vmatpush.msra.mxu0 0.0
      %4135 = vmatpush.msra.mxu0 0.0
      %4136 = vmatpush.msra.mxu0 0.0
      %4137 = vmatpush.msra.mxu0 0.0
      %4138 = vmatpush.msra.mxu0 0.0
      %4139 = vmatpush.msra.mxu0 0.0
      %4140 = vmatpush.msra.mxu0 0.0
      %4141 = vmatpush.msra.mxu0 0.0
      %4142 = vmatpush.msra.mxu0 0.0
      %4143 = vmatpush.msra.mxu0 0.0
      %4144 = vmatpush.msra.mxu0 0.0
      %4145 = vmatpush.msra.mxu0 0.0
      %4146 = vmatpush.msra.mxu0 0.0
      %4147 = vmatpush.msra.mxu0 %v4029
      %4148 = vmatpush.msra.mxu0 %v4028
      %4149 = vmatmul.f32.gmra.mxu0 %v2938
      %v4150 = vpop.f32.mrf.mxu0
      %v4151 = vadd.f32 0.0, %v4150
      %4152 = vmatmul.f32.gmra.mxu0 %v2941
      %v4153 = vpop.f32.mrf.mxu0
      %v4154 = vadd.f32 0.0, %v4153
      %4155 = vdwg.mxu0
      %4156 = vmatpush.msra.mxu0 0.0
      %4157 = vmatpush.msra.mxu0 0.0
      %4158 = vmatpush.msra.mxu0 0.0
      %4159 = vmatpush.msra.mxu0 0.0
      %4160 = vmatpush.msra.mxu0 0.0
      %4161 = vmatpush.msra.mxu0 0.0
      %4162 = vmatpush.msra.mxu0 0.0
      %4163 = vmatpush.msra.mxu0 0.0
      %4164 = vmatpush.msra.mxu0 0.0
      %4165 = vmatpush.msra.mxu0 0.0
      %4166 = vmatpush.msra.mxu0 0.0
      %4167 = vmatpush.msra.mxu0 0.0
      %4168 = vmatpush.msra.mxu0 0.0
      %4169 = vmatpush.msra.mxu0 0.0
      %4170 = vmatpush.msra.mxu0 %v4031
      %4171 = vmatpush.msra.mxu0 %v4030
      %4172 = vmatmul.f32.gmra.mxu0 %v2967
      %v4173 = vpop.f32.mrf.mxu0
      %v4174 = vadd.f32 0.0, %v4173
      %4175 = vmatmul.f32.gmra.mxu0 %v2970
      %v4176 = vpop.f32.mrf.mxu0
      %v4177 = vadd.f32 0.0, %v4176
      %4178 = vdwg.mxu0
      %4179 = vmatpush.msra.mxu0 0.0
      %4180 = vmatpush.msra.mxu0 0.0
      %4181 = vmatpush.msra.mxu0 0.0
      %4182 = vmatpush.msra.mxu0 0.0
      %4183 = vmatpush.msra.mxu0 0.0
      %4184 = vmatpush.msra.mxu0 0.0
      %4185 = vmatpush.msra.mxu0 0.0
      %4186 = vmatpush.msra.mxu0 0.0
      %4187 = vmatpush.msra.mxu0 0.0
      %4188 = vmatpush.msra.mxu0 0.0
      %4189 = vmatpush.msra.mxu0 0.0
      %4190 = vmatpush.msra.mxu0 0.0
      %4191 = vmatpush.msra.mxu0 0.0
      %4192 = vmatpush.msra.mxu0 0.0
      %4193 = vmatpush.msra.mxu0 %v4033
      %4194 = vmatpush.msra.mxu0 %v4032
      %4195 = vmatmul.f32.gmra.mxu0 %v2996
      %v4196 = vpop.f32.mrf.mxu0
      %v4197 = vadd.f32 0.0, %v4196
      %4198 = vmatmul.f32.gmra.mxu0 %v2999
      %v4199 = vpop.f32.mrf.mxu0
      %v4200 = vadd.f32 0.0, %v4199
      %4201 = vdwg.mxu0
      %4202 = vmatpush.msra.mxu0 0.0
      %4203 = vmatpush.msra.mxu0 0.0
      %4204 = vmatpush.msra.mxu0 0.0
      %4205 = vmatpush.msra.mxu0 0.0
      %4206 = vmatpush.msra.mxu0 0.0
      %4207 = vmatpush.msra.mxu0 0.0
      %4208 = vmatpush.msra.mxu0 0.0
      %4209 = vmatpush.msra.mxu0 0.0
      %4210 = vmatpush.msra.mxu0 0.0
      %4211 = vmatpush.msra.mxu0 0.0
      %4212 = vmatpush.msra.mxu0 0.0
      %4213 = vmatpush.msra.mxu0 0.0
      %4214 = vmatpush.msra.mxu0 0.0
      %4215 = vmatpush.msra.mxu0 0.0
      %4216 = vmatpush.msra.mxu0 %v4035
      %4217 = vmatpush.msra.mxu0 %v4034
      %4218 = vmatmul.f32.gmra.mxu0 %v3025
      %v4219 = vpop.f32.mrf.mxu0
      %v4220 = vadd.f32 0.0, %v4219
      %4221 = vmatmul.f32.gmra.mxu0 %v3028
      %v4222 = vpop.f32.mrf.mxu0
      %v4223 = vadd.f32 0.0, %v4222
      %4224 = vdwg.mxu0
      %4225 = vmatpush.msra.mxu0 0.0
      %4226 = vmatpush.msra.mxu0 0.0
      %4227 = vmatpush.msra.mxu0 0.0
      %4228 = vmatpush.msra.mxu0 0.0
      %4229 = vmatpush.msra.mxu0 0.0
      %4230 = vmatpush.msra.mxu0 0.0
      %4231 = vmatpush.msra.mxu0 0.0
      %4232 = vmatpush.msra.mxu0 0.0
      %4233 = vmatpush.msra.mxu0 0.0
      %4234 = vmatpush.msra.mxu0 0.0
      %4235 = vmatpush.msra.mxu0 0.0
      %4236 = vmatpush.msra.mxu0 0.0
      %4237 = vmatpush.msra.mxu0 0.0
      %4238 = vmatpush.msra.mxu0 0.0
      %4239 = vmatpush.msra.mxu0 %v4037
      %4240 = vmatpush.msra.mxu0 %v4036
      %4241 = vmatmul.f32.gmra.mxu0 %v3054
      %v4242 = vpop.f32.mrf.mxu0
      %v4243 = vadd.f32 0.0, %v4242
      %4244 = vmatmul.f32.gmra.mxu0 %v3057
      %v4245 = vpop.f32.mrf.mxu0
      %v4246 = vadd.f32 0.0, %v4245
      %4247 = vdwg.mxu0
      %4248 = vmatpush.msra.mxu0 0.0
      %4249 = vmatpush.msra.mxu0 0.0
      %4250 = vmatpush.msra.mxu0 0.0
      %4251 = vmatpush.msra.mxu0 0.0
      %4252 = vmatpush.msra.mxu0 0.0
      %4253 = vmatpush.msra.mxu0 0.0
      %4254 = vmatpush.msra.mxu0 0.0
      %4255 = vmatpush.msra.mxu0 0.0
      %4256 = vmatpush.msra.mxu0 0.0
      %4257 = vmatpush.msra.mxu0 0.0
      %4258 = vmatpush.msra.mxu0 0.0
      %4259 = vmatpush.msra.mxu0 0.0
      %4260 = vmatpush.msra.mxu0 0.0
      %4261 = vmatpush.msra.mxu0 0.0
      %4262 = vmatpush.msra.mxu0 %v4039
      %4263 = vmatpush.msra.mxu0 %v4038
      %4264 = vmatmul.f32.gmra.mxu0 %v3083
      %v4265 = vpop.f32.mrf.mxu0
      %v4266 = vadd.f32 0.0, %v4265
      %4267 = vmatmul.f32.gmra.mxu0 %v3086
      %v4268 = vpop.f32.mrf.mxu0
      %v4269 = vadd.f32 0.0, %v4268
      %4270 = vdwg.mxu0
      %4271 = vmatpush.msra.mxu0 0.0
      %4272 = vmatpush.msra.mxu0 0.0
      %4273 = vmatpush.msra.mxu0 0.0
      %4274 = vmatpush.msra.mxu0 0.0
      %4275 = vmatpush.msra.mxu0 0.0
      %4276 = vmatpush.msra.mxu0 0.0
      %4277 = vmatpush.msra.mxu0 0.0
      %4278 = vmatpush.msra.mxu0 0.0
      %4279 = vmatpush.msra.mxu0 0.0
      %4280 = vmatpush.msra.mxu0 0.0
      %4281 = vmatpush.msra.mxu0 0.0
      %4282 = vmatpush.msra.mxu0 0.0
      %4283 = vmatpush.msra.mxu0 0.0
      %4284 = vmatpush.msra.mxu0 0.0
      %4285 = vmatpush.msra.mxu0 %v4041
      %4286 = vmatpush.msra.mxu0 %v4040
      %4287 = vmatmul.f32.gmra.mxu0 %v3112
      %v4288 = vpop.f32.mrf.mxu0
      %v4289 = vadd.f32 0.0, %v4288
      %4290 = vmatmul.f32.gmra.mxu0 %v3115
      %v4291 = vpop.f32.mrf.mxu0
      %v4292 = vadd.f32 0.0, %v4291
      %4293 = vdwg.mxu0
      %4294 = vmatpush.msra.mxu0 0.0
      %4295 = vmatpush.msra.mxu0 0.0
      %4296 = vmatpush.msra.mxu0 0.0
      %4297 = vmatpush.msra.mxu0 0.0
      %4298 = vmatpush.msra.mxu0 0.0
      %4299 = vmatpush.msra.mxu0 0.0
      %4300 = vmatpush.msra.mxu0 0.0
      %4301 = vmatpush.msra.mxu0 0.0
      %4302 = vmatpush.msra.mxu0 0.0
      %4303 = vmatpush.msra.mxu0 0.0
      %4304 = vmatpush.msra.mxu0 0.0
      %4305 = vmatpush.msra.mxu0 0.0
      %4306 = vmatpush.msra.mxu0 0.0
      %4307 = vmatpush.msra.mxu0 0.0
      %4308 = vmatpush.msra.mxu0 %v4043
      %4309 = vmatpush.msra.mxu0 %v4042
      %4310 = vmatmul.f32.gmra.mxu0 %v3141
      %v4311 = vpop.f32.mrf.mxu0
      %v4312 = vadd.f32 0.0, %v4311
      %4313 = vmatmul.f32.gmra.mxu0 %v3144
      %v4314 = vpop.f32.mrf.mxu0
      %v4315 = vadd.f32 0.0, %v4314
      %4316 = vdwg.mxu0
      %4317 = vmatpush.msra.mxu0 0.0
      %4318 = vmatpush.msra.mxu0 0.0
      %4319 = vmatpush.msra.mxu0 0.0
      %4320 = vmatpush.msra.mxu0 0.0
      %4321 = vmatpush.msra.mxu0 0.0
      %4322 = vmatpush.msra.mxu0 0.0
      %4323 = vmatpush.msra.mxu0 0.0
      %4324 = vmatpush.msra.mxu0 0.0
      %4325 = vmatpush.msra.mxu0 0.0
      %4326 = vmatpush.msra.mxu0 0.0
      %4327 = vmatpush.msra.mxu0 0.0
      %4328 = vmatpush.msra.mxu0 0.0
      %4329 = vmatpush.msra.mxu0 0.0
      %4330 = vmatpush.msra.mxu0 0.0
      %4331 = vmatpush.msra.mxu0 %v4045
      %4332 = vmatpush.msra.mxu0 %v4044
      %4333 = vmatmul.f32.gmra.mxu0 %v3170
      %v4334 = vpop.f32.mrf.mxu0
      %v4335 = vadd.f32 0.0, %v4334
      %4336 = vmatmul.f32.gmra.mxu0 %v3173
      %v4337 = vpop.f32.mrf.mxu0
      %v4338 = vadd.f32 0.0, %v4337
      %4339 = vdwg.mxu0
      %4340 = vmatpush.msra.mxu0 0.0
      %4341 = vmatpush.msra.mxu0 0.0
      %4342 = vmatpush.msra.mxu0 0.0
      %4343 = vmatpush.msra.mxu0 0.0
      %4344 = vmatpush.msra.mxu0 0.0
      %4345 = vmatpush.msra.mxu0 0.0
      %4346 = vmatpush.msra.mxu0 0.0
      %4347 = vmatpush.msra.mxu0 0.0
      %4348 = vmatpush.msra.mxu0 0.0
      %4349 = vmatpush.msra.mxu0 0.0
      %4350 = vmatpush.msra.mxu0 0.0
      %4351 = vmatpush.msra.mxu0 0.0
      %4352 = vmatpush.msra.mxu0 0.0
      %4353 = vmatpush.msra.mxu0 0.0
      %4354 = vmatpush.msra.mxu0 %v4047
      %4355 = vmatpush.msra.mxu0 %v4046
      %4356 = vmatmul.f32.gmra.mxu0 %v3199
      %v4357 = vpop.f32.mrf.mxu0
      %v4358 = vadd.f32 0.0, %v4357
      %4359 = vmatmul.f32.gmra.mxu0 %v3202
      %v4360 = vpop.f32.mrf.mxu0
      %v4361 = vadd.f32 0.0, %v4360
      %4362 = vdwg.mxu0
      %4363 = vmatpush.msra.mxu0 0.0
      %4364 = vmatpush.msra.mxu0 0.0
      %4365 = vmatpush.msra.mxu0 0.0
      %4366 = vmatpush.msra.mxu0 0.0
      %4367 = vmatpush.msra.mxu0 0.0
      %4368 = vmatpush.msra.mxu0 0.0
      %4369 = vmatpush.msra.mxu0 0.0
      %4370 = vmatpush.msra.mxu0 0.0
      %4371 = vmatpush.msra.mxu0 0.0
      %4372 = vmatpush.msra.mxu0 0.0
      %4373 = vmatpush.msra.mxu0 0.0
      %4374 = vmatpush.msra.mxu0 0.0
      %4375 = vmatpush.msra.mxu0 0.0
      %4376 = vmatpush.msra.mxu0 0.0
      %4377 = vmatpush.msra.mxu0 %v4049
      %4378 = vmatpush.msra.mxu0 %v4048
      %4379 = vmatmul.f32.gmra.mxu0 %v3228
      %v4380 = vpop.f32.mrf.mxu0
      %v4381 = vadd.f32 0.0, %v4380
      %4382 = vmatmul.f32.gmra.mxu0 %v3231
      %v4383 = vpop.f32.mrf.mxu0
      %v4384 = vadd.f32 0.0, %v4383
      %4385 = vdwg.mxu0
      %4386 = vmatpush.msra.mxu0 0.0
      %4387 = vmatpush.msra.mxu0 0.0
      %4388 = vmatpush.msra.mxu0 0.0
      %4389 = vmatpush.msra.mxu0 0.0
      %4390 = vmatpush.msra.mxu0 0.0
      %4391 = vmatpush.msra.mxu0 0.0
      %4392 = vmatpush.msra.mxu0 0.0
      %4393 = vmatpush.msra.mxu0 0.0
      %4394 = vmatpush.msra.mxu0 0.0
      %4395 = vmatpush.msra.mxu0 0.0
      %4396 = vmatpush.msra.mxu0 0.0
      %4397 = vmatpush.msra.mxu0 0.0
      %4398 = vmatpush.msra.mxu0 0.0
      %4399 = vmatpush.msra.mxu0 0.0
      %4400 = vmatpush.msra.mxu0 %v4051
      %4401 = vmatpush.msra.mxu0 %v4050
      %4402 = vmatmul.f32.gmra.mxu0 %v3257
      %v4403 = vpop.f32.mrf.mxu0
      %v4404 = vadd.f32 0.0, %v4403
      %4405 = vmatmul.f32.gmra.mxu0 %v3260
      %v4406 = vpop.f32.mrf.mxu0
      %v4407 = vadd.f32 0.0, %v4406
      %4408 = vdwg.mxu0
      %4409 = vmatpush.msra.mxu0 0.0
      %4410 = vmatpush.msra.mxu0 0.0
      %4411 = vmatpush.msra.mxu0 0.0
      %4412 = vmatpush.msra.mxu0 0.0
      %4413 = vmatpush.msra.mxu0 0.0
      %4414 = vmatpush.msra.mxu0 0.0
      %4415 = vmatpush.msra.mxu0 0.0
      %4416 = vmatpush.msra.mxu0 0.0
      %4417 = vmatpush.msra.mxu0 0.0
      %4418 = vmatpush.msra.mxu0 0.0
      %4419 = vmatpush.msra.mxu0 0.0
      %4420 = vmatpush.msra.mxu0 0.0
      %4421 = vmatpush.msra.mxu0 0.0
      %4422 = vmatpush.msra.mxu0 0.0
      %4423 = vmatpush.msra.mxu0 %v4053
      %4424 = vmatpush.msra.mxu0 %v4052
      %4425 = vmatmul.f32.gmra.mxu0 %v3286
      %v4426 = vpop.f32.mrf.mxu0
      %v4427 = vadd.f32 0.0, %v4426
      %4428 = vmatmul.f32.gmra.mxu0 %v3289
      %v4429 = vpop.f32.mrf.mxu0
      %v4430 = vadd.f32 0.0, %v4429
      %4431 = vdwg.mxu0
      %v4433 = vsel %vm3314, %v4022, 0
      %v4436 = vsel %vm3314, %v4023, 0
      %v4439 = vsel %vm3314, %v4024, 0
      %v4442 = vsel %vm3314, %v4025, 0
      %v4445 = vsel %vm3314, %v4026, 0
      %v4448 = vsel %vm3314, %v4027, 0
      %v4451 = vsel %vm3314, %v4028, 0
      %v4454 = vsel %vm3314, %v4029, 0
      %v4457 = vsel %vm3314, %v4030, 0
      %v4460 = vsel %vm3314, %v4031, 0
      %v4463 = vsel %vm3314, %v4032, 0
      %v4466 = vsel %vm3314, %v4033, 0
      %v4469 = vsel %vm3314, %v4034, 0
      %v4472 = vsel %vm3314, %v4035, 0
      %v4475 = vsel %vm3314, %v4036, 0
      %v4478 = vsel %vm3314, %v4037, 0
      %v4481 = vsel %vm3314, %v4038, 0
      %v4484 = vsel %vm3314, %v4039, 0
      %v4487 = vsel %vm3314, %v4040, 0
      %v4490 = vsel %vm3314, %v4041, 0
      %v4493 = vsel %vm3314, %v4042, 0
      %v4496 = vsel %vm3314, %v4043, 0
      %v4499 = vsel %vm3314, %v4044, 0
      %v4502 = vsel %vm3314, %v4045, 0
      %v4505 = vsel %vm3314, %v4046, 0
      %v4508 = vsel %vm3314, %v4047, 0
      %v4511 = vsel %vm3314, %v4048, 0
      %v4514 = vsel %vm3314, %v4049, 0
      %v4517 = vsel %vm3314, %v4050, 0
      %v4520 = vsel %vm3314, %v4051, 0
      %v4523 = vsel %vm3314, %v4052, 0
      %v4526 = vsel %vm3314, %v4053, 0
      %4528 = vmatpush.msra.mxu0 0.0
      %4529 = vmatpush.msra.mxu0 0.0
      %4530 = vmatpush.msra.mxu0 0.0
      %4531 = vmatpush.msra.mxu0 0.0
      %4532 = vmatpush.msra.mxu0 0.0
      %4533 = vmatpush.msra.mxu0 0.0
      %4534 = vmatpush.msra.mxu0 0.0
      %4535 = vmatpush.msra.mxu0 0.0
      %4536 = vmatpush.msra.mxu0 0.0
      %4537 = vmatpush.msra.mxu0 0.0
      %4538 = vmatpush.msra.mxu0 0.0
      %4539 = vmatpush.msra.mxu0 0.0
      %4540 = vmatpush.msra.mxu0 %v4062
      %4541 = vmatpush.msra.mxu0 %v4061
      %4542 = vmatpush.msra.mxu0 %v4060
      %4543 = vmatpush.msra.mxu0 %v4059
      %4544 = vmatmul.f32.gmra.mxu0 %v4433
      %v4545 = vpop.f32.mrf.mxu0
      %v4546 = vadd.f32 0.0, %v4545
      %4547 = vmatmul.f32.gmra.mxu0 %v4436
      %v4548 = vpop.f32.mrf.mxu0
      %v4549 = vadd.f32 0.0, %v4548
      %4550 = vmatmul.f32.gmra.mxu0 %v4439
      %v4551 = vpop.f32.mrf.mxu0
      %v4552 = vadd.f32 0.0, %v4551
      %4553 = vmatmul.f32.gmra.mxu0 %v4442
      %v4554 = vpop.f32.mrf.mxu0
      %v4555 = vadd.f32 0.0, %v4554
      %4556 = vmatmul.f32.gmra.mxu0 %v4445
      %v4557 = vpop.f32.mrf.mxu0
      %v4558 = vadd.f32 0.0, %v4557
      %4559 = vmatmul.f32.gmra.mxu0 %v4448
      %v4560 = vpop.f32.mrf.mxu0
      %v4561 = vadd.f32 0.0, %v4560
      %4562 = vmatmul.f32.gmra.mxu0 %v4451
      %v4563 = vpop.f32.mrf.mxu0
      %v4564 = vadd.f32 0.0, %v4563
      %4565 = vmatmul.f32.gmra.mxu0 %v4454
      %v4566 = vpop.f32.mrf.mxu0
      %v4567 = vadd.f32 0.0, %v4566
      %4568 = vmatmul.f32.gmra.mxu0 %v4457
      %v4569 = vpop.f32.mrf.mxu0
      %v4570 = vadd.f32 0.0, %v4569
      %4571 = vmatmul.f32.gmra.mxu0 %v4460
      %v4572 = vpop.f32.mrf.mxu0
      %v4573 = vadd.f32 0.0, %v4572
      %4574 = vmatmul.f32.gmra.mxu0 %v4463
      %v4575 = vpop.f32.mrf.mxu0
      %v4576 = vadd.f32 0.0, %v4575
      %4577 = vmatmul.f32.gmra.mxu0 %v4466
      %v4578 = vpop.f32.mrf.mxu0
      %v4579 = vadd.f32 0.0, %v4578
      %4580 = vmatmul.f32.gmra.mxu0 %v4469
      %v4581 = vpop.f32.mrf.mxu0
      %v4582 = vadd.f32 0.0, %v4581
      %4583 = vmatmul.f32.gmra.mxu0 %v4472
      %v4584 = vpop.f32.mrf.mxu0
      %v4585 = vadd.f32 0.0, %v4584
      %4586 = vmatmul.f32.gmra.mxu0 %v4475
      %v4587 = vpop.f32.mrf.mxu0
      %v4588 = vadd.f32 0.0, %v4587
      %4589 = vmatmul.f32.gmra.mxu0 %v4478
      %v4590 = vpop.f32.mrf.mxu0
      %v4591 = vadd.f32 0.0, %v4590
      %4592 = vmatmul.f32.gmra.mxu0 %v4481
      %v4593 = vpop.f32.mrf.mxu0
      %v4594 = vadd.f32 0.0, %v4593
      %4595 = vmatmul.f32.gmra.mxu0 %v4484
      %v4596 = vpop.f32.mrf.mxu0
      %v4597 = vadd.f32 0.0, %v4596
      %4598 = vmatmul.f32.gmra.mxu0 %v4487
      %v4599 = vpop.f32.mrf.mxu0
      %v4600 = vadd.f32 0.0, %v4599
      %4601 = vmatmul.f32.gmra.mxu0 %v4490
      %v4602 = vpop.f32.mrf.mxu0
      %v4603 = vadd.f32 0.0, %v4602
      %4604 = vmatmul.f32.gmra.mxu0 %v4493
      %v4605 = vpop.f32.mrf.mxu0
      %v4606 = vadd.f32 0.0, %v4605
      %4607 = vmatmul.f32.gmra.mxu0 %v4496
      %v4608 = vpop.f32.mrf.mxu0
      %v4609 = vadd.f32 0.0, %v4608
      %4610 = vmatmul.f32.gmra.mxu0 %v4499
      %v4611 = vpop.f32.mrf.mxu0
      %v4612 = vadd.f32 0.0, %v4611
      %4613 = vmatmul.f32.gmra.mxu0 %v4502
      %v4614 = vpop.f32.mrf.mxu0
      %v4615 = vadd.f32 0.0, %v4614
      %4616 = vmatmul.f32.gmra.mxu0 %v4505
      %v4617 = vpop.f32.mrf.mxu0
      %v4618 = vadd.f32 0.0, %v4617
      %4619 = vmatmul.f32.gmra.mxu0 %v4508
      %v4620 = vpop.f32.mrf.mxu0
      %v4621 = vadd.f32 0.0, %v4620
      %4622 = vmatmul.f32.gmra.mxu0 %v4511
      %v4623 = vpop.f32.mrf.mxu0
      %v4624 = vadd.f32 0.0, %v4623
      %4625 = vmatmul.f32.gmra.mxu0 %v4514
      %v4626 = vpop.f32.mrf.mxu0
      %v4627 = vadd.f32 0.0, %v4626
      %4628 = vmatmul.f32.gmra.mxu0 %v4517
      %v4629 = vpop.f32.mrf.mxu0
      %v4630 = vadd.f32 0.0, %v4629
      %4631 = vmatmul.f32.gmra.mxu0 %v4520
      %v4632 = vpop.f32.mrf.mxu0
      %v4633 = vadd.f32 0.0, %v4632
      %4634 = vmatmul.f32.gmra.mxu0 %v4523
      %v4635 = vpop.f32.mrf.mxu0
      %v4636 = vadd.f32 0.0, %v4635
      %4637 = vmatmul.f32.gmra.mxu0 %v4526
      %v4638 = vpop.f32.mrf.mxu0
      %v4639 = vadd.f32 0.0, %v4638
      %4640 = vdwg.mxu0
      %v4642 = vsel %vm3314, %v4082, 0
      %v4645 = vsel %vm3314, %v4085, 0
      %v4648 = vsel %vm3314, %v4105, 0
      %v4651 = vsel %vm3314, %v4108, 0
      %v4654 = vsel %vm3314, %v4128, 0
      %v4657 = vsel %vm3314, %v4131, 0
      %v4660 = vsel %vm3314, %v4151, 0
      %v4663 = vsel %vm3314, %v4154, 0
      %v4666 = vsel %vm3314, %v4174, 0
      %v4669 = vsel %vm3314, %v4177, 0
      %v4672 = vsel %vm3314, %v4197, 0
      %v4675 = vsel %vm3314, %v4200, 0
      %v4678 = vsel %vm3314, %v4220, 0
      %v4681 = vsel %vm3314, %v4223, 0
      %v4684 = vsel %vm3314, %v4243, 0
      %v4687 = vsel %vm3314, %v4246, 0
      %v4690 = vsel %vm3314, %v4266, 0
      %v4693 = vsel %vm3314, %v4269, 0
      %v4696 = vsel %vm3314, %v4289, 0
      %v4699 = vsel %vm3314, %v4292, 0
      %v4702 = vsel %vm3314, %v4312, 0
      %v4705 = vsel %vm3314, %v4315, 0
      %v4708 = vsel %vm3314, %v4335, 0
      %v4711 = vsel %vm3314, %v4338, 0
      %v4714 = vsel %vm3314, %v4358, 0
      %v4717 = vsel %vm3314, %v4361, 0
      %v4720 = vsel %vm3314, %v4381, 0
      %v4723 = vsel %vm3314, %v4384, 0
      %v4726 = vsel %vm3314, %v4404, 0
      %v4729 = vsel %vm3314, %v4407, 0
      %v4732 = vsel %vm3314, %v4427, 0
      %v4735 = vsel %vm3314, %v4430, 0
      %4737 = vmatpush.msra.mxu0 0.0
      %4738 = vmatpush.msra.mxu0 0.0
      %4739 = vmatpush.msra.mxu0 0.0
      %4740 = vmatpush.msra.mxu0 0.0
      %4741 = vmatpush.msra.mxu0 0.0
      %4742 = vmatpush.msra.mxu0 0.0
      %4743 = vmatpush.msra.mxu0 0.0
      %4744 = vmatpush.msra.mxu0 0.0
      %4745 = vmatpush.msra.mxu0 0.0
      %4746 = vmatpush.msra.mxu0 0.0
      %4747 = vmatpush.msra.mxu0 0.0
      %4748 = vmatpush.msra.mxu0 0.0
      %4749 = vmatpush.msra.mxu0 %v4058
      %4750 = vmatpush.msra.mxu0 %v4057
      %4751 = vmatpush.msra.mxu0 %v4056
      %4752 = vmatpush.msra.mxu0 %v4055
      %4753 = vmatmul.f32.gmra.mxu0 %v4642
      %v4754 = vpop.f32.mrf.mxu0
      %v4755 = vadd.f32 %v4546, %v4754
      %4756 = vmatmul.f32.gmra.mxu0 %v4645
      %v4757 = vpop.f32.mrf.mxu0
      %v4758 = vadd.f32 %v4549, %v4757
      %4759 = vmatmul.f32.gmra.mxu0 %v4648
      %v4760 = vpop.f32.mrf.mxu0
      %v4761 = vadd.f32 %v4552, %v4760
      %4762 = vmatmul.f32.gmra.mxu0 %v4651
      %v4763 = vpop.f32.mrf.mxu0
      %v4764 = vadd.f32 %v4555, %v4763
      %4765 = vmatmul.f32.gmra.mxu0 %v4654
      %v4766 = vpop.f32.mrf.mxu0
      %v4767 = vadd.f32 %v4558, %v4766
      %4768 = vmatmul.f32.gmra.mxu0 %v4657
      %v4769 = vpop.f32.mrf.mxu0
      %v4770 = vadd.f32 %v4561, %v4769
      %4771 = vmatmul.f32.gmra.mxu0 %v4660
      %v4772 = vpop.f32.mrf.mxu0
      %v4773 = vadd.f32 %v4564, %v4772
      %4774 = vmatmul.f32.gmra.mxu0 %v4663
      %v4775 = vpop.f32.mrf.mxu0
      %v4776 = vadd.f32 %v4567, %v4775
      %4777 = vmatmul.f32.gmra.mxu0 %v4666
      %v4778 = vpop.f32.mrf.mxu0
      %v4779 = vadd.f32 %v4570, %v4778
      %4780 = vmatmul.f32.gmra.mxu0 %v4669
      %v4781 = vpop.f32.mrf.mxu0
      %v4782 = vadd.f32 %v4573, %v4781
      %4783 = vmatmul.f32.gmra.mxu0 %v4672
      %v4784 = vpop.f32.mrf.mxu0
      %v4785 = vadd.f32 %v4576, %v4784
      %4786 = vmatmul.f32.gmra.mxu0 %v4675
      %v4787 = vpop.f32.mrf.mxu0
      %v4788 = vadd.f32 %v4579, %v4787
      %4789 = vmatmul.f32.gmra.mxu0 %v4678
      %v4790 = vpop.f32.mrf.mxu0
      %v4791 = vadd.f32 %v4582, %v4790
      %4792 = vmatmul.f32.gmra.mxu0 %v4681
      %v4793 = vpop.f32.mrf.mxu0
      %v4794 = vadd.f32 %v4585, %v4793
      %4795 = vmatmul.f32.gmra.mxu0 %v4684
      %v4796 = vpop.f32.mrf.mxu0
      %v4797 = vadd.f32 %v4588, %v4796
      %4798 = vmatmul.f32.gmra.mxu0 %v4687
      %v4799 = vpop.f32.mrf.mxu0
      %v4800 = vadd.f32 %v4591, %v4799
      %4801 = vmatmul.f32.gmra.mxu0 %v4690
      %v4802 = vpop.f32.mrf.mxu0
      %v4803 = vadd.f32 %v4594, %v4802
      %4804 = vmatmul.f32.gmra.mxu0 %v4693
      %v4805 = vpop.f32.mrf.mxu0
      %v4806 = vadd.f32 %v4597, %v4805
      %4807 = vmatmul.f32.gmra.mxu0 %v4696
      %v4808 = vpop.f32.mrf.mxu0
      %v4809 = vadd.f32 %v4600, %v4808
      %4810 = vmatmul.f32.gmra.mxu0 %v4699
      %v4811 = vpop.f32.mrf.mxu0
      %v4812 = vadd.f32 %v4603, %v4811
      %4813 = vmatmul.f32.gmra.mxu0 %v4702
      %v4814 = vpop.f32.mrf.mxu0
      %v4815 = vadd.f32 %v4606, %v4814
      %4816 = vmatmul.f32.gmra.mxu0 %v4705
      %v4817 = vpop.f32.mrf.mxu0
      %v4818 = vadd.f32 %v4609, %v4817
      %4819 = vmatmul.f32.gmra.mxu0 %v4708
      %v4820 = vpop.f32.mrf.mxu0
      %v4821 = vadd.f32 %v4612, %v4820
      %4822 = vmatmul.f32.gmra.mxu0 %v4711
      %v4823 = vpop.f32.mrf.mxu0
      %v4824 = vadd.f32 %v4615, %v4823
      %4825 = vmatmul.f32.gmra.mxu0 %v4714
      %v4826 = vpop.f32.mrf.mxu0
      %v4827 = vadd.f32 %v4618, %v4826
      %4828 = vmatmul.f32.gmra.mxu0 %v4717
      %v4829 = vpop.f32.mrf.mxu0
      %v4830 = vadd.f32 %v4621, %v4829
      %4831 = vmatmul.f32.gmra.mxu0 %v4720
      %v4832 = vpop.f32.mrf.mxu0
      %v4833 = vadd.f32 %v4624, %v4832
      %4834 = vmatmul.f32.gmra.mxu0 %v4723
      %v4835 = vpop.f32.mrf.mxu0
      %v4836 = vadd.f32 %v4627, %v4835
      %4837 = vmatmul.f32.gmra.mxu0 %v4726
      %v4838 = vpop.f32.mrf.mxu0
      %v4839 = vadd.f32 %v4630, %v4838
      %4840 = vmatmul.f32.gmra.mxu0 %v4729
      %v4841 = vpop.f32.mrf.mxu0
      %v4842 = vadd.f32 %v4633, %v4841
      %4843 = vmatmul.f32.gmra.mxu0 %v4732
      %v4844 = vpop.f32.mrf.mxu0
      %v4845 = vadd.f32 %v4636, %v4844
      %4846 = vmatmul.f32.gmra.mxu0 %v4735
      %v4847 = vpop.f32.mrf.mxu0
      %v4848 = vadd.f32 %v4639, %v4847
      %4849 = vdwg.mxu0
      %v4850 = vperm.slane %v4063, 0
      %v4851 = vadd.f32 %v4755, %v4850
      %v4852 = vadd.f32 %v4758, %v4850
      %v4853 = vadd.f32 %v4761, %v4850
      %v4854 = vadd.f32 %v4764, %v4850
      %v4855 = vadd.f32 %v4767, %v4850
      %v4856 = vadd.f32 %v4770, %v4850
      %v4857 = vadd.f32 %v4773, %v4850
      %v4858 = vadd.f32 %v4776, %v4850
      %v4859 = vadd.f32 %v4779, %v4850
      %v4860 = vadd.f32 %v4782, %v4850
      %v4861 = vadd.f32 %v4785, %v4850
      %v4862 = vadd.f32 %v4788, %v4850
      %v4863 = vadd.f32 %v4791, %v4850
      %v4864 = vadd.f32 %v4794, %v4850
      %v4865 = vadd.f32 %v4797, %v4850
      %v4866 = vadd.f32 %v4800, %v4850
      %v4867 = vadd.f32 %v4803, %v4850
      %v4868 = vadd.f32 %v4806, %v4850
      %v4869 = vadd.f32 %v4809, %v4850
      %v4870 = vadd.f32 %v4812, %v4850
      %v4871 = vadd.f32 %v4815, %v4850
      %v4872 = vadd.f32 %v4818, %v4850
      %v4873 = vadd.f32 %v4821, %v4850
      %v4874 = vadd.f32 %v4824, %v4850
      %v4875 = vadd.f32 %v4827, %v4850
      %v4876 = vadd.f32 %v4830, %v4850
      %v4877 = vadd.f32 %v4833, %v4850
      %v4878 = vadd.f32 %v4836, %v4850
      %v4879 = vadd.f32 %v4839, %v4850
      %v4880 = vadd.f32 %v4842, %v4850
      %v4881 = vadd.f32 %v4845, %v4850
      %v4882 = vadd.f32 %v4848, %v4850
      %v4883 = vmul.f32 %v4851, %v4851
      %v4884 = vmul.f32 %v4852, %v4852
      %v4885 = vmul.f32 %v4853, %v4853
      %v4886 = vmul.f32 %v4854, %v4854
      %v4887 = vmul.f32 %v4855, %v4855
      %v4888 = vmul.f32 %v4856, %v4856
      %v4889 = vmul.f32 %v4857, %v4857
      %v4890 = vmul.f32 %v4858, %v4858
      %v4891 = vmul.f32 %v4859, %v4859
      %v4892 = vmul.f32 %v4860, %v4860
      %v4893 = vmul.f32 %v4861, %v4861
      %v4894 = vmul.f32 %v4862, %v4862
      %v4895 = vmul.f32 %v4863, %v4863
      %v4896 = vmul.f32 %v4864, %v4864
      %v4897 = vmul.f32 %v4865, %v4865
      %v4898 = vmul.f32 %v4866, %v4866
      %v4899 = vmul.f32 %v4867, %v4867
      %v4900 = vmul.f32 %v4868, %v4868
      %v4901 = vmul.f32 %v4869, %v4869
      %v4902 = vmul.f32 %v4870, %v4870
      %v4903 = vmul.f32 %v4871, %v4871
      %v4904 = vmul.f32 %v4872, %v4872
      %v4905 = vmul.f32 %v4873, %v4873
      %v4906 = vmul.f32 %v4874, %v4874
      %v4907 = vmul.f32 %v4875, %v4875
      %v4908 = vmul.f32 %v4876, %v4876
      %v4909 = vmul.f32 %v4877, %v4877
      %v4910 = vmul.f32 %v4878, %v4878
      %v4911 = vmul.f32 %v4879, %v4879
      %v4912 = vmul.f32 %v4880, %v4880
      %v4913 = vmul.f32 %v4881, %v4881
      %v4914 = vmul.f32 %v4882, %v4882
      %v4915 = vmul.f32 %v4851, %v4883
      %v4916 = vmul.f32 %v4852, %v4884
      %v4917 = vmul.f32 %v4853, %v4885
      %v4918 = vmul.f32 %v4854, %v4886
      %v4919 = vmul.f32 %v4855, %v4887
      %v4920 = vmul.f32 %v4856, %v4888
      %v4921 = vmul.f32 %v4857, %v4889
      %v4922 = vmul.f32 %v4858, %v4890
      %v4923 = vmul.f32 %v4859, %v4891
      %v4924 = vmul.f32 %v4860, %v4892
      %v4925 = vmul.f32 %v4861, %v4893
      %v4926 = vmul.f32 %v4862, %v4894
      %v4927 = vmul.f32 %v4863, %v4895
      %v4928 = vmul.f32 %v4864, %v4896
      %v4929 = vmul.f32 %v4865, %v4897
      %v4930 = vmul.f32 %v4866, %v4898
      %v4931 = vmul.f32 %v4867, %v4899
      %v4932 = vmul.f32 %v4868, %v4900
      %v4933 = vmul.f32 %v4869, %v4901
      %v4934 = vmul.f32 %v4870, %v4902
      %v4935 = vmul.f32 %v4871, %v4903
      %v4936 = vmul.f32 %v4872, %v4904
      %v4937 = vmul.f32 %v4873, %v4905
      %v4938 = vmul.f32 %v4874, %v4906
      %v4939 = vmul.f32 %v4875, %v4907
      %v4940 = vmul.f32 %v4876, %v4908
      %v4941 = vmul.f32 %v4877, %v4909
      %v4942 = vmul.f32 %v4878, %v4910
      %v4943 = vmul.f32 %v4879, %v4911
      %v4944 = vmul.f32 %v4880, %v4912
      %v4945 = vmul.f32 %v4881, %v4913
      %v4946 = vmul.f32 %v4882, %v4914
      %v4947 = vmul.f32 %v4915, 0.044715
      %v4948 = vmul.f32 %v4916, 0.044715
      %v4949 = vmul.f32 %v4917, 0.044715
      %v4950 = vmul.f32 %v4918, 0.044715
      %v4951 = vmul.f32 %v4919, 0.044715
      %v4952 = vmul.f32 %v4920, 0.044715
      %v4953 = vmul.f32 %v4921, 0.044715
      %v4954 = vmul.f32 %v4922, 0.044715
      %v4955 = vmul.f32 %v4923, 0.044715
      %v4956 = vmul.f32 %v4924, 0.044715
      %v4957 = vmul.f32 %v4925, 0.044715
      %v4958 = vmul.f32 %v4926, 0.044715
      %v4959 = vmul.f32 %v4927, 0.044715
      %v4960 = vmul.f32 %v4928, 0.044715
      %v4961 = vmul.f32 %v4929, 0.044715
      %v4962 = vmul.f32 %v4930, 0.044715
      %v4963 = vmul.f32 %v4931, 0.044715
      %v4964 = vmul.f32 %v4932, 0.044715
      %v4965 = vmul.f32 %v4933, 0.044715
      %v4966 = vmul.f32 %v4934, 0.044715
      %v4967 = vmul.f32 %v4935, 0.044715
      %v4968 = vmul.f32 %v4936, 0.044715
      %v4969 = vmul.f32 %v4937, 0.044715
      %v4970 = vmul.f32 %v4938, 0.044715
      %v4971 = vmul.f32 %v4939, 0.044715
      %v4972 = vmul.f32 %v4940, 0.044715
      %v4973 = vmul.f32 %v4941, 0.044715
      %v4974 = vmul.f32 %v4942, 0.044715
      %v4975 = vmul.f32 %v4943, 0.044715
      %v4976 = vmul.f32 %v4944, 0.044715
      %v4977 = vmul.f32 %v4945, 0.044715
      %v4978 = vmul.f32 %v4946, 0.044715
      %v4979 = vadd.f32 %v4851, %v4947
      %v4980 = vadd.f32 %v4852, %v4948
      %v4981 = vadd.f32 %v4853, %v4949
      %v4982 = vadd.f32 %v4854, %v4950
      %v4983 = vadd.f32 %v4855, %v4951
      %v4984 = vadd.f32 %v4856, %v4952
      %v4985 = vadd.f32 %v4857, %v4953
      %v4986 = vadd.f32 %v4858, %v4954
      %v4987 = vadd.f32 %v4859, %v4955
      %v4988 = vadd.f32 %v4860, %v4956
      %v4989 = vadd.f32 %v4861, %v4957
      %v4990 = vadd.f32 %v4862, %v4958
      %v4991 = vadd.f32 %v4863, %v4959
      %v4992 = vadd.f32 %v4864, %v4960
      %v4993 = vadd.f32 %v4865, %v4961
      %v4994 = vadd.f32 %v4866, %v4962
      %v4995 = vadd.f32 %v4867, %v4963
      %v4996 = vadd.f32 %v4868, %v4964
      %v4997 = vadd.f32 %v4869, %v4965
      %v4998 = vadd.f32 %v4870, %v4966
      %v4999 = vadd.f32 %v4871, %v4967
      %v5000 = vadd.f32 %v4872, %v4968
      %v5001 = vadd.f32 %v4873, %v4969
      %v5002 = vadd.f32 %v4874, %v4970
      %v5003 = vadd.f32 %v4875, %v4971
      %v5004 = vadd.f32 %v4876, %v4972
      %v5005 = vadd.f32 %v4877, %v4973
      %v5006 = vadd.f32 %v4878, %v4974
      %v5007 = vadd.f32 %v4879, %v4975
      %v5008 = vadd.f32 %v4880, %v4976
      %v5009 = vadd.f32 %v4881, %v4977
      %v5010 = vadd.f32 %v4882, %v4978
      %v5011 = vmul.f32 %v4979, 0.7978846
      %v5012 = vmul.f32 %v4980, 0.7978846
      %v5013 = vmul.f32 %v4981, 0.7978846
      %v5014 = vmul.f32 %v4982, 0.7978846
      %v5015 = vmul.f32 %v4983, 0.7978846
      %v5016 = vmul.f32 %v4984, 0.7978846
      %v5017 = vmul.f32 %v4985, 0.7978846
      %v5018 = vmul.f32 %v4986, 0.7978846
      %v5019 = vmul.f32 %v4987, 0.7978846
      %v5020 = vmul.f32 %v4988, 0.7978846
      %v5021 = vmul.f32 %v4989, 0.7978846
      %v5022 = vmul.f32 %v4990, 0.7978846
      %v5023 = vmul.f32 %v4991, 0.7978846
      %v5024 = vmul.f32 %v4992, 0.7978846
      %v5025 = vmul.f32 %v4993, 0.7978846
      %v5026 = vmul.f32 %v4994, 0.7978846
      %v5027 = vmul.f32 %v4995, 0.7978846
      %v5028 = vmul.f32 %v4996, 0.7978846
      %v5029 = vmul.f32 %v4997, 0.7978846
      %v5030 = vmul.f32 %v4998, 0.7978846
      %v5031 = vmul.f32 %v4999, 0.7978846
      %v5032 = vmul.f32 %v5000, 0.7978846
      %v5033 = vmul.f32 %v5001, 0.7978846
      %v5034 = vmul.f32 %v5002, 0.7978846
      %v5035 = vmul.f32 %v5003, 0.7978846
      %v5036 = vmul.f32 %v5004, 0.7978846
      %v5037 = vmul.f32 %v5005, 0.7978846
      %v5038 = vmul.f32 %v5006, 0.7978846
      %v5039 = vmul.f32 %v5007, 0.7978846
      %v5040 = vmul.f32 %v5008, 0.7978846
      %v5041 = vmul.f32 %v5009, 0.7978846
      %v5042 = vmul.f32 %v5010, 0.7978846
      %v5043 = vtanh.pop %v5011
      %v5044 = vtanh.pop %v5012
      %v5045 = vtanh.pop %v5013
      %v5046 = vtanh.pop %v5014
      %v5047 = vtanh.pop %v5015
      %v5048 = vtanh.pop %v5016
      %v5049 = vtanh.pop %v5017
      %v5050 = vtanh.pop %v5018
      %v5051 = vtanh.pop %v5019
      %v5052 = vtanh.pop %v5020
      %v5053 = vtanh.pop %v5021
      %v5054 = vtanh.pop %v5022
      %v5055 = vtanh.pop %v5023
      %v5056 = vtanh.pop %v5024
      %v5057 = vtanh.pop %v5025
      %v5058 = vtanh.pop %v5026
      %v5059 = vtanh.pop %v5027
      %v5060 = vtanh.pop %v5028
      %v5061 = vtanh.pop %v5029
      %v5062 = vtanh.pop %v5030
      %v5063 = vtanh.pop %v5031
      %v5064 = vtanh.pop %v5032
      %v5065 = vtanh.pop %v5033
      %v5066 = vtanh.pop %v5034
      %v5067 = vtanh.pop %v5035
      %v5068 = vtanh.pop %v5036
      %v5069 = vtanh.pop %v5037
      %v5070 = vtanh.pop %v5038
      %v5071 = vtanh.pop %v5039
      %v5072 = vtanh.pop %v5040
      %v5073 = vtanh.pop %v5041
      %v5074 = vtanh.pop %v5042
      %v5075 = vadd.f32 %v5043, 1.0
      %v5076 = vadd.f32 %v5044, 1.0
      %v5077 = vadd.f32 %v5045, 1.0
      %v5078 = vadd.f32 %v5046, 1.0
      %v5079 = vadd.f32 %v5047, 1.0
      %v5080 = vadd.f32 %v5048, 1.0
      %v5081 = vadd.f32 %v5049, 1.0
      %v5082 = vadd.f32 %v5050, 1.0
      %v5083 = vadd.f32 %v5051, 1.0
      %v5084 = vadd.f32 %v5052, 1.0
      %v5085 = vadd.f32 %v5053, 1.0
      %v5086 = vadd.f32 %v5054, 1.0
      %v5087 = vadd.f32 %v5055, 1.0
      %v5088 = vadd.f32 %v5056, 1.0
      %v5089 = vadd.f32 %v5057, 1.0
      %v5090 = vadd.f32 %v5058, 1.0
      %v5091 = vadd.f32 %v5059, 1.0
      %v5092 = vadd.f32 %v5060, 1.0
      %v5093 = vadd.f32 %v5061, 1.0
      %v5094 = vadd.f32 %v5062, 1.0
      %v5095 = vadd.f32 %v5063, 1.0
      %v5096 = vadd.f32 %v5064, 1.0
      %v5097 = vadd.f32 %v5065, 1.0
      %v5098 = vadd.f32 %v5066, 1.0
      %v5099 = vadd.f32 %v5067, 1.0
      %v5100 = vadd.f32 %v5068, 1.0
      %v5101 = vadd.f32 %v5069, 1.0
      %v5102 = vadd.f32 %v5070, 1.0
      %v5103 = vadd.f32 %v5071, 1.0
      %v5104 = vadd.f32 %v5072, 1.0
      %v5105 = vadd.f32 %v5073, 1.0
      %v5106 = vadd.f32 %v5074, 1.0
      %v5107 = vmul.f32 %v5075, 0.5
      %v5108 = vmul.f32 %v5076, 0.5
      %v5109 = vmul.f32 %v5077, 0.5
      %v5110 = vmul.f32 %v5078, 0.5
      %v5111 = vmul.f32 %v5079, 0.5
      %v5112 = vmul.f32 %v5080, 0.5
      %v5113 = vmul.f32 %v5081, 0.5
      %v5114 = vmul.f32 %v5082, 0.5
      %v5115 = vmul.f32 %v5083, 0.5
      %v5116 = vmul.f32 %v5084, 0.5
      %v5117 = vmul.f32 %v5085, 0.5
      %v5118 = vmul.f32 %v5086, 0.5
      %v5119 = vmul.f32 %v5087, 0.5
      %v5120 = vmul.f32 %v5088, 0.5
      %v5121 = vmul.f32 %v5089, 0.5
      %v5122 = vmul.f32 %v5090, 0.5
      %v5123 = vmul.f32 %v5091, 0.5
      %v5124 = vmul.f32 %v5092, 0.5
      %v5125 = vmul.f32 %v5093, 0.5
      %v5126 = vmul.f32 %v5094, 0.5
      %v5127 = vmul.f32 %v5095, 0.5
      %v5128 = vmul.f32 %v5096, 0.5
      %v5129 = vmul.f32 %v5097, 0.5
      %v5130 = vmul.f32 %v5098, 0.5
      %v5131 = vmul.f32 %v5099, 0.5
      %v5132 = vmul.f32 %v5100, 0.5
      %v5133 = vmul.f32 %v5101, 0.5
      %v5134 = vmul.f32 %v5102, 0.5
      %v5135 = vmul.f32 %v5103, 0.5
      %v5136 = vmul.f32 %v5104, 0.5
      %v5137 = vmul.f32 %v5105, 0.5
      %v5138 = vmul.f32 %v5106, 0.5
      %v5139 = vmul.f32 %v4851, %v5107
      %v5140 = vmul.f32 %v4852, %v5108
      %v5141 = vmul.f32 %v4853, %v5109
      %v5142 = vmul.f32 %v4854, %v5110
      %v5143 = vmul.f32 %v4855, %v5111
      %v5144 = vmul.f32 %v4856, %v5112
      %v5145 = vmul.f32 %v4857, %v5113
      %v5146 = vmul.f32 %v4858, %v5114
      %v5147 = vmul.f32 %v4859, %v5115
      %v5148 = vmul.f32 %v4860, %v5116
      %v5149 = vmul.f32 %v4861, %v5117
      %v5150 = vmul.f32 %v4862, %v5118
      %v5151 = vmul.f32 %v4863, %v5119
      %v5152 = vmul.f32 %v4864, %v5120
      %v5153 = vmul.f32 %v4865, %v5121
      %v5154 = vmul.f32 %v4866, %v5122
      %v5155 = vmul.f32 %v4867, %v5123
      %v5156 = vmul.f32 %v4868, %v5124
      %v5157 = vmul.f32 %v4869, %v5125
      %v5158 = vmul.f32 %v4870, %v5126
      %v5159 = vmul.f32 %v4871, %v5127
      %v5160 = vmul.f32 %v4872, %v5128
      %v5161 = vmul.f32 %v4873, %v5129
      %v5162 = vmul.f32 %v4874, %v5130
      %v5163 = vmul.f32 %v4875, %v5131
      %v5164 = vmul.f32 %v4876, %v5132
      %v5165 = vmul.f32 %v4877, %v5133
      %v5166 = vmul.f32 %v4878, %v5134
      %v5167 = vmul.f32 %v4879, %v5135
      %v5168 = vmul.f32 %v4880, %v5136
      %v5169 = vmul.f32 %v4881, %v5137
      %v5170 = vmul.f32 %v4882, %v5138
      %vm5171 = vcmask 122880
      %v5172 = vsel %vm5171, %v557, 0.0
      %5173 = vadd.xlane.f32.xlu0 %v5172
      %v5174 = vpop.xlane.xlu0 %5173
      %v5175 = vsel %vm5171, %v558, 0.0
      %5176 = vadd.xlane.f32.xlu0 %v5175
      %v5177 = vpop.xlane.xlu0 %5176
      %v5178 = vsel %vm5171, %v559, 0.0
      %5179 = vadd.xlane.f32.xlu0 %v5178
      %v5180 = vpop.xlane.xlu0 %5179
      %v5181 = vsel %vm5171, %v560, 0.0
      %5182 = vadd.xlane.f32.xlu0 %v5181
      %v5183 = vpop.xlane.xlu0 %5182
      %v5184 = vsel %vm5171, %v561, 0.0
      %5185 = vadd.xlane.f32.xlu0 %v5184
      %v5186 = vpop.xlane.xlu0 %5185
      %v5187 = vsel %vm5171, %v562, 0.0
      %5188 = vadd.xlane.f32.xlu0 %v5187
      %v5189 = vpop.xlane.xlu0 %5188
      %v5190 = vsel %vm5171, %v563, 0.0
      %5191 = vadd.xlane.f32.xlu0 %v5190
      %v5192 = vpop.xlane.xlu0 %5191
      %v5193 = vsel %vm5171, %v564, 0.0
      %5194 = vadd.xlane.f32.xlu0 %v5193
      %v5195 = vpop.xlane.xlu0 %5194
      %v5196 = vsel %vm5171, %v565, 0.0
      %5197 = vadd.xlane.f32.xlu0 %v5196
      %v5198 = vpop.xlane.xlu0 %5197
      %v5199 = vsel %vm5171, %v566, 0.0
      %5200 = vadd.xlane.f32.xlu0 %v5199
      %v5201 = vpop.xlane.xlu0 %5200
      %v5202 = vsel %vm5171, %v567, 0.0
      %5203 = vadd.xlane.f32.xlu0 %v5202
      %v5204 = vpop.xlane.xlu0 %5203
      %v5205 = vsel %vm5171, %v568, 0.0
      %5206 = vadd.xlane.f32.xlu0 %v5205
      %v5207 = vpop.xlane.xlu0 %5206
      %v5208 = vsel %vm5171, %v569, 0.0
      %5209 = vadd.xlane.f32.xlu0 %v5208
      %v5210 = vpop.xlane.xlu0 %5209
      %v5211 = vsel %vm5171, %v570, 0.0
      %5212 = vadd.xlane.f32.xlu0 %v5211
      %v5213 = vpop.xlane.xlu0 %5212
      %v5214 = vsel %vm5171, %v571, 0.0
      %5215 = vadd.xlane.f32.xlu0 %v5214
      %v5216 = vpop.xlane.xlu0 %5215
      %v5217 = vsel %vm5171, %v572, 0.0
      %5218 = vadd.xlane.f32.xlu0 %v5217
      %v5219 = vpop.xlane.xlu0 %5218
      %v5220 = vmax.f32 %v5174, 1.0
      %v5221 = vmax.f32 %v5177, 1.0
      %v5222 = vmax.f32 %v5180, 1.0
      %v5223 = vmax.f32 %v5183, 1.0
      %v5224 = vmax.f32 %v5186, 1.0
      %v5225 = vmax.f32 %v5189, 1.0
      %v5226 = vmax.f32 %v5192, 1.0
      %v5227 = vmax.f32 %v5195, 1.0
      %v5228 = vmax.f32 %v5198, 1.0
      %v5229 = vmax.f32 %v5201, 1.0
      %v5230 = vmax.f32 %v5204, 1.0
      %v5231 = vmax.f32 %v5207, 1.0
      %v5232 = vmax.f32 %v5210, 1.0
      %v5233 = vmax.f32 %v5213, 1.0
      %v5234 = vmax.f32 %v5216, 1.0
      %v5235 = vmax.f32 %v5219, 1.0
      %v5237 = vsel %vm2232, %v557, 0
      %5239 = vmatpush.msra.mxu0 0.0
      %5240 = vmatpush.msra.mxu0 0.0
      %5241 = vmatpush.msra.mxu0 0.0
      %5242 = vmatpush.msra.mxu0 0.0
      %5243 = vmatpush.msra.mxu0 0.0
      %5244 = vmatpush.msra.mxu0 0.0
      %5245 = vmatpush.msra.mxu0 0.0
      %5246 = vmatpush.msra.mxu0 0.0
      %5247 = vmatpush.msra.mxu0 0.0
      %5248 = vmatpush.msra.mxu0 0.0
      %5249 = vmatpush.msra.mxu0 0.0
      %5250 = vmatpush.msra.mxu0 0.0
      %5251 = vmatpush.msra.mxu0 0.0
      %5252 = vmatpush.msra.mxu0 0.0
      %5253 = vmatpush.msra.mxu0 %v5140
      %5254 = vmatpush.msra.mxu0 %v5139
      %5255 = vmatmul.f32.gmra.mxu0 %v5237
      %v5256 = vpop.f32.mrf.mxu0
      %v5257 = vadd.f32 0.0, %v5256
      %5258 = vdwg.mxu0
      %v5260 = vsel %vm2232, %v558, 0
      %5262 = vmatpush.msra.mxu0 0.0
      %5263 = vmatpush.msra.mxu0 0.0
      %5264 = vmatpush.msra.mxu0 0.0
      %5265 = vmatpush.msra.mxu0 0.0
      %5266 = vmatpush.msra.mxu0 0.0
      %5267 = vmatpush.msra.mxu0 0.0
      %5268 = vmatpush.msra.mxu0 0.0
      %5269 = vmatpush.msra.mxu0 0.0
      %5270 = vmatpush.msra.mxu0 0.0
      %5271 = vmatpush.msra.mxu0 0.0
      %5272 = vmatpush.msra.mxu0 0.0
      %5273 = vmatpush.msra.mxu0 0.0
      %5274 = vmatpush.msra.mxu0 0.0
      %5275 = vmatpush.msra.mxu0 0.0
      %5276 = vmatpush.msra.mxu0 %v5142
      %5277 = vmatpush.msra.mxu0 %v5141
      %5278 = vmatmul.f32.gmra.mxu0 %v5260
      %v5279 = vpop.f32.mrf.mxu0
      %v5280 = vadd.f32 0.0, %v5279
      %5281 = vdwg.mxu0
      %v5283 = vsel %vm2232, %v559, 0
      %5285 = vmatpush.msra.mxu0 0.0
      %5286 = vmatpush.msra.mxu0 0.0
      %5287 = vmatpush.msra.mxu0 0.0
      %5288 = vmatpush.msra.mxu0 0.0
      %5289 = vmatpush.msra.mxu0 0.0
      %5290 = vmatpush.msra.mxu0 0.0
      %5291 = vmatpush.msra.mxu0 0.0
      %5292 = vmatpush.msra.mxu0 0.0
      %5293 = vmatpush.msra.mxu0 0.0
      %5294 = vmatpush.msra.mxu0 0.0
      %5295 = vmatpush.msra.mxu0 0.0
      %5296 = vmatpush.msra.mxu0 0.0
      %5297 = vmatpush.msra.mxu0 0.0
      %5298 = vmatpush.msra.mxu0 0.0
      %5299 = vmatpush.msra.mxu0 %v5144
      %5300 = vmatpush.msra.mxu0 %v5143
      %5301 = vmatmul.f32.gmra.mxu0 %v5283
      %v5302 = vpop.f32.mrf.mxu0
      %v5303 = vadd.f32 0.0, %v5302
      %5304 = vdwg.mxu0
      %v5306 = vsel %vm2232, %v560, 0
      %5308 = vmatpush.msra.mxu0 0.0
      %5309 = vmatpush.msra.mxu0 0.0
      %5310 = vmatpush.msra.mxu0 0.0
      %5311 = vmatpush.msra.mxu0 0.0
      %5312 = vmatpush.msra.mxu0 0.0
      %5313 = vmatpush.msra.mxu0 0.0
      %5314 = vmatpush.msra.mxu0 0.0
      %5315 = vmatpush.msra.mxu0 0.0
      %5316 = vmatpush.msra.mxu0 0.0
      %5317 = vmatpush.msra.mxu0 0.0
      %5318 = vmatpush.msra.mxu0 0.0
      %5319 = vmatpush.msra.mxu0 0.0
      %5320 = vmatpush.msra.mxu0 0.0
      %5321 = vmatpush.msra.mxu0 0.0
      %5322 = vmatpush.msra.mxu0 %v5146
      %5323 = vmatpush.msra.mxu0 %v5145
      %5324 = vmatmul.f32.gmra.mxu0 %v5306
      %v5325 = vpop.f32.mrf.mxu0
      %v5326 = vadd.f32 0.0, %v5325
      %5327 = vdwg.mxu0
      %v5329 = vsel %vm2232, %v561, 0
      %5331 = vmatpush.msra.mxu0 0.0
      %5332 = vmatpush.msra.mxu0 0.0
      %5333 = vmatpush.msra.mxu0 0.0
      %5334 = vmatpush.msra.mxu0 0.0
      %5335 = vmatpush.msra.mxu0 0.0
      %5336 = vmatpush.msra.mxu0 0.0
      %5337 = vmatpush.msra.mxu0 0.0
      %5338 = vmatpush.msra.mxu0 0.0
      %5339 = vmatpush.msra.mxu0 0.0
      %5340 = vmatpush.msra.mxu0 0.0
      %5341 = vmatpush.msra.mxu0 0.0
      %5342 = vmatpush.msra.mxu0 0.0
      %5343 = vmatpush.msra.mxu0 0.0
      %5344 = vmatpush.msra.mxu0 0.0
      %5345 = vmatpush.msra.mxu0 %v5148
      %5346 = vmatpush.msra.mxu0 %v5147
      %5347 = vmatmul.f32.gmra.mxu0 %v5329
      %v5348 = vpop.f32.mrf.mxu0
      %v5349 = vadd.f32 0.0, %v5348
      %5350 = vdwg.mxu0
      %v5352 = vsel %vm2232, %v562, 0
      %5354 = vmatpush.msra.mxu0 0.0
      %5355 = vmatpush.msra.mxu0 0.0
      %5356 = vmatpush.msra.mxu0 0.0
      %5357 = vmatpush.msra.mxu0 0.0
      %5358 = vmatpush.msra.mxu0 0.0
      %5359 = vmatpush.msra.mxu0 0.0
      %5360 = vmatpush.msra.mxu0 0.0
      %5361 = vmatpush.msra.mxu0 0.0
      %5362 = vmatpush.msra.mxu0 0.0
      %5363 = vmatpush.msra.mxu0 0.0
      %5364 = vmatpush.msra.mxu0 0.0
      %5365 = vmatpush.msra.mxu0 0.0
      %5366 = vmatpush.msra.mxu0 0.0
      %5367 = vmatpush.msra.mxu0 0.0
      %5368 = vmatpush.msra.mxu0 %v5150
      %5369 = vmatpush.msra.mxu0 %v5149
      %5370 = vmatmul.f32.gmra.mxu0 %v5352
      %v5371 = vpop.f32.mrf.mxu0
      %v5372 = vadd.f32 0.0, %v5371
      %5373 = vdwg.mxu0
      %v5375 = vsel %vm2232, %v563, 0
      %5377 = vmatpush.msra.mxu0 0.0
      %5378 = vmatpush.msra.mxu0 0.0
      %5379 = vmatpush.msra.mxu0 0.0
      %5380 = vmatpush.msra.mxu0 0.0
      %5381 = vmatpush.msra.mxu0 0.0
      %5382 = vmatpush.msra.mxu0 0.0
      %5383 = vmatpush.msra.mxu0 0.0
      %5384 = vmatpush.msra.mxu0 0.0
      %5385 = vmatpush.msra.mxu0 0.0
      %5386 = vmatpush.msra.mxu0 0.0
      %5387 = vmatpush.msra.mxu0 0.0
      %5388 = vmatpush.msra.mxu0 0.0
      %5389 = vmatpush.msra.mxu0 0.0
      %5390 = vmatpush.msra.mxu0 0.0
      %5391 = vmatpush.msra.mxu0 %v5152
      %5392 = vmatpush.msra.mxu0 %v5151
      %5393 = vmatmul.f32.gmra.mxu0 %v5375
      %v5394 = vpop.f32.mrf.mxu0
      %v5395 = vadd.f32 0.0, %v5394
      %5396 = vdwg.mxu0
      %v5398 = vsel %vm2232, %v564, 0
      %5400 = vmatpush.msra.mxu0 0.0
      %5401 = vmatpush.msra.mxu0 0.0
      %5402 = vmatpush.msra.mxu0 0.0
      %5403 = vmatpush.msra.mxu0 0.0
      %5404 = vmatpush.msra.mxu0 0.0
      %5405 = vmatpush.msra.mxu0 0.0
      %5406 = vmatpush.msra.mxu0 0.0
      %5407 = vmatpush.msra.mxu0 0.0
      %5408 = vmatpush.msra.mxu0 0.0
      %5409 = vmatpush.msra.mxu0 0.0
      %5410 = vmatpush.msra.mxu0 0.0
      %5411 = vmatpush.msra.mxu0 0.0
      %5412 = vmatpush.msra.mxu0 0.0
      %5413 = vmatpush.msra.mxu0 0.0
      %5414 = vmatpush.msra.mxu0 %v5154
      %5415 = vmatpush.msra.mxu0 %v5153
      %5416 = vmatmul.f32.gmra.mxu0 %v5398
      %v5417 = vpop.f32.mrf.mxu0
      %v5418 = vadd.f32 0.0, %v5417
      %5419 = vdwg.mxu0
      %v5421 = vsel %vm2232, %v565, 0
      %5423 = vmatpush.msra.mxu0 0.0
      %5424 = vmatpush.msra.mxu0 0.0
      %5425 = vmatpush.msra.mxu0 0.0
      %5426 = vmatpush.msra.mxu0 0.0
      %5427 = vmatpush.msra.mxu0 0.0
      %5428 = vmatpush.msra.mxu0 0.0
      %5429 = vmatpush.msra.mxu0 0.0
      %5430 = vmatpush.msra.mxu0 0.0
      %5431 = vmatpush.msra.mxu0 0.0
      %5432 = vmatpush.msra.mxu0 0.0
      %5433 = vmatpush.msra.mxu0 0.0
      %5434 = vmatpush.msra.mxu0 0.0
      %5435 = vmatpush.msra.mxu0 0.0
      %5436 = vmatpush.msra.mxu0 0.0
      %5437 = vmatpush.msra.mxu0 %v5156
      %5438 = vmatpush.msra.mxu0 %v5155
      %5439 = vmatmul.f32.gmra.mxu0 %v5421
      %v5440 = vpop.f32.mrf.mxu0
      %v5441 = vadd.f32 0.0, %v5440
      %5442 = vdwg.mxu0
      %v5444 = vsel %vm2232, %v566, 0
      %5446 = vmatpush.msra.mxu0 0.0
      %5447 = vmatpush.msra.mxu0 0.0
      %5448 = vmatpush.msra.mxu0 0.0
      %5449 = vmatpush.msra.mxu0 0.0
      %5450 = vmatpush.msra.mxu0 0.0
      %5451 = vmatpush.msra.mxu0 0.0
      %5452 = vmatpush.msra.mxu0 0.0
      %5453 = vmatpush.msra.mxu0 0.0
      %5454 = vmatpush.msra.mxu0 0.0
      %5455 = vmatpush.msra.mxu0 0.0
      %5456 = vmatpush.msra.mxu0 0.0
      %5457 = vmatpush.msra.mxu0 0.0
      %5458 = vmatpush.msra.mxu0 0.0
      %5459 = vmatpush.msra.mxu0 0.0
      %5460 = vmatpush.msra.mxu0 %v5158
      %5461 = vmatpush.msra.mxu0 %v5157
      %5462 = vmatmul.f32.gmra.mxu0 %v5444
      %v5463 = vpop.f32.mrf.mxu0
      %v5464 = vadd.f32 0.0, %v5463
      %5465 = vdwg.mxu0
      %v5467 = vsel %vm2232, %v567, 0
      %5469 = vmatpush.msra.mxu0 0.0
      %5470 = vmatpush.msra.mxu0 0.0
      %5471 = vmatpush.msra.mxu0 0.0
      %5472 = vmatpush.msra.mxu0 0.0
      %5473 = vmatpush.msra.mxu0 0.0
      %5474 = vmatpush.msra.mxu0 0.0
      %5475 = vmatpush.msra.mxu0 0.0
      %5476 = vmatpush.msra.mxu0 0.0
      %5477 = vmatpush.msra.mxu0 0.0
      %5478 = vmatpush.msra.mxu0 0.0
      %5479 = vmatpush.msra.mxu0 0.0
      %5480 = vmatpush.msra.mxu0 0.0
      %5481 = vmatpush.msra.mxu0 0.0
      %5482 = vmatpush.msra.mxu0 0.0
      %5483 = vmatpush.msra.mxu0 %v5160
      %5484 = vmatpush.msra.mxu0 %v5159
      %5485 = vmatmul.f32.gmra.mxu0 %v5467
      %v5486 = vpop.f32.mrf.mxu0
      %v5487 = vadd.f32 0.0, %v5486
      %5488 = vdwg.mxu0
      %v5490 = vsel %vm2232, %v568, 0
      %5492 = vmatpush.msra.mxu0 0.0
      %5493 = vmatpush.msra.mxu0 0.0
      %5494 = vmatpush.msra.mxu0 0.0
      %5495 = vmatpush.msra.mxu0 0.0
      %5496 = vmatpush.msra.mxu0 0.0
      %5497 = vmatpush.msra.mxu0 0.0
      %5498 = vmatpush.msra.mxu0 0.0
      %5499 = vmatpush.msra.mxu0 0.0
      %5500 = vmatpush.msra.mxu0 0.0
      %5501 = vmatpush.msra.mxu0 0.0
      %5502 = vmatpush.msra.mxu0 0.0
      %5503 = vmatpush.msra.mxu0 0.0
      %5504 = vmatpush.msra.mxu0 0.0
      %5505 = vmatpush.msra.mxu0 0.0
      %5506 = vmatpush.msra.mxu0 %v5162
      %5507 = vmatpush.msra.mxu0 %v5161
      %5508 = vmatmul.f32.gmra.mxu0 %v5490
      %v5509 = vpop.f32.mrf.mxu0
      %v5510 = vadd.f32 0.0, %v5509
      %5511 = vdwg.mxu0
      %v5513 = vsel %vm2232, %v569, 0
      %5515 = vmatpush.msra.mxu0 0.0
      %5516 = vmatpush.msra.mxu0 0.0
      %5517 = vmatpush.msra.mxu0 0.0
      %5518 = vmatpush.msra.mxu0 0.0
      %5519 = vmatpush.msra.mxu0 0.0
      %5520 = vmatpush.msra.mxu0 0.0
      %5521 = vmatpush.msra.mxu0 0.0
      %5522 = vmatpush.msra.mxu0 0.0
      %5523 = vmatpush.msra.mxu0 0.0
      %5524 = vmatpush.msra.mxu0 0.0
      %5525 = vmatpush.msra.mxu0 0.0
      %5526 = vmatpush.msra.mxu0 0.0
      %5527 = vmatpush.msra.mxu0 0.0
      %5528 = vmatpush.msra.mxu0 0.0
      %5529 = vmatpush.msra.mxu0 %v5164
      %5530 = vmatpush.msra.mxu0 %v5163
      %5531 = vmatmul.f32.gmra.mxu0 %v5513
      %v5532 = vpop.f32.mrf.mxu0
      %v5533 = vadd.f32 0.0, %v5532
      %5534 = vdwg.mxu0
      %v5536 = vsel %vm2232, %v570, 0
      %5538 = vmatpush.msra.mxu0 0.0
      %5539 = vmatpush.msra.mxu0 0.0
      %5540 = vmatpush.msra.mxu0 0.0
      %5541 = vmatpush.msra.mxu0 0.0
      %5542 = vmatpush.msra.mxu0 0.0
      %5543 = vmatpush.msra.mxu0 0.0
      %5544 = vmatpush.msra.mxu0 0.0
      %5545 = vmatpush.msra.mxu0 0.0
      %5546 = vmatpush.msra.mxu0 0.0
      %5547 = vmatpush.msra.mxu0 0.0
      %5548 = vmatpush.msra.mxu0 0.0
      %5549 = vmatpush.msra.mxu0 0.0
      %5550 = vmatpush.msra.mxu0 0.0
      %5551 = vmatpush.msra.mxu0 0.0
      %5552 = vmatpush.msra.mxu0 %v5166
      %5553 = vmatpush.msra.mxu0 %v5165
      %5554 = vmatmul.f32.gmra.mxu0 %v5536
      %v5555 = vpop.f32.mrf.mxu0
      %v5556 = vadd.f32 0.0, %v5555
      %5557 = vdwg.mxu0
      %v5559 = vsel %vm2232, %v571, 0
      %5561 = vmatpush.msra.mxu0 0.0
      %5562 = vmatpush.msra.mxu0 0.0
      %5563 = vmatpush.msra.mxu0 0.0
      %5564 = vmatpush.msra.mxu0 0.0
      %5565 = vmatpush.msra.mxu0 0.0
      %5566 = vmatpush.msra.mxu0 0.0
      %5567 = vmatpush.msra.mxu0 0.0
      %5568 = vmatpush.msra.mxu0 0.0
      %5569 = vmatpush.msra.mxu0 0.0
      %5570 = vmatpush.msra.mxu0 0.0
      %5571 = vmatpush.msra.mxu0 0.0
      %5572 = vmatpush.msra.mxu0 0.0
      %5573 = vmatpush.msra.mxu0 0.0
      %5574 = vmatpush.msra.mxu0 0.0
      %5575 = vmatpush.msra.mxu0 %v5168
      %5576 = vmatpush.msra.mxu0 %v5167
      %5577 = vmatmul.f32.gmra.mxu0 %v5559
      %v5578 = vpop.f32.mrf.mxu0
      %v5579 = vadd.f32 0.0, %v5578
      %5580 = vdwg.mxu0
      %v5582 = vsel %vm2232, %v572, 0
      %5584 = vmatpush.msra.mxu0 0.0
      %5585 = vmatpush.msra.mxu0 0.0
      %5586 = vmatpush.msra.mxu0 0.0
      %5587 = vmatpush.msra.mxu0 0.0
      %5588 = vmatpush.msra.mxu0 0.0
      %5589 = vmatpush.msra.mxu0 0.0
      %5590 = vmatpush.msra.mxu0 0.0
      %5591 = vmatpush.msra.mxu0 0.0
      %5592 = vmatpush.msra.mxu0 0.0
      %5593 = vmatpush.msra.mxu0 0.0
      %5594 = vmatpush.msra.mxu0 0.0
      %5595 = vmatpush.msra.mxu0 0.0
      %5596 = vmatpush.msra.mxu0 0.0
      %5597 = vmatpush.msra.mxu0 0.0
      %5598 = vmatpush.msra.mxu0 %v5170
      %5599 = vmatpush.msra.mxu0 %v5169
      %5600 = vmatmul.f32.gmra.mxu0 %v5582
      %v5601 = vpop.f32.mrf.mxu0
      %v5602 = vadd.f32 0.0, %v5601
      %5603 = vdwg.mxu0
      %v5604 = vrcp.pop %v5220
      %v5605 = vmul.f32 %v5220, %v5604
      %v5606 = vsub.f32 1.0, %v5605
      %v5607 = vmul.f32 %v5604, %v5606
      %v5608 = vadd.f32 %v5604, %v5607
      %vm5609 = vweird.f32 %v5220
      %vm5610 = vweird.f32 %v5604
      %vm5611 = vmor %vm5609, %vm5610
      %v5612 = vsel %vm5611, %v5604, %v5608
      %v5613 = vand.u32 2147483647, %v5220
      %vm5614 = vcmp.eq.f32.partialorder %v5613, 8.507059e+37
      %v5615 = vand.u32 %v5220, 2147483648
      %v5616 = vor.u32 1.1754944e-38, %v5615
      %v5617 = vsel %vm5614, %v5616, %v5612
      %v5618 = vmul.f32 %v5257, %v5617
      %v5619 = vrcp.pop %v5221
      %v5620 = vmul.f32 %v5221, %v5619
      %v5621 = vsub.f32 1.0, %v5620
      %v5622 = vmul.f32 %v5619, %v5621
      %v5623 = vadd.f32 %v5619, %v5622
      %vm5624 = vweird.f32 %v5221
      %vm5625 = vweird.f32 %v5619
      %vm5626 = vmor %vm5624, %vm5625
      %v5627 = vsel %vm5626, %v5619, %v5623
      %v5628 = vand.u32 2147483647, %v5221
      %vm5629 = vcmp.eq.f32.partialorder %v5628, 8.507059e+37
      %v5630 = vand.u32 %v5221, 2147483648
      %v5631 = vor.u32 1.1754944e-38, %v5630
      %v5632 = vsel %vm5629, %v5631, %v5627
      %v5633 = vmul.f32 %v5280, %v5632
      %v5634 = vrcp.pop %v5222
      %v5635 = vmul.f32 %v5222, %v5634
      %v5636 = vsub.f32 1.0, %v5635
      %v5637 = vmul.f32 %v5634, %v5636
      %v5638 = vadd.f32 %v5634, %v5637
      %vm5639 = vweird.f32 %v5222
      %vm5640 = vweird.f32 %v5634
      %vm5641 = vmor %vm5639, %vm5640
      %v5642 = vsel %vm5641, %v5634, %v5638
      %v5643 = vand.u32 2147483647, %v5222
      %vm5644 = vcmp.eq.f32.partialorder %v5643, 8.507059e+37
      %v5645 = vand.u32 %v5222, 2147483648
      %v5646 = vor.u32 1.1754944e-38, %v5645
      %v5647 = vsel %vm5644, %v5646, %v5642
      %v5648 = vmul.f32 %v5303, %v5647
      %v5649 = vrcp.pop %v5223
      %v5650 = vmul.f32 %v5223, %v5649
      %v5651 = vsub.f32 1.0, %v5650
      %v5652 = vmul.f32 %v5649, %v5651
      %v5653 = vadd.f32 %v5649, %v5652
      %vm5654 = vweird.f32 %v5223
      %vm5655 = vweird.f32 %v5649
      %vm5656 = vmor %vm5654, %vm5655
      %v5657 = vsel %vm5656, %v5649, %v5653
      %v5658 = vand.u32 2147483647, %v5223
      %vm5659 = vcmp.eq.f32.partialorder %v5658, 8.507059e+37
      %v5660 = vand.u32 %v5223, 2147483648
      %v5661 = vor.u32 1.1754944e-38, %v5660
      %v5662 = vsel %vm5659, %v5661, %v5657
      %v5663 = vmul.f32 %v5326, %v5662
      %v5664 = vrcp.pop %v5224
      %v5665 = vmul.f32 %v5224, %v5664
      %v5666 = vsub.f32 1.0, %v5665
      %v5667 = vmul.f32 %v5664, %v5666
      %v5668 = vadd.f32 %v5664, %v5667
      %vm5669 = vweird.f32 %v5224
      %vm5670 = vweird.f32 %v5664
      %vm5671 = vmor %vm5669, %vm5670
      %v5672 = vsel %vm5671, %v5664, %v5668
      %v5673 = vand.u32 2147483647, %v5224
      %vm5674 = vcmp.eq.f32.partialorder %v5673, 8.507059e+37
      %v5675 = vand.u32 %v5224, 2147483648
      %v5676 = vor.u32 1.1754944e-38, %v5675
      %v5677 = vsel %vm5674, %v5676, %v5672
      %v5678 = vmul.f32 %v5349, %v5677
      %v5679 = vrcp.pop %v5225
      %v5680 = vmul.f32 %v5225, %v5679
      %v5681 = vsub.f32 1.0, %v5680
      %v5682 = vmul.f32 %v5679, %v5681
      %v5683 = vadd.f32 %v5679, %v5682
      %vm5684 = vweird.f32 %v5225
      %vm5685 = vweird.f32 %v5679
      %vm5686 = vmor %vm5684, %vm5685
      %v5687 = vsel %vm5686, %v5679, %v5683
      %v5688 = vand.u32 2147483647, %v5225
      %vm5689 = vcmp.eq.f32.partialorder %v5688, 8.507059e+37
      %v5690 = vand.u32 %v5225, 2147483648
      %v5691 = vor.u32 1.1754944e-38, %v5690
      %v5692 = vsel %vm5689, %v5691, %v5687
      %v5693 = vmul.f32 %v5372, %v5692
      %v5694 = vrcp.pop %v5226
      %v5695 = vmul.f32 %v5226, %v5694
      %v5696 = vsub.f32 1.0, %v5695
      %v5697 = vmul.f32 %v5694, %v5696
      %v5698 = vadd.f32 %v5694, %v5697
      %vm5699 = vweird.f32 %v5226
      %vm5700 = vweird.f32 %v5694
      %vm5701 = vmor %vm5699, %vm5700
      %v5702 = vsel %vm5701, %v5694, %v5698
      %v5703 = vand.u32 2147483647, %v5226
      %vm5704 = vcmp.eq.f32.partialorder %v5703, 8.507059e+37
      %v5705 = vand.u32 %v5226, 2147483648
      %v5706 = vor.u32 1.1754944e-38, %v5705
      %v5707 = vsel %vm5704, %v5706, %v5702
      %v5708 = vmul.f32 %v5395, %v5707
      %v5709 = vrcp.pop %v5227
      %v5710 = vmul.f32 %v5227, %v5709
      %v5711 = vsub.f32 1.0, %v5710
      %v5712 = vmul.f32 %v5709, %v5711
      %v5713 = vadd.f32 %v5709, %v5712
      %vm5714 = vweird.f32 %v5227
      %vm5715 = vweird.f32 %v5709
      %vm5716 = vmor %vm5714, %vm5715
      %v5717 = vsel %vm5716, %v5709, %v5713
      %v5718 = vand.u32 2147483647, %v5227
      %vm5719 = vcmp.eq.f32.partialorder %v5718, 8.507059e+37
      %v5720 = vand.u32 %v5227, 2147483648
      %v5721 = vor.u32 1.1754944e-38, %v5720
      %v5722 = vsel %vm5719, %v5721, %v5717
      %v5723 = vmul.f32 %v5418, %v5722
      %v5724 = vrcp.pop %v5228
      %v5725 = vmul.f32 %v5228, %v5724
      %v5726 = vsub.f32 1.0, %v5725
      %v5727 = vmul.f32 %v5724, %v5726
      %v5728 = vadd.f32 %v5724, %v5727
      %vm5729 = vweird.f32 %v5228
      %vm5730 = vweird.f32 %v5724
      %vm5731 = vmor %vm5729, %vm5730
      %v5732 = vsel %vm5731, %v5724, %v5728
      %v5733 = vand.u32 2147483647, %v5228
      %vm5734 = vcmp.eq.f32.partialorder %v5733, 8.507059e+37
      %v5735 = vand.u32 %v5228, 2147483648
      %v5736 = vor.u32 1.1754944e-38, %v5735
      %v5737 = vsel %vm5734, %v5736, %v5732
      %v5738 = vmul.f32 %v5441, %v5737
      %v5739 = vrcp.pop %v5229
      %v5740 = vmul.f32 %v5229, %v5739
      %v5741 = vsub.f32 1.0, %v5740
      %v5742 = vmul.f32 %v5739, %v5741
      %v5743 = vadd.f32 %v5739, %v5742
      %vm5744 = vweird.f32 %v5229
      %vm5745 = vweird.f32 %v5739
      %vm5746 = vmor %vm5744, %vm5745
      %v5747 = vsel %vm5746, %v5739, %v5743
      %v5748 = vand.u32 2147483647, %v5229
      %vm5749 = vcmp.eq.f32.partialorder %v5748, 8.507059e+37
      %v5750 = vand.u32 %v5229, 2147483648
      %v5751 = vor.u32 1.1754944e-38, %v5750
      %v5752 = vsel %vm5749, %v5751, %v5747
      %v5753 = vmul.f32 %v5464, %v5752
      %v5754 = vrcp.pop %v5230
      %v5755 = vmul.f32 %v5230, %v5754
      %v5756 = vsub.f32 1.0, %v5755
      %v5757 = vmul.f32 %v5754, %v5756
      %v5758 = vadd.f32 %v5754, %v5757
      %vm5759 = vweird.f32 %v5230
      %vm5760 = vweird.f32 %v5754
      %vm5761 = vmor %vm5759, %vm5760
      %v5762 = vsel %vm5761, %v5754, %v5758
      %v5763 = vand.u32 2147483647, %v5230
      %vm5764 = vcmp.eq.f32.partialorder %v5763, 8.507059e+37
      %v5765 = vand.u32 %v5230, 2147483648
      %v5766 = vor.u32 1.1754944e-38, %v5765
      %v5767 = vsel %vm5764, %v5766, %v5762
      %v5768 = vmul.f32 %v5487, %v5767
      %v5769 = vrcp.pop %v5231
      %v5770 = vmul.f32 %v5231, %v5769
      %v5771 = vsub.f32 1.0, %v5770
      %v5772 = vmul.f32 %v5769, %v5771
      %v5773 = vadd.f32 %v5769, %v5772
      %vm5774 = vweird.f32 %v5231
      %vm5775 = vweird.f32 %v5769
      %vm5776 = vmor %vm5774, %vm5775
      %v5777 = vsel %vm5776, %v5769, %v5773
      %v5778 = vand.u32 2147483647, %v5231
      %vm5779 = vcmp.eq.f32.partialorder %v5778, 8.507059e+37
      %v5780 = vand.u32 %v5231, 2147483648
      %v5781 = vor.u32 1.1754944e-38, %v5780
      %v5782 = vsel %vm5779, %v5781, %v5777
      %v5783 = vmul.f32 %v5510, %v5782
      %v5784 = vrcp.pop %v5232
      %v5785 = vmul.f32 %v5232, %v5784
      %v5786 = vsub.f32 1.0, %v5785
      %v5787 = vmul.f32 %v5784, %v5786
      %v5788 = vadd.f32 %v5784, %v5787
      %vm5789 = vweird.f32 %v5232
      %vm5790 = vweird.f32 %v5784
      %vm5791 = vmor %vm5789, %vm5790
      %v5792 = vsel %vm5791, %v5784, %v5788
      %v5793 = vand.u32 2147483647, %v5232
      %vm5794 = vcmp.eq.f32.partialorder %v5793, 8.507059e+37
      %v5795 = vand.u32 %v5232, 2147483648
      %v5796 = vor.u32 1.1754944e-38, %v5795
      %v5797 = vsel %vm5794, %v5796, %v5792
      %v5798 = vmul.f32 %v5533, %v5797
      %v5799 = vrcp.pop %v5233
      %v5800 = vmul.f32 %v5233, %v5799
      %v5801 = vsub.f32 1.0, %v5800
      %v5802 = vmul.f32 %v5799, %v5801
      %v5803 = vadd.f32 %v5799, %v5802
      %vm5804 = vweird.f32 %v5233
      %vm5805 = vweird.f32 %v5799
      %vm5806 = vmor %vm5804, %vm5805
      %v5807 = vsel %vm5806, %v5799, %v5803
      %v5808 = vand.u32 2147483647, %v5233
      %vm5809 = vcmp.eq.f32.partialorder %v5808, 8.507059e+37
      %v5810 = vand.u32 %v5233, 2147483648
      %v5811 = vor.u32 1.1754944e-38, %v5810
      %v5812 = vsel %vm5809, %v5811, %v5807
      %v5813 = vmul.f32 %v5556, %v5812
      %v5814 = vrcp.pop %v5234
      %v5815 = vmul.f32 %v5234, %v5814
      %v5816 = vsub.f32 1.0, %v5815
      %v5817 = vmul.f32 %v5814, %v5816
      %v5818 = vadd.f32 %v5814, %v5817
      %vm5819 = vweird.f32 %v5234
      %vm5820 = vweird.f32 %v5814
      %vm5821 = vmor %vm5819, %vm5820
      %v5822 = vsel %vm5821, %v5814, %v5818
      %v5823 = vand.u32 2147483647, %v5234
      %vm5824 = vcmp.eq.f32.partialorder %v5823, 8.507059e+37
      %v5825 = vand.u32 %v5234, 2147483648
      %v5826 = vor.u32 1.1754944e-38, %v5825
      %v5827 = vsel %vm5824, %v5826, %v5822
      %v5828 = vmul.f32 %v5579, %v5827
      %v5829 = vrcp.pop %v5235
      %v5830 = vmul.f32 %v5235, %v5829
      %v5831 = vsub.f32 1.0, %v5830
      %v5832 = vmul.f32 %v5829, %v5831
      %v5833 = vadd.f32 %v5829, %v5832
      %vm5834 = vweird.f32 %v5235
      %vm5835 = vweird.f32 %v5829
      %vm5836 = vmor %vm5834, %vm5835
      %v5837 = vsel %vm5836, %v5829, %v5833
      %v5838 = vand.u32 2147483647, %v5235
      %vm5839 = vcmp.eq.f32.partialorder %v5838, 8.507059e+37
      %v5840 = vand.u32 %v5235, 2147483648
      %v5841 = vor.u32 1.1754944e-38, %v5840
      %v5842 = vsel %vm5839, %v5841, %v5837
      %v5843 = vmul.f32 %v5602, %v5842
      %v5844 = vld [vmem:[%s10 + $0x3] sm:$0x1]
      %v5845 = vld [vmem:[%s10 + $0x4] sm:$0x1]
      %v5846 = vld [vmem:[%s10 + $0x5] sm:$0x1]
      %v5847 = vld [vmem:[%s9] sm:$0xff]
      %v5848 = vld [vmem:[%s9 + $0x8] sm:$0xff]
      %v5849 = vld [vmem:[%s9 + $0x10] sm:$0xff]
      %v5850 = vld [vmem:[%s9 + $0x18] sm:$0xff]
      %v5851 = vld [vmem:[%s8] sm:$0xff]
      %5852 = vst [vmem:[#allocation1] ss:$9 sm:$0xff] %v573
      %s5853 = scalar_lea.vmem [#allocation1], 1
      %5854 = vst [vmem:[%s5853] ss:$9 sm:$0xff] %v574
      %s5855 = scalar_lea.vmem [#allocation1], 2
      %5856 = vst [vmem:[%s5855] ss:$9 sm:$0xff] %v575
      %s5857 = scalar_lea.vmem [#allocation1], 3
      %5858 = vst [vmem:[%s5857] ss:$9 sm:$0xff] %v576
      %s5859 = scalar_lea.vmem [#allocation1], 4
      %5860 = vst [vmem:[%s5859] ss:$9 sm:$0xff] %v577
      %s5861 = scalar_lea.vmem [#allocation1], 5
      %5862 = vst [vmem:[%s5861] ss:$9 sm:$0xff] %v578
      %s5863 = scalar_lea.vmem [#allocation1], 6
      %5864 = vst [vmem:[%s5863] ss:$9 sm:$0xff] %v579
      %s5865 = scalar_lea.vmem [#allocation1], 7
      %5866 = vst [vmem:[%s5865] ss:$9 sm:$0xff] %v580
      %v5867 = vld [vmem:[#allocation1] sm:$0xff]
      %5868 = vst [vmem:[#allocation1] ss:$9 sm:$0xff] %v581
      %5869 = vst [vmem:[%s5853] ss:$9 sm:$0xff] %v582
      %5870 = vst [vmem:[%s5855] ss:$9 sm:$0xff] %v583
      %5871 = vst [vmem:[%s5857] ss:$9 sm:$0xff] %v584
      %5872 = vst [vmem:[%s5859] ss:$9 sm:$0xff] %v585
      %5873 = vst [vmem:[%s5861] ss:$9 sm:$0xff] %v586
      %5874 = vst [vmem:[%s5863] ss:$9 sm:$0xff] %v587
      %5875 = vst [vmem:[%s5865] ss:$9 sm:$0xff] %v588
      %v5876 = vld [vmem:[#allocation1] sm:$0xff]
      %v5877 = vsel %vm847, %v5867, 0
      %v5879 = vsel %vm847, %v5876, 0
      %5881 = vmatpush.msra.mxu0 0.0
      %5882 = vmatpush.msra.mxu0 0.0
      %5883 = vmatpush.msra.mxu0 0.0
      %5884 = vmatpush.msra.mxu0 0.0
      %5885 = vmatpush.msra.mxu0 0.0
      %5886 = vmatpush.msra.mxu0 0.0
      %5887 = vmatpush.msra.mxu0 0.0
      %5888 = vmatpush.msra.mxu0 0.0
      %5889 = vmatpush.msra.mxu0 0.0
      %5890 = vmatpush.msra.mxu0 0.0
      %5891 = vmatpush.msra.mxu0 0.0
      %5892 = vmatpush.msra.mxu0 0.0
      %5893 = vmatpush.msra.mxu0 0.0
      %5894 = vmatpush.msra.mxu0 0.0
      %5895 = vmatpush.msra.mxu0 0.0
      %5896 = vmatpush.msra.mxu0 %v5851
      %5897 = vmatmul.f32.gmra.mxu0 %v5877
      %v5898 = vpop.f32.mrf.mxu0
      %v5899 = vadd.f32 0.0, %v5898
      %5900 = vmatmul.f32.gmra.mxu0 %v5879
      %v5901 = vpop.f32.mrf.mxu0
      %v5902 = vadd.f32 0.0, %v5901
      %5903 = vdwg.mxu0
      %v5920 = vrot.slane %v5633, 7
      %vm5921 = vcmask 1041409
      %v5922 = vsel %vm5921, %v5920, %v5618
      %v5923 = vrot.slane %v5648, 6
      %vm5924 = vcmask 1042434
      %v5925 = vsel %vm5924, %v5923, %v5922
      %v5926 = vrot.slane %v5663, 5
      %vm5927 = vcmask 1043459
      %v5928 = vsel %vm5927, %v5926, %v5925
      %v5929 = vrot.slane %v5678, 4
      %vm5930 = vcmask 1044484
      %v5931 = vsel %vm5930, %v5929, %v5928
      %v5932 = vrot.slane %v5693, 3
      %vm5933 = vcmask 1045509
      %v5934 = vsel %vm5933, %v5932, %v5931
      %v5935 = vrot.slane %v5708, 2
      %vm5936 = vcmask 1046534
      %v5937 = vsel %vm5936, %v5935, %v5934
      %v5938 = vrot.slane %v5723, 1
      %vm5939 = vcmask 1047559
      %v5940 = vsel %vm5939, %v5938, %v5937
      %v5941 = vrot.slane %v5753, 7
      %v5942 = vsel %vm5921, %v5941, %v5738
      %v5943 = vrot.slane %v5768, 6
      %v5944 = vsel %vm5924, %v5943, %v5942
      %v5945 = vrot.slane %v5783, 5
      %v5946 = vsel %vm5927, %v5945, %v5944
      %v5947 = vrot.slane %v5798, 4
      %v5948 = vsel %vm5930, %v5947, %v5946
      %v5949 = vrot.slane %v5813, 3
      %v5950 = vsel %vm5933, %v5949, %v5948
      %v5951 = vrot.slane %v5828, 2
      %v5952 = vsel %vm5936, %v5951, %v5950
      %v5953 = vrot.slane %v5843, 1
      %v5954 = vsel %vm5939, %v5953, %v5952
      %v5955 = vsel %vm3314, %v5940, 0
      %v5957 = vsel %vm3314, %v5954, 0
      %5959 = vmatpush.msra.mxu0 0.0
      %5960 = vmatpush.msra.mxu0 0.0
      %5961 = vmatpush.msra.mxu0 0.0
      %5962 = vmatpush.msra.mxu0 0.0
      %5963 = vmatpush.msra.mxu0 0.0
      %5964 = vmatpush.msra.mxu0 0.0
      %5965 = vmatpush.msra.mxu0 0.0
      %5966 = vmatpush.msra.mxu0 0.0
      %5967 = vmatpush.msra.mxu0 0.0
      %5968 = vmatpush.msra.mxu0 0.0
      %5969 = vmatpush.msra.mxu0 0.0
      %5970 = vmatpush.msra.mxu0 0.0
      %5971 = vmatpush.msra.mxu0 %v5850
      %5972 = vmatpush.msra.mxu0 %v5849
      %5973 = vmatpush.msra.mxu0 %v5848
      %5974 = vmatpush.msra.mxu0 %v5847
      %5975 = vmatmul.f32.gmra.mxu0 %v5955
      %v5976 = vpop.f32.mrf.mxu0
      %v5977 = vadd.f32 %v5899, %v5976
      %5978 = vmatmul.f32.gmra.mxu0 %v5957
      %v5979 = vpop.f32.mrf.mxu0
      %v5980 = vadd.f32 %v5902, %v5979
      %5981 = vdwg.mxu0
      %v5982 = vperm.slane %v5844, 0
      %v5983 = vadd.f32 %v5977, %v5982
      %v5984 = vadd.f32 %v5980, %v5982
      %v5985 = vmul.f32 %v5983, %v5983
      %v5986 = vmul.f32 %v5984, %v5984
      %v5987 = vmul.f32 %v5983, %v5985
      %v5988 = vmul.f32 %v5984, %v5986
      %v5989 = vmul.f32 %v5987, 0.044715
      %v5990 = vmul.f32 %v5988, 0.044715
      %v5991 = vadd.f32 %v5983, %v5989
      %v5992 = vadd.f32 %v5984, %v5990
      %v5993 = vmul.f32 %v5991, 0.7978846
      %v5994 = vmul.f32 %v5992, 0.7978846
      %v5995 = vtanh.pop %v5993
      %v5996 = vtanh.pop %v5994
      %v5997 = vadd.f32 %v5995, 1.0
      %v5998 = vadd.f32 %v5996, 1.0
      %v5999 = vmul.f32 %v5997, 0.5
      %v6000 = vmul.f32 %v5998, 0.5
      %v6001 = vmul.f32 %v5983, %v5999
      %v6002 = vmul.f32 %v5984, %v6000
      %s6003 = scalar_lea.vmem %s9, 32
      %v6004 = vld [vmem:[%s6003] sm:$0xff]
      %v6005 = vld [vmem:[%s6003 + $0x8] sm:$0xff]
      %v6006 = vld [vmem:[%s6003 + $0x10] sm:$0xff]
      %v6007 = vld [vmem:[%s6003 + $0x18] sm:$0xff]
      %v6008 = vperm.slane %v5845, 0
      %v6010 = vsel %vm3314, %v6001, 0
      %v6013 = vsel %vm3314, %v6002, 0
      %6015 = vmatpush.msra.mxu0 0.0
      %6016 = vmatpush.msra.mxu0 0.0
      %6017 = vmatpush.msra.mxu0 0.0
      %6018 = vmatpush.msra.mxu0 0.0
      %6019 = vmatpush.msra.mxu0 0.0
      %6020 = vmatpush.msra.mxu0 0.0
      %6021 = vmatpush.msra.mxu0 0.0
      %6022 = vmatpush.msra.mxu0 0.0
      %6023 = vmatpush.msra.mxu0 0.0
      %6024 = vmatpush.msra.mxu0 0.0
      %6025 = vmatpush.msra.mxu0 0.0
      %6026 = vmatpush.msra.mxu0 0.0
      %6027 = vmatpush.msra.mxu0 %v6007
      %6028 = vmatpush.msra.mxu0 %v6006
      %6029 = vmatpush.msra.mxu0 %v6005
      %6030 = vmatpush.msra.mxu0 %v6004
      %6031 = vmatmul.f32.gmra.mxu0 %v6010
      %v6032 = vpop.f32.mrf.mxu0
      %v6033 = vadd.f32 %v6008, %v6032
      %6034 = vmatmul.f32.gmra.mxu0 %v6013
      %v6035 = vpop.f32.mrf.mxu0
      %v6036 = vadd.f32 %v6008, %v6035
      %6037 = vdwg.mxu0
      %v6038 = vmul.f32 %v6033, %v6033
      %v6039 = vmul.f32 %v6036, %v6036
      %v6040 = vmul.f32 %v6033, %v6038
      %v6041 = vmul.f32 %v6036, %v6039
      %v6042 = vmul.f32 %v6040, 0.044715
      %v6043 = vmul.f32 %v6041, 0.044715
      %v6044 = vadd.f32 %v6033, %v6042
      %v6045 = vadd.f32 %v6036, %v6043
      %v6046 = vmul.f32 %v6044, 0.7978846
      %v6047 = vmul.f32 %v6045, 0.7978846
      %v6048 = vtanh.pop %v6046
      %v6049 = vtanh.pop %v6047
      %v6050 = vadd.f32 %v6048, 1.0
      %v6051 = vadd.f32 %v6049, 1.0
      %v6052 = vmul.f32 %v6050, 0.5
      %v6053 = vmul.f32 %v6051, 0.5
      %v6054 = vmul.f32 %v6033, %v6052
      %v6055 = vmul.f32 %v6036, %v6053
      %s6056 = scalar_lea.vmem %s9, 64
      %v6057 = vld [vmem:[%s6056] sm:$0xff]
      %v6058 = vld [vmem:[%s6056 + $0x8] sm:$0xff]
      %v6059 = vld [vmem:[%s6056 + $0x10] sm:$0xff]
      %v6060 = vld [vmem:[%s6056 + $0x18] sm:$0xff]
      %v6062 = vsel %vm3314, %v6054, 0
      %v6065 = vsel %vm3314, %v6055, 0
      %6067 = vmatpush.msra.mxu0 0.0
      %6068 = vmatpush.msra.mxu0 0.0
      %6069 = vmatpush.msra.mxu0 0.0
      %6070 = vmatpush.msra.mxu0 0.0
      %6071 = vmatpush.msra.mxu0 0.0
      %6072 = vmatpush.msra.mxu0 0.0
      %6073 = vmatpush.msra.mxu0 0.0
      %6074 = vmatpush.msra.mxu0 0.0
      %6075 = vmatpush.msra.mxu0 0.0
      %6076 = vmatpush.msra.mxu0 0.0
      %6077 = vmatpush.msra.mxu0 0.0
      %6078 = vmatpush.msra.mxu0 0.0
      %6079 = vmatpush.msra.mxu0 %v6060
      %6080 = vmatpush.msra.mxu0 %v6059
      %6081 = vmatpush.msra.mxu0 %v6058
      %6082 = vmatpush.msra.mxu0 %v6057
      %6083 = vmatmul.f32.gmra.mxu0 %v6062
      %v6084 = vpop.f32.mrf.mxu0
      %v6085 = vadd.f32 0.0, %v6084
      %6086 = vmatmul.f32.gmra.mxu0 %v6065
      %v6087 = vpop.f32.mrf.mxu0
      %v6088 = vadd.f32 0.0, %v6087
      %6089 = vdwg.mxu0
      %v6090 = vperm.slane %v5846, 0
      %v6091 = vadd.f32 %v6085, %v6090
      %v6092 = vadd.f32 %v6088, %v6090
      %vm6093 = vcmask 7168
      %6094 = vst.msk [vmem:[%s476] sm:$0xff] %vm6093, %v6091
      %6095 = vst.msk [vmem:[%s476 + $0x8] sm:$0xff] %vm6093, %v6092
      %p6096 = scmp.lt.s32.totalorder %s22, 1
      %s6097 = scalar_select %p6096, %s22, 1
      %s6098 = smul.addr %s6097, 2
      %s6099 = smul.addr %s6098, 8
      %s6100 = scalar_lea.vmem %s11, %s6099
      // Predicated region
      $region65: #{tpu_custom_call.1} parent=63 // pred_check
        %p6101 = pneg %p296
      $region66: #{tpu_custom_call.1} parent=63 // pred_check_branch
        %6103 = sbr.rel (%p6101) target = $region68
      $region67: #{tpu_custom_call.1} parent=63 // pred_region
        _
      $region68: #{tpu_custom_call.1} parent=63 // pred_fallthru
        _
    $region64: #{tpu_custom_call.1} parent=5 // pred_fallthru
      _
    %p6104 = scmp.le.s32.totalorder 2, %s17
    // Predicated region
    $region69: #{tpu_custom_call.1} parent=5 // pred_check
      %p6105 = pneg %p6104
    $region70: #{tpu_custom_call.1} parent=5 // pred_check_branch
      %6107 = sbr.rel (%p6105) target = $region72
    $region71: #{tpu_custom_call.1} parent=5 // pred_region
      %s6108 = ssub.s32 %s17, 2
      // Predicated region
      $region73: #{tpu_custom_call.1} parent=71 // pred_check
        %p6109 = pneg %p302
      $region74: #{tpu_custom_call.1} parent=71 // pred_check_branch
        %6111 = sbr.rel (%p6109) target = $region76
      $region75: #{tpu_custom_call.1} parent=71 // pred_region
        %p6112 = scmp.lt.s32.totalorder %s23, 1
        %s6113 = scalar_select %p6112, %s23, 1
        %s6114 = smul.addr %s6113, 2
        %s6115 = smul.addr %s6114, 8
        %s6116 = scalar_lea.vmem %s11, %s6115
      $region76: #{tpu_custom_call.1} parent=71 // pred_fallthru
        _
    $region72: #{tpu_custom_call.1} parent=5 // pred_fallthru
      _
  $region6: #{tpu_custom_call.1} parent=0 // loop_footer
    %s21 = sadd.s32 1, %s17
  $region7: #{tpu_custom_call.1} parent=0 // loop_footer_branch
    %16 = sbr.rel target = $region3
  $region8: #{tpu_custom_call.1} parent=0 // loop_exit
    _

</llo_original>
